<compile_context>
chip_gen: v7x
topology: tpu7x:2x2x1
jax: 0.10.0
libtpu: 0.0.40
codegen_flags: <defaults>
</compile_context>

<pallas_src>
import numpy as np
import jax
import jax.numpy as jnp
from jax.experimental import pallas as pl
from jax.experimental.pallas import tpu as pltpu

# Small synthetic sizes consistent with the module's forward.
B, S, D, H, FFN = 2, 8, 32, 4, 64
DPH = D // H                         # dim per head = 8
NC = D // DPH                        # DPH-wide column chunks per model row = 4
RC = S * NC                          # rows of the .view() (head-chunk) layout = H*S = 32
SCALE = float((DPH // H) ** (-0.5))  # exactly as in MultiHeadAttention.forward
EPS = 1e-5                           # nn.LayerNorm default
NEG = -1e30                          # additive mask off own-head block (exp -> exactly 0)

# ---- constant 0/1 matrices that encode the .view() reshapes as matmuls --------------
#   ESEL[c][r, s] = 1  iff r == NC*s + c   (x row s -> view row r, column chunk c)
#   HSEL[h][r, j] = 1  iff r == S*h + j    (head h, in-head row j -> view row r)
_ESEL = np.zeros((NC, RC, S), np.float32)
for _c in range(NC):
    for _s in range(S):
        _ESEL[_c, NC * _s + _c, _s] = 1.0
_HSEL = np.zeros((H, RC, S), np.float32)
for _h in range(H):
    for _j in range(S):
        _HSEL[_h, S * _h + _j, _j] = 1.0
SEL_A = np.concatenate([_ESEL, _HSEL], axis=0)                       # (NC+H, RC, S)
SEL_B = np.concatenate([_ESEL.transpose(0, 2, 1),
                        _HSEL.transpose(0, 2, 1)], axis=0)           # (NC+H, S, RC)
# Additive block-diagonal mask: 0 inside a head's own (S,S) block, -1e30 elsewhere.
AMASK = np.full((RC, RC), NEG, np.float32)
for _h in range(H):
    AMASK[S * _h:S * (_h + 1), S * _h:S * (_h + 1)] = 0.0


def _layernorm(x, gamma, beta):
    # PyTorch LayerNorm: biased variance over last dim.
    mean = jnp.mean(x, axis=-1, keepdims=True)
    var = jnp.mean((x - mean) ** 2, axis=-1, keepdims=True)
    return (x - mean) * jax.lax.rsqrt(var + EPS) * gamma + beta


# ------------------------------ fused encoder-layer kernel ---------------------------
def encoder_kernel(x_ref, wqkv_ref, bqkv_ref, sela_ref, selb_ref, amask_ref,
                   wfc_ref, bf_ref, g1_ref, be1_ref,
                   w1_ref, b1_ref, w2_ref, b2_ref, g2_ref, be2_ref,
                   o_ref, attn_ref):
    f32 = jnp.float32
    x = x_ref[0]                                     # (S, D)

    # --- fused QKV projection, emitted directly in the .view() head-chunk layout ---
    #   qc[NC*s + c, :] = x[s] @ Wq[:, c*DPH:(c+1)*DPH] + bq[c*DPH:(c+1)*DPH]
    qc = bqkv_ref[0]                                 # (RC, DPH) chunk-layout biases
    kc = bqkv_ref[1]
    vc = bqkv_ref[2]
    for c in range(NC):
        xc = jnp.dot(sela_ref[c], x, preferred_element_type=f32)            # (RC, D)
        qc = qc + jnp.dot(xc, wqkv_ref[c], preferred_element_type=f32)
        kc = kc + jnp.dot(xc, wqkv_ref[NC + c], preferred_element_type=f32)
        vc = vc + jnp.dot(xc, wqkv_ref[2 * NC + c], preferred_element_type=f32)

    # --- all heads at once: block-diagonal scaled dot-product attention ---
    scores = jnp.einsum("nd,md->nm", qc, kc, preferred_element_type=f32) * SCALE
    scores = scores + amask_ref[...]                 # -1e30 outside the own-head block
    scores = scores - jnp.max(scores, axis=-1, keepdims=True)
    e = jnp.exp(scores)
    p = e * pl.reciprocal(jnp.sum(e, axis=-1, keepdims=True), approx=False)  # (RC, RC)
    ctxc = jnp.dot(p, vc, preferred_element_type=f32)                        # (RC, DPH)

    # Per-head attention probabilities (exactly the diagonal (S,S) blocks of p).
    for h in range(H):
        ph = jnp.dot(selb_ref[NC + h], p, preferred_element_type=f32)        # (S, RC)
        attn_ref[h] = jnp.dot(ph, sela_ref[NC + h], preferred_element_type=f32)

    # --- final linear (inverse .view() folded into wf row-chunks) + residual + LN ---
    y = None
    for c in range(NC):
        part = jnp.dot(selb_ref[c], ctxc, preferred_element_type=f32)        # (S, DPH)
        term = jnp.dot(part, wfc_ref[c], preferred_element_type=f32)         # (S, D)
        y = term if y is None else y + term
    a1 = _layernorm(x + y + bf_ref[...], g1_ref[...], be1_ref[...])

    # --- positional-wise FFN (Conv1d k=1 folded to matmuls) + residual + LN ---
    hdn = jnp.maximum(
        jnp.dot(a1, w1_ref[...], preferred_element_type=f32) + b1_ref[...], 0.0)
    y2 = jnp.dot(hdn, w2_ref[...], preferred_element_type=f32) + b2_ref[...]
    o_ref[0] = _layernorm(a1 + y2, g2_ref[...], be2_ref[...])


# ----------------------------------- wrapper ----------------------------------------
def encoder_layer(x, params):
    p = params
    # Derived constant-layout weights (plain XLA slicing/reshape, outside the kernel).
    wqkv_c = jnp.stack(
        [p["wq"][:, c * DPH:(c + 1) * DPH] for c in range(NC)]
        + [p["wk"][:, c * DPH:(c + 1) * DPH] for c in range(NC)]
        + [p["wv"][:, c * DPH:(c + 1) * DPH] for c in range(NC)], axis=0)  # (3*NC, D, DPH)
    bqkv_c = jnp.stack(
        [jnp.tile(b.reshape(NC, DPH), (S, 1)) for b in (p["bq"], p["bk"], p["bv"])],
        axis=0)                                                            # (3, RC, DPH)
    wf_c = p["wf"].reshape(NC, DPH, D)                                     # (NC, DPH, D)

    def full(shape):
        n = len(shape)
        return pl.BlockSpec(shape, lambda b: (0,) * n)

    seq_spec = pl.BlockSpec((1, S, D), lambda b: (b, 0, 0))

    out, attn = pl.pallas_call(
        encoder_kernel,
        grid=(B,),
        in_specs=[
            seq_spec,                        # x
            full((3 * NC, D, DPH)),          # wq/wk/wv column chunks
            full((3, RC, DPH)),              # q/k/v biases in chunk layout
            full((NC + H, RC, S)),           # SEL_A  (ESEL | HSEL)
            full((NC + H, S, RC)),           # SEL_B  (ESEL^T | HSEL^T)
            full((RC, RC)),                  # additive block-diagonal mask
            full((NC, DPH, D)),              # wf row chunks
            full((1, D)),                    # bf
            full((1, D)), full((1, D)),      # LN1 gamma/beta
            full((D, FFN)), full((1, FFN)),  # w1, b1
            full((FFN, D)), full((1, D)),    # w2, b2
            full((1, D)), full((1, D)),      # LN2 gamma/beta
        ],
        out_specs=(seq_spec, pl.BlockSpec((H, S, S), lambda b: (b, 0, 0))),
        out_shape=(jax.ShapeDtypeStruct((B, S, D), jnp.float32),
                   jax.ShapeDtypeStruct((B * H, S, S), jnp.float32)),
        compiler_params=pltpu.CompilerParams(dimension_semantics=("parallel",)),
    )(x, wqkv_c, bqkv_c, SEL_A, SEL_B, AMASK, wf_c,
      p["bf"], p["ln1_g"], p["ln1_b"],
      p["w1"], p["b1"], p["w2"], p["b2"], p["ln2_g"], p["ln2_b"])
    return out, attn


# ------------------------------- pure-JAX reference ----------------------------------
def encoder_layer_ref(x, p):
    q = x @ p["wq"] + p["bq"]
    k = x @ p["wk"] + p["bk"]
    v = x @ p["wv"] + p["bv"]
    qh = jnp.reshape(q, (B * H, S, DPH))
    kh = jnp.reshape(k, (B * H, S, DPH))
    vh = jnp.reshape(v, (B * H, S, DPH))
    s = jnp.einsum("bij,bkj->bik", qh, kh) * SCALE
    p_attn = jax.nn.softmax(s, axis=2)
    ctx = jnp.einsum("bik,bkj->bij", p_attn, vh)
    ctx = jnp.reshape(ctx, (B, S, D))
    o = ctx @ p["wf"] + p["bf"]
    a_out = _layernorm(x + o, p["ln1_g"], p["ln1_b"])
    h = jnp.maximum(a_out @ p["w1"] + p["b1"], 0.0)
    y = h @ p["w2"] + p["b2"]
    out = _layernorm(a_out + y, p["ln2_g"], p["ln2_b"])
    return out, p_attn


def make_params(key):
    ks = jax.random.split(key, 16)
    def w(k, shape, scale=0.1):
        return (scale * jax.random.normal(k, shape)).astype(jnp.float32)
    return {
        # nn.Linear weights stored pre-transposed: y = x @ W_t + b
        "wq": w(ks[0], (D, D)), "bq": w(ks[1], (1, D)),
        "wk": w(ks[2], (D, D)), "bk": w(ks[3], (1, D)),
        "wv": w(ks[4], (D, D)), "bv": w(ks[5], (1, D)),
        "wf": w(ks[6], (D, D)), "bf": w(ks[7], (1, D)),
        # Conv1d(kernel=1) weights folded to matmul form.
        "w1": w(ks[8], (D, FFN)), "b1": w(ks[9], (1, FFN)),
        "w2": w(ks[10], (FFN, D)), "b2": w(ks[11], (1, D)),
        # LayerNorm affine params.
        "ln1_g": (1.0 + 0.1 * jax.random.normal(ks[12], (1, D))).astype(jnp.float32),
        "ln1_b": w(ks[13], (1, D)),
        "ln2_g": (1.0 + 0.1 * jax.random.normal(ks[14], (1, D))).astype(jnp.float32),
        "ln2_b": w(ks[15], (1, D)),
    }


if __name__ == "__main__":
    key = jax.random.PRNGKey(0)
    k_x, k_p = jax.random.split(key)
    x = jax.random.normal(k_x, (B, S, D), dtype=jnp.float32)
    params = make_params(k_p)

    out, attn = jax.block_until_ready(encoder_layer(x, params))

    out_ref, attn_ref = encoder_layer_ref(x, params)
    np.testing.assert_allclose(np.asarray(out), np.asarray(out_ref), atol=1e-4, rtol=1e-4)
    np.testing.assert_allclose(np.asarray(attn), np.asarray(attn_ref), atol=1e-5, rtol=1e-5)

    print("KERNEL_OK")
</pallas_src>

<mosaic_0001>
module attributes {stable_mosaic.version = 11 : i64} {
  func.func @encoder_kernel(%arg0: i32, %arg1: memref<1x8x32xf32, #tpu.memory_space<vmem>>, %arg2: memref<12x32x8xf32, #tpu.memory_space<vmem>>, %arg3: memref<3x32x8xf32, #tpu.memory_space<vmem>>, %arg4: memref<8x32x8xf32, #tpu.memory_space<vmem>>, %arg5: memref<8x8x32xf32, #tpu.memory_space<vmem>>, %arg6: memref<32x32xf32, #tpu.memory_space<vmem>>, %arg7: memref<4x8x32xf32, #tpu.memory_space<vmem>>, %arg8: memref<1x32xf32, #tpu.memory_space<vmem>>, %arg9: memref<1x32xf32, #tpu.memory_space<vmem>>, %arg10: memref<1x32xf32, #tpu.memory_space<vmem>>, %arg11: memref<32x64xf32, #tpu.memory_space<vmem>>, %arg12: memref<1x64xf32, #tpu.memory_space<vmem>>, %arg13: memref<64x32xf32, #tpu.memory_space<vmem>>, %arg14: memref<1x32xf32, #tpu.memory_space<vmem>>, %arg15: memref<1x32xf32, #tpu.memory_space<vmem>>, %arg16: memref<1x32xf32, #tpu.memory_space<vmem>>, %arg17: memref<1x8x32xf32, #tpu.memory_space<vmem>>, %arg18: memref<4x8x8xf32, #tpu.memory_space<vmem>>) attributes {dimension_semantics = [#tpu.dimension_semantics<parallel>], iteration_bounds = array<i64: 2>, scalar_prefetch = 0 : i64, scratch_operands = 0 : i64, tpu.core_type = #tpu.core_type<tc>, window_params = [{transform_indices = @transform_0, window_bounds = array<i64: 1, 8, 32>}, {pipeline_mode = #tpu.pipeline_mode<synchronous>, transform_indices = @transform_1, window_bounds = array<i64: 12, 32, 8>}, {pipeline_mode = #tpu.pipeline_mode<synchronous>, transform_indices = @transform_2, window_bounds = array<i64: 3, 32, 8>}, {pipeline_mode = #tpu.pipeline_mode<synchronous>, transform_indices = @transform_3, window_bounds = array<i64: 8, 32, 8>}, {pipeline_mode = #tpu.pipeline_mode<synchronous>, transform_indices = @transform_4, window_bounds = array<i64: 8, 8, 32>}, {pipeline_mode = #tpu.pipeline_mode<synchronous>, transform_indices = @transform_5, window_bounds = array<i64: 32, 32>}, {pipeline_mode = #tpu.pipeline_mode<synchronous>, transform_indices = @transform_6, window_bounds = array<i64: 4, 8, 32>}, {pipeline_mode = #tpu.pipeline_mode<synchronous>, transform_indices = @transform_7, window_bounds = array<i64: 1, 32>}, {pipeline_mode = #tpu.pipeline_mode<synchronous>, transform_indices = @transform_8, window_bounds = array<i64: 1, 32>}, {pipeline_mode = #tpu.pipeline_mode<synchronous>, transform_indices = @transform_9, window_bounds = array<i64: 1, 32>}, {pipeline_mode = #tpu.pipeline_mode<synchronous>, transform_indices = @transform_10, window_bounds = array<i64: 32, 64>}, {pipeline_mode = #tpu.pipeline_mode<synchronous>, transform_indices = @transform_11, window_bounds = array<i64: 1, 64>}, {pipeline_mode = #tpu.pipeline_mode<synchronous>, transform_indices = @transform_12, window_bounds = array<i64: 64, 32>}, {pipeline_mode = #tpu.pipeline_mode<synchronous>, transform_indices = @transform_13, window_bounds = array<i64: 1, 32>}, {pipeline_mode = #tpu.pipeline_mode<synchronous>, transform_indices = @transform_14, window_bounds = array<i64: 1, 32>}, {pipeline_mode = #tpu.pipeline_mode<synchronous>, transform_indices = @transform_15, window_bounds = array<i64: 1, 32>}, {transform_indices = @transform_16, window_bounds = array<i64: 1, 8, 32>}, {transform_indices = @transform_17, window_bounds = array<i64: 4, 8, 8>}]} {
    %c0 = arith.constant 0 : index
    %c0_0 = arith.constant 0 : index
    %c0_1 = arith.constant 0 : index
    %0 = vector.load %arg1[%c0, %c0_0, %c0_1] : memref<1x8x32xf32, #tpu.memory_space<vmem>>, vector<1x8x32xf32>
    %1 = vector.shape_cast %0 : vector<1x8x32xf32> to vector<8x32xf32>
    %c0_2 = arith.constant 0 : index
    %c0_3 = arith.constant 0 : index
    %c0_4 = arith.constant 0 : index
    %2 = vector.load %arg3[%c0_2, %c0_3, %c0_4] : memref<3x32x8xf32, #tpu.memory_space<vmem>>, vector<1x32x8xf32>
    %3 = vector.shape_cast %2 : vector<1x32x8xf32> to vector<32x8xf32>
    %c1 = arith.constant 1 : index
    %c0_5 = arith.constant 0 : index
    %c0_6 = arith.constant 0 : index
    %4 = vector.load %arg3[%c1, %c0_5, %c0_6] : memref<3x32x8xf32, #tpu.memory_space<vmem>>, vector<1x32x8xf32>
    %5 = vector.shape_cast %4 : vector<1x32x8xf32> to vector<32x8xf32>
    %c2 = arith.constant 2 : index
    %c0_7 = arith.constant 0 : index
    %c0_8 = arith.constant 0 : index
    %6 = vector.load %arg3[%c2, %c0_7, %c0_8] : memref<3x32x8xf32, #tpu.memory_space<vmem>>, vector<1x32x8xf32>
    %7 = vector.shape_cast %6 : vector<1x32x8xf32> to vector<32x8xf32>
    %c0_9 = arith.constant 0 : index
    %c0_10 = arith.constant 0 : index
    %c0_11 = arith.constant 0 : index
    %8 = vector.load %arg4[%c0_9, %c0_10, %c0_11] : memref<8x32x8xf32, #tpu.memory_space<vmem>>, vector<1x32x8xf32>
    %9 = vector.shape_cast %8 : vector<1x32x8xf32> to vector<32x8xf32>
    %cst = arith.constant dense<0.000000e+00> : vector<32x32xf32>
    %10 = tpu.matmul %9, %1, %cst {dimension_numbers = #tpu.dot_dimension_numbers<[1], [0], [0], [1], [0, 0, 1, 1], [], []>} : vector<32x8xf32>, vector<8x32xf32>, vector<32x32xf32> -> vector<32x32xf32>
    %c0_12 = arith.constant 0 : index
    %c0_13 = arith.constant 0 : index
    %c0_14 = arith.constant 0 : index
    %11 = vector.load %arg2[%c0_12, %c0_13, %c0_14] : memref<12x32x8xf32, #tpu.memory_space<vmem>>, vector<1x32x8xf32>
    %12 = vector.shape_cast %11 : vector<1x32x8xf32> to vector<32x8xf32>
    %cst_15 = arith.constant dense<0.000000e+00> : vector<32x8xf32>
    %13 = tpu.matmul %10, %12, %cst_15 {dimension_numbers = #tpu.dot_dimension_numbers<[1], [0], [0], [1], [0, 0, 1, 1], [], []>} : vector<32x32xf32>, vector<32x8xf32>, vector<32x8xf32> -> vector<32x8xf32>
    %14 = arith.addf %3, %13 : vector<32x8xf32>
    %c4 = arith.constant 4 : index
    %c0_16 = arith.constant 0 : index
    %c0_17 = arith.constant 0 : index
    %15 = vector.load %arg2[%c4, %c0_16, %c0_17] : memref<12x32x8xf32, #tpu.memory_space<vmem>>, vector<1x32x8xf32>
    %16 = vector.shape_cast %15 : vector<1x32x8xf32> to vector<32x8xf32>
    %cst_18 = arith.constant dense<0.000000e+00> : vector<32x8xf32>
    %17 = tpu.matmul %10, %16, %cst_18 {dimension_numbers = #tpu.dot_dimension_numbers<[1], [0], [0], [1], [0, 0, 1, 1], [], []>} : vector<32x32xf32>, vector<32x8xf32>, vector<32x8xf32> -> vector<32x8xf32>
    %18 = arith.addf %5, %17 : vector<32x8xf32>
    %c8 = arith.constant 8 : index
    %c0_19 = arith.constant 0 : index
    %c0_20 = arith.constant 0 : index
    %19 = vector.load %arg2[%c8, %c0_19, %c0_20] : memref<12x32x8xf32, #tpu.memory_space<vmem>>, vector<1x32x8xf32>
    %20 = vector.shape_cast %19 : vector<1x32x8xf32> to vector<32x8xf32>
    %cst_21 = arith.constant dense<0.000000e+00> : vector<32x8xf32>
    %21 = tpu.matmul %10, %20, %cst_21 {dimension_numbers = #tpu.dot_dimension_numbers<[1], [0], [0], [1], [0, 0, 1, 1], [], []>} : vector<32x32xf32>, vector<32x8xf32>, vector<32x8xf32> -> vector<32x8xf32>
    %22 = arith.addf %7, %21 : vector<32x8xf32>
    %c1_22 = arith.constant 1 : index
    %c0_23 = arith.constant 0 : index
    %c0_24 = arith.constant 0 : index
    %23 = vector.load %arg4[%c1_22, %c0_23, %c0_24] : memref<8x32x8xf32, #tpu.memory_space<vmem>>, vector<1x32x8xf32>
    %24 = vector.shape_cast %23 : vector<1x32x8xf32> to vector<32x8xf32>
    %cst_25 = arith.constant dense<0.000000e+00> : vector<32x32xf32>
    %25 = tpu.matmul %24, %1, %cst_25 {dimension_numbers = #tpu.dot_dimension_numbers<[1], [0], [0], [1], [0, 0, 1, 1], [], []>} : vector<32x8xf32>, vector<8x32xf32>, vector<32x32xf32> -> vector<32x32xf32>
    %c1_26 = arith.constant 1 : index
    %c0_27 = arith.constant 0 : index
    %c0_28 = arith.constant 0 : index
    %26 = vector.load %arg2[%c1_26, %c0_27, %c0_28] : memref<12x32x8xf32, #tpu.memory_space<vmem>>, vector<1x32x8xf32>
    %27 = vector.shape_cast %26 : vector<1x32x8xf32> to vector<32x8xf32>
    %cst_29 = arith.constant dense<0.000000e+00> : vector<32x8xf32>
    %28 = tpu.matmul %25, %27, %cst_29 {dimension_numbers = #tpu.dot_dimension_numbers<[1], [0], [0], [1], [0, 0, 1, 1], [], []>} : vector<32x32xf32>, vector<32x8xf32>, vector<32x8xf32> -> vector<32x8xf32>
    %29 = arith.addf %14, %28 : vector<32x8xf32>
    %c5 = arith.constant 5 : index
    %c0_30 = arith.constant 0 : index
    %c0_31 = arith.constant 0 : index
    %30 = vector.load %arg2[%c5, %c0_30, %c0_31] : memref<12x32x8xf32, #tpu.memory_space<vmem>>, vector<1x32x8xf32>
    %31 = vector.shape_cast %30 : vector<1x32x8xf32> to vector<32x8xf32>
    %cst_32 = arith.constant dense<0.000000e+00> : vector<32x8xf32>
    %32 = tpu.matmul %25, %31, %cst_32 {dimension_numbers = #tpu.dot_dimension_numbers<[1], [0], [0], [1], [0, 0, 1, 1], [], []>} : vector<32x32xf32>, vector<32x8xf32>, vector<32x8xf32> -> vector<32x8xf32>
    %33 = arith.addf %18, %32 : vector<32x8xf32>
    %c9 = arith.constant 9 : index
    %c0_33 = arith.constant 0 : index
    %c0_34 = arith.constant 0 : index
    %34 = vector.load %arg2[%c9, %c0_33, %c0_34] : memref<12x32x8xf32, #tpu.memory_space<vmem>>, vector<1x32x8xf32>
    %35 = vector.shape_cast %34 : vector<1x32x8xf32> to vector<32x8xf32>
    %cst_35 = arith.constant dense<0.000000e+00> : vector<32x8xf32>
    %36 = tpu.matmul %25, %35, %cst_35 {dimension_numbers = #tpu.dot_dimension_numbers<[1], [0], [0], [1], [0, 0, 1, 1], [], []>} : vector<32x32xf32>, vector<32x8xf32>, vector<32x8xf32> -> vector<32x8xf32>
    %37 = arith.addf %22, %36 : vector<32x8xf32>
    %c2_36 = arith.constant 2 : index
    %c0_37 = arith.constant 0 : index
    %c0_38 = arith.constant 0 : index
    %38 = vector.load %arg4[%c2_36, %c0_37, %c0_38] : memref<8x32x8xf32, #tpu.memory_space<vmem>>, vector<1x32x8xf32>
    %39 = vector.shape_cast %38 : vector<1x32x8xf32> to vector<32x8xf32>
    %cst_39 = arith.constant dense<0.000000e+00> : vector<32x32xf32>
    %40 = tpu.matmul %39, %1, %cst_39 {dimension_numbers = #tpu.dot_dimension_numbers<[1], [0], [0], [1], [0, 0, 1, 1], [], []>} : vector<32x8xf32>, vector<8x32xf32>, vector<32x32xf32> -> vector<32x32xf32>
    %c2_40 = arith.constant 2 : index
    %c0_41 = arith.constant 0 : index
    %c0_42 = arith.constant 0 : index
    %41 = vector.load %arg2[%c2_40, %c0_41, %c0_42] : memref<12x32x8xf32, #tpu.memory_space<vmem>>, vector<1x32x8xf32>
    %42 = vector.shape_cast %41 : vector<1x32x8xf32> to vector<32x8xf32>
    %cst_43 = arith.constant dense<0.000000e+00> : vector<32x8xf32>
    %43 = tpu.matmul %40, %42, %cst_43 {dimension_numbers = #tpu.dot_dimension_numbers<[1], [0], [0], [1], [0, 0, 1, 1], [], []>} : vector<32x32xf32>, vector<32x8xf32>, vector<32x8xf32> -> vector<32x8xf32>
    %44 = arith.addf %29, %43 : vector<32x8xf32>
    %c6 = arith.constant 6 : index
    %c0_44 = arith.constant 0 : index
    %c0_45 = arith.constant 0 : index
    %45 = vector.load %arg2[%c6, %c0_44, %c0_45] : memref<12x32x8xf32, #tpu.memory_space<vmem>>, vector<1x32x8xf32>
    %46 = vector.shape_cast %45 : vector<1x32x8xf32> to vector<32x8xf32>
    %cst_46 = arith.constant dense<0.000000e+00> : vector<32x8xf32>
    %47 = tpu.matmul %40, %46, %cst_46 {dimension_numbers = #tpu.dot_dimension_numbers<[1], [0], [0], [1], [0, 0, 1, 1], [], []>} : vector<32x32xf32>, vector<32x8xf32>, vector<32x8xf32> -> vector<32x8xf32>
    %48 = arith.addf %33, %47 : vector<32x8xf32>
    %c10 = arith.constant 10 : index
    %c0_47 = arith.constant 0 : index
    %c0_48 = arith.constant 0 : index
    %49 = vector.load %arg2[%c10, %c0_47, %c0_48] : memref<12x32x8xf32, #tpu.memory_space<vmem>>, vector<1x32x8xf32>
    %50 = vector.shape_cast %49 : vector<1x32x8xf32> to vector<32x8xf32>
    %cst_49 = arith.constant dense<0.000000e+00> : vector<32x8xf32>
    %51 = tpu.matmul %40, %50, %cst_49 {dimension_numbers = #tpu.dot_dimension_numbers<[1], [0], [0], [1], [0, 0, 1, 1], [], []>} : vector<32x32xf32>, vector<32x8xf32>, vector<32x8xf32> -> vector<32x8xf32>
    %52 = arith.addf %37, %51 : vector<32x8xf32>
    %c3 = arith.constant 3 : index
    %c0_50 = arith.constant 0 : index
    %c0_51 = arith.constant 0 : index
    %53 = vector.load %arg4[%c3, %c0_50, %c0_51] : memref<8x32x8xf32, #tpu.memory_space<vmem>>, vector<1x32x8xf32>
    %54 = vector.shape_cast %53 : vector<1x32x8xf32> to vector<32x8xf32>
    %cst_52 = arith.constant dense<0.000000e+00> : vector<32x32xf32>
    %55 = tpu.matmul %54, %1, %cst_52 {dimension_numbers = #tpu.dot_dimension_numbers<[1], [0], [0], [1], [0, 0, 1, 1], [], []>} : vector<32x8xf32>, vector<8x32xf32>, vector<32x32xf32> -> vector<32x32xf32>
    %c3_53 = arith.constant 3 : index
    %c0_54 = arith.constant 0 : index
    %c0_55 = arith.constant 0 : index
    %56 = vector.load %arg2[%c3_53, %c0_54, %c0_55] : memref<12x32x8xf32, #tpu.memory_space<vmem>>, vector<1x32x8xf32>
    %57 = vector.shape_cast %56 : vector<1x32x8xf32> to vector<32x8xf32>
    %cst_56 = arith.constant dense<0.000000e+00> : vector<32x8xf32>
    %58 = tpu.matmul %55, %57, %cst_56 {dimension_numbers = #tpu.dot_dimension_numbers<[1], [0], [0], [1], [0, 0, 1, 1], [], []>} : vector<32x32xf32>, vector<32x8xf32>, vector<32x8xf32> -> vector<32x8xf32>
    %59 = arith.addf %44, %58 : vector<32x8xf32>
    %c7 = arith.constant 7 : index
    %c0_57 = arith.constant 0 : index
    %c0_58 = arith.constant 0 : index
    %60 = vector.load %arg2[%c7, %c0_57, %c0_58] : memref<12x32x8xf32, #tpu.memory_space<vmem>>, vector<1x32x8xf32>
    %61 = vector.shape_cast %60 : vector<1x32x8xf32> to vector<32x8xf32>
    %cst_59 = arith.constant dense<0.000000e+00> : vector<32x8xf32>
    %62 = tpu.matmul %55, %61, %cst_59 {dimension_numbers = #tpu.dot_dimension_numbers<[1], [0], [0], [1], [0, 0, 1, 1], [], []>} : vector<32x32xf32>, vector<32x8xf32>, vector<32x8xf32> -> vector<32x8xf32>
    %63 = arith.addf %48, %62 : vector<32x8xf32>
    %c11 = arith.constant 11 : index
    %c0_60 = arith.constant 0 : index
    %c0_61 = arith.constant 0 : index
    %64 = vector.load %arg2[%c11, %c0_60, %c0_61] : memref<12x32x8xf32, #tpu.memory_space<vmem>>, vector<1x32x8xf32>
    %65 = vector.shape_cast %64 : vector<1x32x8xf32> to vector<32x8xf32>
    %cst_62 = arith.constant dense<0.000000e+00> : vector<32x8xf32>
    %66 = tpu.matmul %55, %65, %cst_62 {dimension_numbers = #tpu.dot_dimension_numbers<[1], [0], [0], [1], [0, 0, 1, 1], [], []>} : vector<32x32xf32>, vector<32x8xf32>, vector<32x8xf32> -> vector<32x8xf32>
    %67 = arith.addf %52, %66 : vector<32x8xf32>
    "tpu.trace_start"() <{level = 10 : i32, message = "nd,md->nm"}> : () -> ()
    %cst_63 = arith.constant dense<0.000000e+00> : vector<32x32xf32>
    %68 = tpu.matmul %59, %63, %cst_63 {dimension_numbers = #tpu.dot_dimension_numbers<[1], [1], [0], [0], [0, 0, 1, 0], [], []>} : vector<32x8xf32>, vector<32x8xf32>, vector<32x32xf32> -> vector<32x32xf32>
    "tpu.trace_stop"() : () -> ()
    %cst_64 = arith.constant 0.707106769 : f32
    %69 = vector.broadcast %cst_64 : f32 to vector<32x32xf32>
    %70 = arith.mulf %68, %69 : vector<32x32xf32>
    %c0_65 = arith.constant 0 : index
    %c0_66 = arith.constant 0 : index
    %71 = vector.load %arg6[%c0_65, %c0_66] : memref<32x32xf32, #tpu.memory_space<vmem>>, vector<32x32xf32>
    %72 = arith.addf %70, %71 : vector<32x32xf32>
    %cst_67 = arith.constant dense<0xFF800000> : vector<32xf32>
    %73 = vector.multi_reduction <maximumf>, %72, %cst_67 [1] : vector<32x32xf32> to vector<32xf32>
    %74 = vector.shape_cast %73 : vector<32xf32> to vector<32x1xf32>
    %75 = vector.broadcast %74 : vector<32x1xf32> to vector<32x32xf32>
    %76 = arith.subf %72, %75 : vector<32x32xf32>
    %77 = math.exp %76 : vector<32x32xf32>
    %cst_68 = arith.constant dense<0.000000e+00> : vector<32xf32>
    %78 = vector.multi_reduction <add>, %77, %cst_68 [1] : vector<32x32xf32> to vector<32xf32>
    %79 = vector.shape_cast %78 : vector<32xf32> to vector<32x1xf32>
    %80 = tpu.reciprocal %79 : vector<32x1xf32> -> vector<32x1xf32>
    %81 = vector.broadcast %80 : vector<32x1xf32> to vector<32x32xf32>
    %82 = arith.mulf %77, %81 : vector<32x32xf32>
    %cst_69 = arith.constant dense<0.000000e+00> : vector<32x8xf32>
    %83 = tpu.matmul %82, %67, %cst_69 {dimension_numbers = #tpu.dot_dimension_numbers<[1], [0], [0], [1], [0, 0, 1, 1], [], []>} : vector<32x32xf32>, vector<32x8xf32>, vector<32x8xf32> -> vector<32x8xf32>
    %c4_70 = arith.constant 4 : index
    %c0_71 = arith.constant 0 : index
    %c0_72 = arith.constant 0 : index
    %84 = vector.load %arg5[%c4_70, %c0_71, %c0_72] : memref<8x8x32xf32, #tpu.memory_space<vmem>>, vector<1x8x32xf32>
    %85 = vector.shape_cast %84 : vector<1x8x32xf32> to vector<8x32xf32>
    %cst_73 = arith.constant dense<0.000000e+00> : vector<8x32xf32>
    %86 = tpu.matmul %85, %82, %cst_73 {dimension_numbers = #tpu.dot_dimension_numbers<[1], [0], [0], [1], [0, 0, 1, 1], [], []>} : vector<8x32xf32>, vector<32x32xf32>, vector<8x32xf32> -> vector<8x32xf32>
    %c4_74 = arith.constant 4 : index
    %c0_75 = arith.constant 0 : index
    %c0_76 = arith.constant 0 : index
    %87 = vector.load %arg4[%c4_74, %c0_75, %c0_76] : memref<8x32x8xf32, #tpu.memory_space<vmem>>, vector<1x32x8xf32>
    %88 = vector.shape_cast %87 : vector<1x32x8xf32> to vector<32x8xf32>
    %cst_77 = arith.constant dense<0.000000e+00> : vector<8x8xf32>
    %89 = tpu.matmul %86, %88, %cst_77 {dimension_numbers = #tpu.dot_dimension_numbers<[1], [0], [0], [1], [0, 0, 1, 1], [], []>} : vector<8x32xf32>, vector<32x8xf32>, vector<8x8xf32> -> vector<8x8xf32>
    %c0_78 = arith.constant 0 : index
    %c0_79 = arith.constant 0 : index
    %c0_80 = arith.constant 0 : index
    %90 = vector.load %arg18[%c0_78, %c0_79, %c0_80] : memref<4x8x8xf32, #tpu.memory_space<vmem>>, vector<1x8x8xf32>
    %91 = vector.shape_cast %90 : vector<1x8x8xf32> to vector<8x8xf32>
    %92 = vector.shape_cast %89 : vector<8x8xf32> to vector<1x8x8xf32>
    tpu.vector_store %arg18[%c0_78, %c0_79, %c0_80], %92 {strides = array<i32>} : memref<4x8x8xf32, #tpu.memory_space<vmem>>, vector<1x8x8xf32>,
    %c5_81 = arith.constant 5 : index
    %c0_82 = arith.constant 0 : index
    %c0_83 = arith.constant 0 : index
    %93 = vector.load %arg5[%c5_81, %c0_82, %c0_83] : memref<8x8x32xf32, #tpu.memory_space<vmem>>, vector<1x8x32xf32>
    %94 = vector.shape_cast %93 : vector<1x8x32xf32> to vector<8x32xf32>
    %cst_84 = arith.constant dense<0.000000e+00> : vector<8x32xf32>
    %95 = tpu.matmul %94, %82, %cst_84 {dimension_numbers = #tpu.dot_dimension_numbers<[1], [0], [0], [1], [0, 0, 1, 1], [], []>} : vector<8x32xf32>, vector<32x32xf32>, vector<8x32xf32> -> vector<8x32xf32>
    %c5_85 = arith.constant 5 : index
    %c0_86 = arith.constant 0 : index
    %c0_87 = arith.constant 0 : index
    %96 = vector.load %arg4[%c5_85, %c0_86, %c0_87] : memref<8x32x8xf32, #tpu.memory_space<vmem>>, vector<1x32x8xf32>
    %97 = vector.shape_cast %96 : vector<1x32x8xf32> to vector<32x8xf32>
    %cst_88 = arith.constant dense<0.000000e+00> : vector<8x8xf32>
    %98 = tpu.matmul %95, %97, %cst_88 {dimension_numbers = #tpu.dot_dimension_numbers<[1], [0], [0], [1], [0, 0, 1, 1], [], []>} : vector<8x32xf32>, vector<32x8xf32>, vector<8x8xf32> -> vector<8x8xf32>
    %c1_89 = arith.constant 1 : index
    %c0_90 = arith.constant 0 : index
    %c0_91 = arith.constant 0 : index
    %99 = vector.load %arg18[%c1_89, %c0_90, %c0_91] : memref<4x8x8xf32, #tpu.memory_space<vmem>>, vector<1x8x8xf32>
    %100 = vector.shape_cast %99 : vector<1x8x8xf32> to vector<8x8xf32>
    %101 = vector.shape_cast %98 : vector<8x8xf32> to vector<1x8x8xf32>
    tpu.vector_store %arg18[%c1_89, %c0_90, %c0_91], %101 {strides = array<i32>} : memref<4x8x8xf32, #tpu.memory_space<vmem>>, vector<1x8x8xf32>,
    %c6_92 = arith.constant 6 : index
    %c0_93 = arith.constant 0 : index
    %c0_94 = arith.constant 0 : index
    %102 = vector.load %arg5[%c6_92, %c0_93, %c0_94] : memref<8x8x32xf32, #tpu.memory_space<vmem>>, vector<1x8x32xf32>
    %103 = vector.shape_cast %102 : vector<1x8x32xf32> to vector<8x32xf32>
    %cst_95 = arith.constant dense<0.000000e+00> : vector<8x32xf32>
    %104 = tpu.matmul %103, %82, %cst_95 {dimension_numbers = #tpu.dot_dimension_numbers<[1], [0], [0], [1], [0, 0, 1, 1], [], []>} : vector<8x32xf32>, vector<32x32xf32>, vector<8x32xf32> -> vector<8x32xf32>
    %c6_96 = arith.constant 6 : index
    %c0_97 = arith.constant 0 : index
    %c0_98 = arith.constant 0 : index
    %105 = vector.load %arg4[%c6_96, %c0_97, %c0_98] : memref<8x32x8xf32, #tpu.memory_space<vmem>>, vector<1x32x8xf32>
    %106 = vector.shape_cast %105 : vector<1x32x8xf32> to vector<32x8xf32>
    %cst_99 = arith.constant dense<0.000000e+00> : vector<8x8xf32>
    %107 = tpu.matmul %104, %106, %cst_99 {dimension_numbers = #tpu.dot_dimension_numbers<[1], [0], [0], [1], [0, 0, 1, 1], [], []>} : vector<8x32xf32>, vector<32x8xf32>, vector<8x8xf32> -> vector<8x8xf32>
    %c2_100 = arith.constant 2 : index
    %c0_101 = arith.constant 0 : index
    %c0_102 = arith.constant 0 : index
    %108 = vector.load %arg18[%c2_100, %c0_101, %c0_102] : memref<4x8x8xf32, #tpu.memory_space<vmem>>, vector<1x8x8xf32>
    %109 = vector.shape_cast %108 : vector<1x8x8xf32> to vector<8x8xf32>
    %110 = vector.shape_cast %107 : vector<8x8xf32> to vector<1x8x8xf32>
    tpu.vector_store %arg18[%c2_100, %c0_101, %c0_102], %110 {strides = array<i32>} : memref<4x8x8xf32, #tpu.memory_space<vmem>>, vector<1x8x8xf32>,
    %c7_103 = arith.constant 7 : index
    %c0_104 = arith.constant 0 : index
    %c0_105 = arith.constant 0 : index
    %111 = vector.load %arg5[%c7_103, %c0_104, %c0_105] : memref<8x8x32xf32, #tpu.memory_space<vmem>>, vector<1x8x32xf32>
    %112 = vector.shape_cast %111 : vector<1x8x32xf32> to vector<8x32xf32>
    %cst_106 = arith.constant dense<0.000000e+00> : vector<8x32xf32>
    %113 = tpu.matmul %112, %82, %cst_106 {dimension_numbers = #tpu.dot_dimension_numbers<[1], [0], [0], [1], [0, 0, 1, 1], [], []>} : vector<8x32xf32>, vector<32x32xf32>, vector<8x32xf32> -> vector<8x32xf32>
    %c7_107 = arith.constant 7 : index
    %c0_108 = arith.constant 0 : index
    %c0_109 = arith.constant 0 : index
    %114 = vector.load %arg4[%c7_107, %c0_108, %c0_109] : memref<8x32x8xf32, #tpu.memory_space<vmem>>, vector<1x32x8xf32>
    %115 = vector.shape_cast %114 : vector<1x32x8xf32> to vector<32x8xf32>
    %cst_110 = arith.constant dense<0.000000e+00> : vector<8x8xf32>
    %116 = tpu.matmul %113, %115, %cst_110 {dimension_numbers = #tpu.dot_dimension_numbers<[1], [0], [0], [1], [0, 0, 1, 1], [], []>} : vector<8x32xf32>, vector<32x8xf32>, vector<8x8xf32> -> vector<8x8xf32>
    %c3_111 = arith.constant 3 : index
    %c0_112 = arith.constant 0 : index
    %c0_113 = arith.constant 0 : index
    %117 = vector.load %arg18[%c3_111, %c0_112, %c0_113] : memref<4x8x8xf32, #tpu.memory_space<vmem>>, vector<1x8x8xf32>
    %118 = vector.shape_cast %117 : vector<1x8x8xf32> to vector<8x8xf32>
    %119 = vector.shape_cast %116 : vector<8x8xf32> to vector<1x8x8xf32>
    tpu.vector_store %arg18[%c3_111, %c0_112, %c0_113], %119 {strides = array<i32>} : memref<4x8x8xf32, #tpu.memory_space<vmem>>, vector<1x8x8xf32>,
    %c0_114 = arith.constant 0 : index
    %c0_115 = arith.constant 0 : index
    %c0_116 = arith.constant 0 : index
    %120 = vector.load %arg5[%c0_114, %c0_115, %c0_116] : memref<8x8x32xf32, #tpu.memory_space<vmem>>, vector<1x8x32xf32>
    %121 = vector.shape_cast %120 : vector<1x8x32xf32> to vector<8x32xf32>
    %cst_117 = arith.constant dense<0.000000e+00> : vector<8x8xf32>
    %122 = tpu.matmul %121, %83, %cst_117 {dimension_numbers = #tpu.dot_dimension_numbers<[1], [0], [0], [1], [0, 0, 1, 1], [], []>} : vector<8x32xf32>, vector<32x8xf32>, vector<8x8xf32> -> vector<8x8xf32>
    %c0_118 = arith.constant 0 : index
    %c0_119 = arith.constant 0 : index
    %c0_120 = arith.constant 0 : index
    %123 = vector.load %arg7[%c0_118, %c0_119, %c0_120] : memref<4x8x32xf32, #tpu.memory_space<vmem>>, vector<1x8x32xf32>
    %124 = vector.shape_cast %123 : vector<1x8x32xf32> to vector<8x32xf32>
    %cst_121 = arith.constant dense<0.000000e+00> : vector<8x32xf32>
    %125 = tpu.matmul %122, %124, %cst_121 {dimension_numbers = #tpu.dot_dimension_numbers<[1], [0], [0], [1], [0, 0, 1, 1], [], []>} : vector<8x8xf32>, vector<8x32xf32>, vector<8x32xf32> -> vector<8x32xf32>
    %c1_122 = arith.constant 1 : index
    %c0_123 = arith.constant 0 : index
    %c0_124 = arith.constant 0 : index
    %126 = vector.load %arg5[%c1_122, %c0_123, %c0_124] : memref<8x8x32xf32, #tpu.memory_space<vmem>>, vector<1x8x32xf32>
    %127 = vector.shape_cast %126 : vector<1x8x32xf32> to vector<8x32xf32>
    %cst_125 = arith.constant dense<0.000000e+00> : vector<8x8xf32>
    %128 = tpu.matmul %127, %83, %cst_125 {dimension_numbers = #tpu.dot_dimension_numbers<[1], [0], [0], [1], [0, 0, 1, 1], [], []>} : vector<8x32xf32>, vector<32x8xf32>, vector<8x8xf32> -> vector<8x8xf32>
    %c1_126 = arith.constant 1 : index
    %c0_127 = arith.constant 0 : index
    %c0_128 = arith.constant 0 : index
    %129 = vector.load %arg7[%c1_126, %c0_127, %c0_128] : memref<4x8x32xf32, #tpu.memory_space<vmem>>, vector<1x8x32xf32>
    %130 = vector.shape_cast %129 : vector<1x8x32xf32> to vector<8x32xf32>
    %cst_129 = arith.constant dense<0.000000e+00> : vector<8x32xf32>
    %131 = tpu.matmul %128, %130, %cst_129 {dimension_numbers = #tpu.dot_dimension_numbers<[1], [0], [0], [1], [0, 0, 1, 1], [], []>} : vector<8x8xf32>, vector<8x32xf32>, vector<8x32xf32> -> vector<8x32xf32>
    %132 = arith.addf %125, %131 : vector<8x32xf32>
    %c2_130 = arith.constant 2 : index
    %c0_131 = arith.constant 0 : index
    %c0_132 = arith.constant 0 : index
    %133 = vector.load %arg5[%c2_130, %c0_131, %c0_132] : memref<8x8x32xf32, #tpu.memory_space<vmem>>, vector<1x8x32xf32>
    %134 = vector.shape_cast %133 : vector<1x8x32xf32> to vector<8x32xf32>
    %cst_133 = arith.constant dense<0.000000e+00> : vector<8x8xf32>
    %135 = tpu.matmul %134, %83, %cst_133 {dimension_numbers = #tpu.dot_dimension_numbers<[1], [0], [0], [1], [0, 0, 1, 1], [], []>} : vector<8x32xf32>, vector<32x8xf32>, vector<8x8xf32> -> vector<8x8xf32>
    %c2_134 = arith.constant 2 : index
    %c0_135 = arith.constant 0 : index
    %c0_136 = arith.constant 0 : index
    %136 = vector.load %arg7[%c2_134, %c0_135, %c0_136] : memref<4x8x32xf32, #tpu.memory_space<vmem>>, vector<1x8x32xf32>
    %137 = vector.shape_cast %136 : vector<1x8x32xf32> to vector<8x32xf32>
    %cst_137 = arith.constant dense<0.000000e+00> : vector<8x32xf32>
    %138 = tpu.matmul %135, %137, %cst_137 {dimension_numbers = #tpu.dot_dimension_numbers<[1], [0], [0], [1], [0, 0, 1, 1], [], []>} : vector<8x8xf32>, vector<8x32xf32>, vector<8x32xf32> -> vector<8x32xf32>
    %139 = arith.addf %132, %138 : vector<8x32xf32>
    %c3_138 = arith.constant 3 : index
    %c0_139 = arith.constant 0 : index
    %c0_140 = arith.constant 0 : index
    %140 = vector.load %arg5[%c3_138, %c0_139, %c0_140] : memref<8x8x32xf32, #tpu.memory_space<vmem>>, vector<1x8x32xf32>
    %141 = vector.shape_cast %140 : vector<1x8x32xf32> to vector<8x32xf32>
    %cst_141 = arith.constant dense<0.000000e+00> : vector<8x8xf32>
    %142 = tpu.matmul %141, %83, %cst_141 {dimension_numbers = #tpu.dot_dimension_numbers<[1], [0], [0], [1], [0, 0, 1, 1], [], []>} : vector<8x32xf32>, vector<32x8xf32>, vector<8x8xf32> -> vector<8x8xf32>
    %c3_142 = arith.constant 3 : index
    %c0_143 = arith.constant 0 : index
    %c0_144 = arith.constant 0 : index
    %143 = vector.load %arg7[%c3_142, %c0_143, %c0_144] : memref<4x8x32xf32, #tpu.memory_space<vmem>>, vector<1x8x32xf32>
    %144 = vector.shape_cast %143 : vector<1x8x32xf32> to vector<8x32xf32>
    %cst_145 = arith.constant dense<0.000000e+00> : vector<8x32xf32>
    %145 = tpu.matmul %142, %144, %cst_145 {dimension_numbers = #tpu.dot_dimension_numbers<[1], [0], [0], [1], [0, 0, 1, 1], [], []>} : vector<8x8xf32>, vector<8x32xf32>, vector<8x32xf32> -> vector<8x32xf32>
    %146 = arith.addf %139, %145 : vector<8x32xf32>
    %147 = arith.addf %1, %146 : vector<8x32xf32>
    %c0_146 = arith.constant 0 : index
    %c0_147 = arith.constant 0 : index
    %148 = vector.load %arg8[%c0_146, %c0_147] : memref<1x32xf32, #tpu.memory_space<vmem>>, vector<1x32xf32>
    %149 = vector.broadcast %148 : vector<1x32xf32> to vector<8x32xf32>
    %150 = arith.addf %147, %149 : vector<8x32xf32>
    %c0_148 = arith.constant 0 : index
    %c0_149 = arith.constant 0 : index
    %151 = vector.load %arg9[%c0_148, %c0_149] : memref<1x32xf32, #tpu.memory_space<vmem>>, vector<1x32xf32>
    %c0_150 = arith.constant 0 : index
    %c0_151 = arith.constant 0 : index
    %152 = vector.load %arg10[%c0_150, %c0_151] : memref<1x32xf32, #tpu.memory_space<vmem>>, vector<1x32xf32>
    %cst_152 = arith.constant dense<0.000000e+00> : vector<8xf32>
    %153 = vector.multi_reduction <add>, %150, %cst_152 [1] : vector<8x32xf32> to vector<8xf32>
    %154 = vector.shape_cast %153 : vector<8xf32> to vector<8x1xf32>
    %cst_153 = arith.constant 3.200000e+01 : f32
    %155 = vector.broadcast %cst_153 : f32 to vector<8x1xf32>
    %156 = arith.divf %154, %155 : vector<8x1xf32>
    %157 = vector.broadcast %156 : vector<8x1xf32> to vector<8x32xf32>
    %158 = arith.subf %150, %157 : vector<8x32xf32>
    %159 = arith.mulf %158, %158 : vector<8x32xf32>
    %cst_154 = arith.constant dense<0.000000e+00> : vector<8xf32>
    %160 = vector.multi_reduction <add>, %159, %cst_154 [1] : vector<8x32xf32> to vector<8xf32>
    %161 = vector.shape_cast %160 : vector<8xf32> to vector<8x1xf32>
    %cst_155 = arith.constant 3.200000e+01 : f32
    %162 = vector.broadcast %cst_155 : f32 to vector<8x1xf32>
    %163 = arith.divf %161, %162 : vector<8x1xf32>
    %164 = vector.broadcast %156 : vector<8x1xf32> to vector<8x32xf32>
    %165 = arith.subf %150, %164 : vector<8x32xf32>
    %cst_156 = arith.constant 9.99999974E-6 : f32
    %166 = vector.broadcast %cst_156 : f32 to vector<8x1xf32>
    %167 = arith.addf %163, %166 : vector<8x1xf32>
    %168 = math.rsqrt %167 : vector<8x1xf32>
    %169 = vector.broadcast %168 : vector<8x1xf32> to vector<8x32xf32>
    %170 = arith.mulf %165, %169 : vector<8x32xf32>
    %171 = vector.broadcast %151 : vector<1x32xf32> to vector<8x32xf32>
    %172 = arith.mulf %170, %171 : vector<8x32xf32>
    %173 = vector.broadcast %152 : vector<1x32xf32> to vector<8x32xf32>
    %174 = arith.addf %172, %173 : vector<8x32xf32>
    %c0_157 = arith.constant 0 : index
    %c0_158 = arith.constant 0 : index
    %175 = vector.load %arg11[%c0_157, %c0_158] : memref<32x64xf32, #tpu.memory_space<vmem>>, vector<32x64xf32>
    %cst_159 = arith.constant dense<0.000000e+00> : vector<8x64xf32>
    %176 = tpu.matmul %174, %175, %cst_159 {dimension_numbers = #tpu.dot_dimension_numbers<[1], [0], [0], [1], [0, 0, 1, 1], [], []>} : vector<8x32xf32>, vector<32x64xf32>, vector<8x64xf32> -> vector<8x64xf32>
    %c0_160 = arith.constant 0 : index
    %c0_161 = arith.constant 0 : index
    %177 = vector.load %arg12[%c0_160, %c0_161] : memref<1x64xf32, #tpu.memory_space<vmem>>, vector<1x64xf32>
    %178 = vector.broadcast %177 : vector<1x64xf32> to vector<8x64xf32>
    %179 = arith.addf %176, %178 : vector<8x64xf32>
    %cst_162 = arith.constant 0.000000e+00 : f32
    %180 = vector.broadcast %cst_162 : f32 to vector<8x64xf32>
    %181 = arith.maximumf %179, %180 : vector<8x64xf32>
    %c0_163 = arith.constant 0 : index
    %c0_164 = arith.constant 0 : index
    %182 = vector.load %arg13[%c0_163, %c0_164] : memref<64x32xf32, #tpu.memory_space<vmem>>, vector<64x32xf32>
    %cst_165 = arith.constant dense<0.000000e+00> : vector<8x32xf32>
    %183 = tpu.matmul %181, %182, %cst_165 {dimension_numbers = #tpu.dot_dimension_numbers<[1], [0], [0], [1], [0, 0, 1, 1], [], []>} : vector<8x64xf32>, vector<64x32xf32>, vector<8x32xf32> -> vector<8x32xf32>
    %c0_166 = arith.constant 0 : index
    %c0_167 = arith.constant 0 : index
    %184 = vector.load %arg14[%c0_166, %c0_167] : memref<1x32xf32, #tpu.memory_space<vmem>>, vector<1x32xf32>
    %185 = vector.broadcast %184 : vector<1x32xf32> to vector<8x32xf32>
    %186 = arith.addf %183, %185 : vector<8x32xf32>
    %187 = arith.addf %174, %186 : vector<8x32xf32>
    %c0_168 = arith.constant 0 : index
    %c0_169 = arith.constant 0 : index
    %188 = vector.load %arg15[%c0_168, %c0_169] : memref<1x32xf32, #tpu.memory_space<vmem>>, vector<1x32xf32>
    %c0_170 = arith.constant 0 : index
    %c0_171 = arith.constant 0 : index
    %189 = vector.load %arg16[%c0_170, %c0_171] : memref<1x32xf32, #tpu.memory_space<vmem>>, vector<1x32xf32>
    %cst_172 = arith.constant dense<0.000000e+00> : vector<8xf32>
    %190 = vector.multi_reduction <add>, %187, %cst_172 [1] : vector<8x32xf32> to vector<8xf32>
    %191 = vector.shape_cast %190 : vector<8xf32> to vector<8x1xf32>
    %cst_173 = arith.constant 3.200000e+01 : f32
    %192 = vector.broadcast %cst_173 : f32 to vector<8x1xf32>
    %193 = arith.divf %191, %192 : vector<8x1xf32>
    %194 = vector.broadcast %193 : vector<8x1xf32> to vector<8x32xf32>
    %195 = arith.subf %187, %194 : vector<8x32xf32>
    %196 = arith.mulf %195, %195 : vector<8x32xf32>
    %cst_174 = arith.constant dense<0.000000e+00> : vector<8xf32>
    %197 = vector.multi_reduction <add>, %196, %cst_174 [1] : vector<8x32xf32> to vector<8xf32>
    %198 = vector.shape_cast %197 : vector<8xf32> to vector<8x1xf32>
    %cst_175 = arith.constant 3.200000e+01 : f32
    %199 = vector.broadcast %cst_175 : f32 to vector<8x1xf32>
    %200 = arith.divf %198, %199 : vector<8x1xf32>
    %201 = vector.broadcast %193 : vector<8x1xf32> to vector<8x32xf32>
    %202 = arith.subf %187, %201 : vector<8x32xf32>
    %cst_176 = arith.constant 9.99999974E-6 : f32
    %203 = vector.broadcast %cst_176 : f32 to vector<8x1xf32>
    %204 = arith.addf %200, %203 : vector<8x1xf32>
    %205 = math.rsqrt %204 : vector<8x1xf32>
    %206 = vector.broadcast %205 : vector<8x1xf32> to vector<8x32xf32>
    %207 = arith.mulf %202, %206 : vector<8x32xf32>
    %208 = vector.broadcast %188 : vector<1x32xf32> to vector<8x32xf32>
    %209 = arith.mulf %207, %208 : vector<8x32xf32>
    %210 = vector.broadcast %189 : vector<1x32xf32> to vector<8x32xf32>
    %211 = arith.addf %209, %210 : vector<8x32xf32>
    %c0_177 = arith.constant 0 : index
    %c0_178 = arith.constant 0 : index
    %c0_179 = arith.constant 0 : index
    %212 = vector.load %arg17[%c0_177, %c0_178, %c0_179] : memref<1x8x32xf32, #tpu.memory_space<vmem>>, vector<1x8x32xf32>
    %213 = vector.shape_cast %212 : vector<1x8x32xf32> to vector<8x32xf32>
    %214 = vector.shape_cast %211 : vector<8x32xf32> to vector<1x8x32xf32>
    tpu.vector_store %arg17[%c0_177, %c0_178, %c0_179], %214 {strides = array<i32>} : memref<1x8x32xf32, #tpu.memory_space<vmem>>, vector<1x8x32xf32>,
    return
  }
  func.func @transform_0(%arg0: i32) -> (i32, i32, i32) {
    %c0_i32 = arith.constant 0 : i32
    %c0_i32_0 = arith.constant 0 : i32
    %c0_i32_1 = arith.constant 0 : i32
    return %arg0, %c0_i32, %c0_i32_0 : i32, i32, i32
  }
  func.func @transform_1(%arg0: i32) -> (i32, i32, i32) {
    %c0_i32 = arith.constant 0 : i32
    %c0_i32_0 = arith.constant 0 : i32
    %c0_i32_1 = arith.constant 0 : i32
    %c0_i32_2 = arith.constant 0 : i32
    return %c0_i32, %c0_i32_0, %c0_i32_1 : i32, i32, i32
  }
  func.func @transform_2(%arg0: i32) -> (i32, i32, i32) {
    %c0_i32 = arith.constant 0 : i32
    %c0_i32_0 = arith.constant 0 : i32
    %c0_i32_1 = arith.constant 0 : i32
    %c0_i32_2 = arith.constant 0 : i32
    return %c0_i32, %c0_i32_0, %c0_i32_1 : i32, i32, i32
  }
  func.func @transform_3(%arg0: i32) -> (i32, i32, i32) {
    %c0_i32 = arith.constant 0 : i32
    %c0_i32_0 = arith.constant 0 : i32
    %c0_i32_1 = arith.constant 0 : i32
    %c0_i32_2 = arith.constant 0 : i32
    return %c0_i32, %c0_i32_0, %c0_i32_1 : i32, i32, i32
  }
  func.func @transform_4(%arg0: i32) -> (i32, i32, i32) {
    %c0_i32 = arith.constant 0 : i32
    %c0_i32_0 = arith.constant 0 : i32
    %c0_i32_1 = arith.constant 0 : i32
    %c0_i32_2 = arith.constant 0 : i32
    return %c0_i32, %c0_i32_0, %c0_i32_1 : i32, i32, i32
  }
  func.func @transform_5(%arg0: i32) -> (i32, i32) {
    %c0_i32 = arith.constant 0 : i32
    %c0_i32_0 = arith.constant 0 : i32
    %c0_i32_1 = arith.constant 0 : i32
    return %c0_i32, %c0_i32_0 : i32, i32
  }
  func.func @transform_6(%arg0: i32) -> (i32, i32, i32) {
    %c0_i32 = arith.constant 0 : i32
    %c0_i32_0 = arith.constant 0 : i32
    %c0_i32_1 = arith.constant 0 : i32
    %c0_i32_2 = arith.constant 0 : i32
    return %c0_i32, %c0_i32_0, %c0_i32_1 : i32, i32, i32
  }
  func.func @transform_7(%arg0: i32) -> (i32, i32) {
    %c0_i32 = arith.constant 0 : i32
    %c0_i32_0 = arith.constant 0 : i32
    %c0_i32_1 = arith.constant 0 : i32
    return %c0_i32, %c0_i32_0 : i32, i32
  }
  func.func @transform_8(%arg0: i32) -> (i32, i32) {
    %c0_i32 = arith.constant 0 : i32
    %c0_i32_0 = arith.constant 0 : i32
    %c0_i32_1 = arith.constant 0 : i32
    return %c0_i32, %c0_i32_0 : i32, i32
  }
  func.func @transform_9(%arg0: i32) -> (i32, i32) {
    %c0_i32 = arith.constant 0 : i32
    %c0_i32_0 = arith.constant 0 : i32
    %c0_i32_1 = arith.constant 0 : i32
    return %c0_i32, %c0_i32_0 : i32, i32
  }
  func.func @transform_10(%arg0: i32) -> (i32, i32) {
    %c0_i32 = arith.constant 0 : i32
    %c0_i32_0 = arith.constant 0 : i32
    %c0_i32_1 = arith.constant 0 : i32
    return %c0_i32, %c0_i32_0 : i32, i32
  }
  func.func @transform_11(%arg0: i32) -> (i32, i32) {
    %c0_i32 = arith.constant 0 : i32
    %c0_i32_0 = arith.constant 0 : i32
    %c0_i32_1 = arith.constant 0 : i32
    return %c0_i32, %c0_i32_0 : i32, i32
  }
  func.func @transform_12(%arg0: i32) -> (i32, i32) {
    %c0_i32 = arith.constant 0 : i32
    %c0_i32_0 = arith.constant 0 : i32
    %c0_i32_1 = arith.constant 0 : i32
    return %c0_i32, %c0_i32_0 : i32, i32
  }
  func.func @transform_13(%arg0: i32) -> (i32, i32) {
    %c0_i32 = arith.constant 0 : i32
    %c0_i32_0 = arith.constant 0 : i32
    %c0_i32_1 = arith.constant 0 : i32
    return %c0_i32, %c0_i32_0 : i32, i32
  }
  func.func @transform_14(%arg0: i32) -> (i32, i32) {
    %c0_i32 = arith.constant 0 : i32
    %c0_i32_0 = arith.constant 0 : i32
    %c0_i32_1 = arith.constant 0 : i32
    return %c0_i32, %c0_i32_0 : i32, i32
  }
  func.func @transform_15(%arg0: i32) -> (i32, i32) {
    %c0_i32 = arith.constant 0 : i32
    %c0_i32_0 = arith.constant 0 : i32
    %c0_i32_1 = arith.constant 0 : i32
    return %c0_i32, %c0_i32_0 : i32, i32
  }
  func.func @transform_16(%arg0: i32) -> (i32, i32, i32) {
    %c0_i32 = arith.constant 0 : i32
    %c0_i32_0 = arith.constant 0 : i32
    %c0_i32_1 = arith.constant 0 : i32
    return %arg0, %c0_i32, %c0_i32_0 : i32, i32, i32
  }
  func.func @transform_17(%arg0: i32) -> (i32, i32, i32) {
    %c0_i32 = arith.constant 0 : i32
    %c0_i32_0 = arith.constant 0 : i32
    %c0_i32_1 = arith.constant 0 : i32
    return %arg0, %c0_i32, %c0_i32_0 : i32, i32, i32
  }
}

</mosaic_0001>

<llo_original>
// kernel: tpu_custom_call.1
$region0: #{tpu_custom_call.1}
  #allocation0 [shape = 'u32[]', space=smem, size = 0x4, offset = 0x4, fixed_abs, tag = 'smem constant byte address 0x4 - core index']
  #allocation1 [shape = 'u32[144,128]{1,0:T(1,128)}', space=vmem, size = 0x12000, scoped, tag = 'internal scratch']
  %s0 = inlined_call_operand.vmem [shape: f32[2,8,32], index: 0, kind: input, shape index: {}]
  %s1 = inlined_call_operand.vmem [shape: f32[12,32,8], index: 1, kind: input, shape index: {}]
  %s2 = inlined_call_operand.vmem [shape: f32[3,32,8], index: 2, kind: input, shape index: {}]
  %s3 = inlined_call_operand.vmem [shape: f32[8,32,8], index: 3, kind: input, shape index: {}]
  %s4 = inlined_call_operand.vmem [shape: f32[8,8,32], index: 4, kind: input, shape index: {}]
  %s5 = inlined_call_operand.vmem [shape: f32[32,32], index: 5, kind: input, shape index: {}]
  %s6 = inlined_call_operand.vmem [shape: f32[4,8,32], index: 6, kind: input, shape index: {}]
  %s7 = inlined_call_operand.vmem [shape: f32[1,32], index: 7, kind: input, shape index: {}]
  %s8 = inlined_call_operand.vmem [shape: f32[1,32], index: 8, kind: input, shape index: {}]
  %s9 = inlined_call_operand.vmem [shape: f32[1,32], index: 9, kind: input, shape index: {}]
  %s10 = inlined_call_operand.vmem [shape: f32[32,64], index: 10, kind: input, shape index: {}]
  %s11 = inlined_call_operand.vmem [shape: f32[1,64], index: 11, kind: input, shape index: {}]
  %s12 = inlined_call_operand.vmem [shape: f32[64,32], index: 12, kind: input, shape index: {}]
  %s13 = inlined_call_operand.vmem [shape: f32[1,32], index: 13, kind: input, shape index: {}]
  %s14 = inlined_call_operand.vmem [shape: f32[1,32], index: 14, kind: input, shape index: {}]
  %s15 = inlined_call_operand.vmem [shape: f32[1,32], index: 15, kind: input, shape index: {}]
  %s16 = inlined_call_operand.hbm [shape: f32[2,8,32], index: 16, kind: output, shape index: {0}]
  %s17 = inlined_call_operand.hbm [shape: f32[8,8,8], index: 17, kind: output, shape index: {1}]
  %18 = xla_tuple %s16, %s17
  %s19 = sld [smem:[#allocation0]]
  $region105: #{tpu_custom_call.1} parent=0
    _
  %s21 = ssub.s32 1, %s19
  %s22 = scalar_select 0, %s21, %s19
  $region1: #{tpu_custom_call.1} parent=0
    #allocation2 [shape = 'u8[8192]{0}', space=vmem, size = 0x2000, scoped, tag = 'output window, operand 0']
    #allocation3 [shape = 's32[2]{0}', space=sflag, size = 0x8, scoped, tag = 'scoped memory for tpu_custom_call.1']
    #allocation4 [shape = 'u8[32768]{0}', space=vmem, size = 0x8000, scoped, tag = 'output window, operand 1']
    #allocation5 [shape = 's32[2]{0}', space=sflag, size = 0x8, scoped, tag = 'scoped memory for tpu_custom_call.1']
    %23 = vsyncpa [#allocation3], 0
    %s24 = scalar_lea.sflag [#allocation3], 1
    %25 = vsyncpa %s24, 0
    %26 = vsyncpa [#allocation5], 0
    %s27 = scalar_lea.sflag [#allocation5], 1
    %28 = vsyncpa %s27, 0
    loop: start=0, step=1, limit=4
    $region2: #{tpu_custom_call.1} parent=1 // loop_pre_header
      _
    $region3: #{tpu_custom_call.1} parent=1 // loop_header
      %s30 = sphi 0, %s34
      %p31 = scmp.ge.s32.totalorder %s30, 4
      %s40 = sphi 0, %s42
      %s43 = sphi 0, %s40
      %s44 = sphi 0, %s43
      %s60 = sphi 0, %s44
      %s64 = sphi 0, %s64
      %s66 = sphi 0, %s64
      %s67 = sphi 0, %s66
      %s81 = sphi 0, %s67
      %s85 = sphi 0, %s85
      %s87 = sphi 0, %s85
      %s88 = sphi 0, %s87
      %s102 = sphi 0, %s88
      %s106 = sphi 0, %s106
      %s108 = sphi 0, %s106
      %s109 = sphi 0, %s108
      %s123 = sphi 0, %s109
      %s127 = sphi 0, %s127
      %s129 = sphi 0, %s127
      %s130 = sphi 0, %s129
      %s144 = sphi 0, %s130
      %s148 = sphi 0, %s148
      %s150 = sphi 0, %s148
      %s151 = sphi 0, %s150
      %s165 = sphi 0, %s151
      %s169 = sphi 0, %s169
      %s171 = sphi 0, %s169
      %s172 = sphi 0, %s171
      %s186 = sphi 0, %s172
      %s190 = sphi 0, %s190
      %s192 = sphi 0, %s190
      %s193 = sphi 0, %s192
      %s207 = sphi 0, %s193
      %s211 = sphi 0, %s211
      %s213 = sphi 0, %s211
      %s214 = sphi 0, %s213
      %s228 = sphi 0, %s214
      %s232 = sphi 0, %s232
      %s234 = sphi 0, %s232
      %s235 = sphi 0, %s234
      %s249 = sphi 0, %s235
      %s253 = sphi 0, %s253
      %s255 = sphi 0, %s253
      %s256 = sphi 0, %s255
      %s270 = sphi 0, %s256
      %s274 = sphi 0, %s274
      %s276 = sphi 0, %s274
      %s277 = sphi 0, %s276
      %s291 = sphi 0, %s277
      %s295 = sphi 0, %s295
      %s297 = sphi 0, %s295
      %s298 = sphi 0, %s297
      %s312 = sphi 0, %s298
      %s316 = sphi 0, %s316
      %s318 = sphi 0, %s316
      %s319 = sphi 0, %s318
      %s333 = sphi 0, %s319
      %s337 = sphi 0, %s337
      %s339 = sphi 0, %s337
      %s340 = sphi 0, %s339
      %s354 = sphi 0, %s340
      %s358 = sphi 0, %s358
      %s360 = sphi 0, %s358
      %s361 = sphi 0, %s360
      %s375 = sphi 0, %s361
      %s381 = sphi 0, %s383
      %s384 = sphi 0, %s381
      %s385 = sphi 0, %s384
      %s401 = sphi 0, %s385
      %s407 = sphi 0, %s409
      %s410 = sphi 0, %s407
      %s411 = sphi 0, %s410
      %s427 = sphi 0, %s411
    $region4: #{tpu_custom_call.1} parent=1 // loop_header_branch
      %33 = sbr.rel (%p31) target = $region8
    $region5: #{tpu_custom_call.1} parent=1 // loop_body
      %s35 = ssub.s32 %s30, 1
      %s36 = ssub.s32 %s30, 2
      %s37 = sadd.s32 %s30, 1
      %s38 = ssub.s32 %s30, %s37
      %p39 = scmp.eq.s32.totalorder %s38, 0
      %s41 = sadd.s32 %s40, 1
      %s42 = scalar_select %p39, %s40, %s41
      %p45 = pneg %p39
      %p46 = scmp.eq.s32.totalorder %s30, 1
      %p47 = por %p45, %p46
      %p48 = scmp.ne.s32.totalorder %s40, %s43
      %p49 = scmp.eq.s32.totalorder %s30, 0
      %p50 = por %p48, %p49
      %p51 = scmp.ne.s32.totalorder %s40, %s43
      %p52 = scmp.eq.s32.totalorder %s35, 1
      %p53 = por %p51, %p52
      %p54 = scmp.ne.s32.totalorder %s43, %s44
      %p55 = scmp.eq.s32.totalorder %s35, 0
      %p56 = por %p54, %p55
      %p57 = scmp.ne.s32.totalorder %s43, %s44
      %p58 = scmp.eq.s32.totalorder %s36, 1
      %p59 = por %p57, %p58
      %p61 = scmp.ne.s32.totalorder %s44, %s60
      %p62 = scmp.eq.s32.totalorder %s36, 0
      %p63 = por %p61, %p62
      %s65 = sadd.s32 %s64, 1
      %p68 = scmp.eq.s32.totalorder %s30, 1
      %p69 = scmp.ne.s32.totalorder %s64, %s66
      %p70 = scmp.eq.s32.totalorder %s30, 0
      %p71 = por %p69, %p70
      %p72 = scmp.ne.s32.totalorder %s64, %s66
      %p73 = scmp.eq.s32.totalorder %s35, 1
      %p74 = por %p72, %p73
      %p75 = scmp.ne.s32.totalorder %s66, %s67
      %p76 = scmp.eq.s32.totalorder %s35, 0
      %p77 = por %p75, %p76
      %p78 = scmp.ne.s32.totalorder %s66, %s67
      %p79 = scmp.eq.s32.totalorder %s36, 1
      %p80 = por %p78, %p79
      %p82 = scmp.ne.s32.totalorder %s67, %s81
      %p83 = scmp.eq.s32.totalorder %s36, 0
      %p84 = por %p82, %p83
      %s86 = sadd.s32 %s85, 1
      %p89 = scmp.eq.s32.totalorder %s30, 1
      %p90 = scmp.ne.s32.totalorder %s85, %s87
      %p91 = scmp.eq.s32.totalorder %s30, 0
      %p92 = por %p90, %p91
      %p93 = scmp.ne.s32.totalorder %s85, %s87
      %p94 = scmp.eq.s32.totalorder %s35, 1
      %p95 = por %p93, %p94
      %p96 = scmp.ne.s32.totalorder %s87, %s88
      %p97 = scmp.eq.s32.totalorder %s35, 0
      %p98 = por %p96, %p97
      %p99 = scmp.ne.s32.totalorder %s87, %s88
      %p100 = scmp.eq.s32.totalorder %s36, 1
      %p101 = por %p99, %p100
      %p103 = scmp.ne.s32.totalorder %s88, %s102
      %p104 = scmp.eq.s32.totalorder %s36, 0
      %p105 = por %p103, %p104
      %s107 = sadd.s32 %s106, 1
      %p110 = scmp.eq.s32.totalorder %s30, 1
      %p111 = scmp.ne.s32.totalorder %s106, %s108
      %p112 = scmp.eq.s32.totalorder %s30, 0
      %p113 = por %p111, %p112
      %p114 = scmp.ne.s32.totalorder %s106, %s108
      %p115 = scmp.eq.s32.totalorder %s35, 1
      %p116 = por %p114, %p115
      %p117 = scmp.ne.s32.totalorder %s108, %s109
      %p118 = scmp.eq.s32.totalorder %s35, 0
      %p119 = por %p117, %p118
      %p120 = scmp.ne.s32.totalorder %s108, %s109
      %p121 = scmp.eq.s32.totalorder %s36, 1
      %p122 = por %p120, %p121
      %p124 = scmp.ne.s32.totalorder %s109, %s123
      %p125 = scmp.eq.s32.totalorder %s36, 0
      %p126 = por %p124, %p125
      %s128 = sadd.s32 %s127, 1
      %p131 = scmp.eq.s32.totalorder %s30, 1
      %p132 = scmp.ne.s32.totalorder %s127, %s129
      %p133 = scmp.eq.s32.totalorder %s30, 0
      %p134 = por %p132, %p133
      %p135 = scmp.ne.s32.totalorder %s127, %s129
      %p136 = scmp.eq.s32.totalorder %s35, 1
      %p137 = por %p135, %p136
      %p138 = scmp.ne.s32.totalorder %s129, %s130
      %p139 = scmp.eq.s32.totalorder %s35, 0
      %p140 = por %p138, %p139
      %p141 = scmp.ne.s32.totalorder %s129, %s130
      %p142 = scmp.eq.s32.totalorder %s36, 1
      %p143 = por %p141, %p142
      %p145 = scmp.ne.s32.totalorder %s130, %s144
      %p146 = scmp.eq.s32.totalorder %s36, 0
      %p147 = por %p145, %p146
      %s149 = sadd.s32 %s148, 1
      %p152 = scmp.eq.s32.totalorder %s30, 1
      %p153 = scmp.ne.s32.totalorder %s148, %s150
      %p154 = scmp.eq.s32.totalorder %s30, 0
      %p155 = por %p153, %p154
      %p156 = scmp.ne.s32.totalorder %s148, %s150
      %p157 = scmp.eq.s32.totalorder %s35, 1
      %p158 = por %p156, %p157
      %p159 = scmp.ne.s32.totalorder %s150, %s151
      %p160 = scmp.eq.s32.totalorder %s35, 0
      %p161 = por %p159, %p160
      %p162 = scmp.ne.s32.totalorder %s150, %s151
      %p163 = scmp.eq.s32.totalorder %s36, 1
      %p164 = por %p162, %p163
      %p166 = scmp.ne.s32.totalorder %s151, %s165
      %p167 = scmp.eq.s32.totalorder %s36, 0
      %p168 = por %p166, %p167
      %s170 = sadd.s32 %s169, 1
      %p173 = scmp.eq.s32.totalorder %s30, 1
      %p174 = scmp.ne.s32.totalorder %s169, %s171
      %p175 = scmp.eq.s32.totalorder %s30, 0
      %p176 = por %p174, %p175
      %p177 = scmp.ne.s32.totalorder %s169, %s171
      %p178 = scmp.eq.s32.totalorder %s35, 1
      %p179 = por %p177, %p178
      %p180 = scmp.ne.s32.totalorder %s171, %s172
      %p181 = scmp.eq.s32.totalorder %s35, 0
      %p182 = por %p180, %p181
      %p183 = scmp.ne.s32.totalorder %s171, %s172
      %p184 = scmp.eq.s32.totalorder %s36, 1
      %p185 = por %p183, %p184
      %p187 = scmp.ne.s32.totalorder %s172, %s186
      %p188 = scmp.eq.s32.totalorder %s36, 0
      %p189 = por %p187, %p188
      %s191 = sadd.s32 %s190, 1
      %p194 = scmp.eq.s32.totalorder %s30, 1
      %p195 = scmp.ne.s32.totalorder %s190, %s192
      %p196 = scmp.eq.s32.totalorder %s30, 0
      %p197 = por %p195, %p196
      %p198 = scmp.ne.s32.totalorder %s190, %s192
      %p199 = scmp.eq.s32.totalorder %s35, 1
      %p200 = por %p198, %p199
      %p201 = scmp.ne.s32.totalorder %s192, %s193
      %p202 = scmp.eq.s32.totalorder %s35, 0
      %p203 = por %p201, %p202
      %p204 = scmp.ne.s32.totalorder %s192, %s193
      %p205 = scmp.eq.s32.totalorder %s36, 1
      %p206 = por %p204, %p205
      %p208 = scmp.ne.s32.totalorder %s193, %s207
      %p209 = scmp.eq.s32.totalorder %s36, 0
      %p210 = por %p208, %p209
      %s212 = sadd.s32 %s211, 1
      %p215 = scmp.eq.s32.totalorder %s30, 1
      %p216 = scmp.ne.s32.totalorder %s211, %s213
      %p217 = scmp.eq.s32.totalorder %s30, 0
      %p218 = por %p216, %p217
      %p219 = scmp.ne.s32.totalorder %s211, %s213
      %p220 = scmp.eq.s32.totalorder %s35, 1
      %p221 = por %p219, %p220
      %p222 = scmp.ne.s32.totalorder %s213, %s214
      %p223 = scmp.eq.s32.totalorder %s35, 0
      %p224 = por %p222, %p223
      %p225 = scmp.ne.s32.totalorder %s213, %s214
      %p226 = scmp.eq.s32.totalorder %s36, 1
      %p227 = por %p225, %p226
      %p229 = scmp.ne.s32.totalorder %s214, %s228
      %p230 = scmp.eq.s32.totalorder %s36, 0
      %p231 = por %p229, %p230
      %s233 = sadd.s32 %s232, 1
      %p236 = scmp.eq.s32.totalorder %s30, 1
      %p237 = scmp.ne.s32.totalorder %s232, %s234
      %p238 = scmp.eq.s32.totalorder %s30, 0
      %p239 = por %p237, %p238
      %p240 = scmp.ne.s32.totalorder %s232, %s234
      %p241 = scmp.eq.s32.totalorder %s35, 1
      %p242 = por %p240, %p241
      %p243 = scmp.ne.s32.totalorder %s234, %s235
      %p244 = scmp.eq.s32.totalorder %s35, 0
      %p245 = por %p243, %p244
      %p246 = scmp.ne.s32.totalorder %s234, %s235
      %p247 = scmp.eq.s32.totalorder %s36, 1
      %p248 = por %p246, %p247
      %p250 = scmp.ne.s32.totalorder %s235, %s249
      %p251 = scmp.eq.s32.totalorder %s36, 0
      %p252 = por %p250, %p251
      %s254 = sadd.s32 %s253, 1
      %p257 = scmp.eq.s32.totalorder %s30, 1
      %p258 = scmp.ne.s32.totalorder %s253, %s255
      %p259 = scmp.eq.s32.totalorder %s30, 0
      %p260 = por %p258, %p259
      %p261 = scmp.ne.s32.totalorder %s253, %s255
      %p262 = scmp.eq.s32.totalorder %s35, 1
      %p263 = por %p261, %p262
      %p264 = scmp.ne.s32.totalorder %s255, %s256
      %p265 = scmp.eq.s32.totalorder %s35, 0
      %p266 = por %p264, %p265
      %p267 = scmp.ne.s32.totalorder %s255, %s256
      %p268 = scmp.eq.s32.totalorder %s36, 1
      %p269 = por %p267, %p268
      %p271 = scmp.ne.s32.totalorder %s256, %s270
      %p272 = scmp.eq.s32.totalorder %s36, 0
      %p273 = por %p271, %p272
      %s275 = sadd.s32 %s274, 1
      %p278 = scmp.eq.s32.totalorder %s30, 1
      %p279 = scmp.ne.s32.totalorder %s274, %s276
      %p280 = scmp.eq.s32.totalorder %s30, 0
      %p281 = por %p279, %p280
      %p282 = scmp.ne.s32.totalorder %s274, %s276
      %p283 = scmp.eq.s32.totalorder %s35, 1
      %p284 = por %p282, %p283
      %p285 = scmp.ne.s32.totalorder %s276, %s277
      %p286 = scmp.eq.s32.totalorder %s35, 0
      %p287 = por %p285, %p286
      %p288 = scmp.ne.s32.totalorder %s276, %s277
      %p289 = scmp.eq.s32.totalorder %s36, 1
      %p290 = por %p288, %p289
      %p292 = scmp.ne.s32.totalorder %s277, %s291
      %p293 = scmp.eq.s32.totalorder %s36, 0
      %p294 = por %p292, %p293
      %s296 = sadd.s32 %s295, 1
      %p299 = scmp.eq.s32.totalorder %s30, 1
      %p300 = scmp.ne.s32.totalorder %s295, %s297
      %p301 = scmp.eq.s32.totalorder %s30, 0
      %p302 = por %p300, %p301
      %p303 = scmp.ne.s32.totalorder %s295, %s297
      %p304 = scmp.eq.s32.totalorder %s35, 1
      %p305 = por %p303, %p304
      %p306 = scmp.ne.s32.totalorder %s297, %s298
      %p307 = scmp.eq.s32.totalorder %s35, 0
      %p308 = por %p306, %p307
      %p309 = scmp.ne.s32.totalorder %s297, %s298
      %p310 = scmp.eq.s32.totalorder %s36, 1
      %p311 = por %p309, %p310
      %p313 = scmp.ne.s32.totalorder %s298, %s312
      %p314 = scmp.eq.s32.totalorder %s36, 0
      %p315 = por %p313, %p314
      %s317 = sadd.s32 %s316, 1
      %p320 = scmp.eq.s32.totalorder %s30, 1
      %p321 = scmp.ne.s32.totalorder %s316, %s318
      %p322 = scmp.eq.s32.totalorder %s30, 0
      %p323 = por %p321, %p322
      %p324 = scmp.ne.s32.totalorder %s316, %s318
      %p325 = scmp.eq.s32.totalorder %s35, 1
      %p326 = por %p324, %p325
      %p327 = scmp.ne.s32.totalorder %s318, %s319
      %p328 = scmp.eq.s32.totalorder %s35, 0
      %p329 = por %p327, %p328
      %p330 = scmp.ne.s32.totalorder %s318, %s319
      %p331 = scmp.eq.s32.totalorder %s36, 1
      %p332 = por %p330, %p331
      %p334 = scmp.ne.s32.totalorder %s319, %s333
      %p335 = scmp.eq.s32.totalorder %s36, 0
      %p336 = por %p334, %p335
      %s338 = sadd.s32 %s337, 1
      %p341 = scmp.eq.s32.totalorder %s30, 1
      %p342 = scmp.ne.s32.totalorder %s337, %s339
      %p343 = scmp.eq.s32.totalorder %s30, 0
      %p344 = por %p342, %p343
      %p345 = scmp.ne.s32.totalorder %s337, %s339
      %p346 = scmp.eq.s32.totalorder %s35, 1
      %p347 = por %p345, %p346
      %p348 = scmp.ne.s32.totalorder %s339, %s340
      %p349 = scmp.eq.s32.totalorder %s35, 0
      %p350 = por %p348, %p349
      %p351 = scmp.ne.s32.totalorder %s339, %s340
      %p352 = scmp.eq.s32.totalorder %s36, 1
      %p353 = por %p351, %p352
      %p355 = scmp.ne.s32.totalorder %s340, %s354
      %p356 = scmp.eq.s32.totalorder %s36, 0
      %p357 = por %p355, %p356
      %s359 = sadd.s32 %s358, 1
      %p362 = scmp.eq.s32.totalorder %s30, 1
      %p363 = scmp.ne.s32.totalorder %s358, %s360
      %p364 = scmp.eq.s32.totalorder %s30, 0
      %p365 = por %p363, %p364
      %p366 = scmp.ne.s32.totalorder %s358, %s360
      %p367 = scmp.eq.s32.totalorder %s35, 1
      %p368 = por %p366, %p367
      %p369 = scmp.ne.s32.totalorder %s360, %s361
      %p370 = scmp.eq.s32.totalorder %s35, 0
      %p371 = por %p369, %p370
      %p372 = scmp.ne.s32.totalorder %s360, %s361
      %p373 = scmp.eq.s32.totalorder %s36, 1
      %p374 = por %p372, %p373
      %p376 = scmp.ne.s32.totalorder %s361, %s375
      %p377 = scmp.eq.s32.totalorder %s36, 0
      %p378 = por %p376, %p377
      %s379 = ssub.s32 %s30, %s37
      %p380 = scmp.eq.s32.totalorder %s379, 0
      %s382 = sadd.s32 %s381, 1
      %s383 = scalar_select %p380, %s381, %s382
      %p386 = pneg %p380
      %p387 = scmp.eq.s32.totalorder %s30, 1
      %p388 = por %p386, %p387
      %p389 = scmp.ne.s32.totalorder %s381, %s384
      %p390 = scmp.eq.s32.totalorder %s30, 0
      %p391 = por %p389, %p390
      %p392 = scmp.ne.s32.totalorder %s381, %s384
      %p393 = scmp.eq.s32.totalorder %s35, 1
      %p394 = por %p392, %p393
      %p395 = scmp.ne.s32.totalorder %s384, %s385
      %p396 = scmp.eq.s32.totalorder %s35, 0
      %p397 = por %p395, %p396
      %p398 = scmp.ne.s32.totalorder %s384, %s385
      %p399 = scmp.eq.s32.totalorder %s36, 1
      %p400 = por %p398, %p399
      %p402 = scmp.ne.s32.totalorder %s385, %s401
      %p403 = scmp.eq.s32.totalorder %s36, 0
      %p404 = por %p402, %p403
      %s405 = ssub.s32 %s30, %s37
      %p406 = scmp.eq.s32.totalorder %s405, 0
      %s408 = sadd.s32 %s407, 1
      %s409 = scalar_select %p406, %s407, %s408
      %p412 = pneg %p406
      %p413 = scmp.eq.s32.totalorder %s30, 1
      %p414 = por %p412, %p413
      %p415 = scmp.ne.s32.totalorder %s407, %s410
      %p416 = scmp.eq.s32.totalorder %s30, 0
      %p417 = por %p415, %p416
      %p418 = scmp.ne.s32.totalorder %s407, %s410
      %p419 = scmp.eq.s32.totalorder %s35, 1
      %p420 = por %p418, %p419
      %p421 = scmp.ne.s32.totalorder %s410, %s411
      %p422 = scmp.eq.s32.totalorder %s35, 0
      %p423 = por %p421, %p422
      %p424 = scmp.ne.s32.totalorder %s410, %s411
      %p425 = scmp.eq.s32.totalorder %s36, 1
      %p426 = por %p424, %p425
      %p428 = scmp.ne.s32.totalorder %s411, %s427
      %p429 = scmp.eq.s32.totalorder %s36, 0
      %p430 = por %p428, %p429
      %p431 = scmp.le.s32.totalorder 1, %s30
      %p432 = scmp.lt.s32.totalorder %s30, 3
      %p433 = pnand %p431, %p432
      %p434 = pneg %p433
      // Predicated region
      $region9: #{tpu_custom_call.1} parent=5 // pred_check
        _
      $region10: #{tpu_custom_call.1} parent=5 // pred_check_branch
        %436 = sbr.rel (%p433) target = $region12
      $region11: #{tpu_custom_call.1} parent=5 // pred_region
        %s437 = ssub.s32 %s30, 1
        // Predicated region
        $region13: #{tpu_custom_call.1} parent=11 // pred_check
          %p438 = pneg %p77
        $region14: #{tpu_custom_call.1} parent=11 // pred_check_branch
          %440 = sbr.rel (%p438) target = $region16
        $region15: #{tpu_custom_call.1} parent=11 // pred_region
          _
        $region16: #{tpu_custom_call.1} parent=11 // pred_fallthru
          _
        // Predicated region
        $region17: #{tpu_custom_call.1} parent=11 // pred_check
          %p441 = pneg %p98
        $region18: #{tpu_custom_call.1} parent=11 // pred_check_branch
          %443 = sbr.rel (%p441) target = $region20
        $region19: #{tpu_custom_call.1} parent=11 // pred_region
          _
        $region20: #{tpu_custom_call.1} parent=11 // pred_fallthru
          _
        // Predicated region
        $region21: #{tpu_custom_call.1} parent=11 // pred_check
          %p444 = pneg %p119
        $region22: #{tpu_custom_call.1} parent=11 // pred_check_branch
          %446 = sbr.rel (%p444) target = $region24
        $region23: #{tpu_custom_call.1} parent=11 // pred_region
          _
        $region24: #{tpu_custom_call.1} parent=11 // pred_fallthru
          _
        // Predicated region
        $region25: #{tpu_custom_call.1} parent=11 // pred_check
          %p447 = pneg %p140
        $region26: #{tpu_custom_call.1} parent=11 // pred_check_branch
          %449 = sbr.rel (%p447) target = $region28
        $region27: #{tpu_custom_call.1} parent=11 // pred_region
          _
        $region28: #{tpu_custom_call.1} parent=11 // pred_fallthru
          _
        // Predicated region
        $region29: #{tpu_custom_call.1} parent=11 // pred_check
          %p450 = pneg %p161
        $region30: #{tpu_custom_call.1} parent=11 // pred_check_branch
          %452 = sbr.rel (%p450) target = $region32
        $region31: #{tpu_custom_call.1} parent=11 // pred_region
          _
        $region32: #{tpu_custom_call.1} parent=11 // pred_fallthru
          _
        // Predicated region
        $region33: #{tpu_custom_call.1} parent=11 // pred_check
          %p453 = pneg %p182
        $region34: #{tpu_custom_call.1} parent=11 // pred_check_branch
          %455 = sbr.rel (%p453) target = $region36
        $region35: #{tpu_custom_call.1} parent=11 // pred_region
          _
        $region36: #{tpu_custom_call.1} parent=11 // pred_fallthru
          _
        // Predicated region
        $region37: #{tpu_custom_call.1} parent=11 // pred_check
          %p456 = pneg %p203
        $region38: #{tpu_custom_call.1} parent=11 // pred_check_branch
          %458 = sbr.rel (%p456) target = $region40
        $region39: #{tpu_custom_call.1} parent=11 // pred_region
          _
        $region40: #{tpu_custom_call.1} parent=11 // pred_fallthru
          _
        // Predicated region
        $region41: #{tpu_custom_call.1} parent=11 // pred_check
          %p459 = pneg %p224
        $region42: #{tpu_custom_call.1} parent=11 // pred_check_branch
          %461 = sbr.rel (%p459) target = $region44
        $region43: #{tpu_custom_call.1} parent=11 // pred_region
          _
        $region44: #{tpu_custom_call.1} parent=11 // pred_fallthru
          _
        // Predicated region
        $region45: #{tpu_custom_call.1} parent=11 // pred_check
          %p462 = pneg %p245
        $region46: #{tpu_custom_call.1} parent=11 // pred_check_branch
          %464 = sbr.rel (%p462) target = $region48
        $region47: #{tpu_custom_call.1} parent=11 // pred_region
          _
        $region48: #{tpu_custom_call.1} parent=11 // pred_fallthru
          _
        // Predicated region
        $region49: #{tpu_custom_call.1} parent=11 // pred_check
          %p465 = pneg %p266
        $region50: #{tpu_custom_call.1} parent=11 // pred_check_branch
          %467 = sbr.rel (%p465) target = $region52
        $region51: #{tpu_custom_call.1} parent=11 // pred_region
          _
        $region52: #{tpu_custom_call.1} parent=11 // pred_fallthru
          _
        // Predicated region
        $region53: #{tpu_custom_call.1} parent=11 // pred_check
          %p468 = pneg %p287
        $region54: #{tpu_custom_call.1} parent=11 // pred_check_branch
          %470 = sbr.rel (%p468) target = $region56
        $region55: #{tpu_custom_call.1} parent=11 // pred_region
          _
        $region56: #{tpu_custom_call.1} parent=11 // pred_fallthru
          _
        // Predicated region
        $region57: #{tpu_custom_call.1} parent=11 // pred_check
          %p471 = pneg %p308
        $region58: #{tpu_custom_call.1} parent=11 // pred_check_branch
          %473 = sbr.rel (%p471) target = $region60
        $region59: #{tpu_custom_call.1} parent=11 // pred_region
          _
        $region60: #{tpu_custom_call.1} parent=11 // pred_fallthru
          _
        // Predicated region
        $region61: #{tpu_custom_call.1} parent=11 // pred_check
          %p474 = pneg %p329
        $region62: #{tpu_custom_call.1} parent=11 // pred_check_branch
          %476 = sbr.rel (%p474) target = $region64
        $region63: #{tpu_custom_call.1} parent=11 // pred_region
          _
        $region64: #{tpu_custom_call.1} parent=11 // pred_fallthru
          _
        // Predicated region
        $region65: #{tpu_custom_call.1} parent=11 // pred_check
          %p477 = pneg %p350
        $region66: #{tpu_custom_call.1} parent=11 // pred_check_branch
          %479 = sbr.rel (%p477) target = $region68
        $region67: #{tpu_custom_call.1} parent=11 // pred_region
          _
        $region68: #{tpu_custom_call.1} parent=11 // pred_fallthru
          _
        // Predicated region
        $region69: #{tpu_custom_call.1} parent=11 // pred_check
          %p480 = pneg %p371
        $region70: #{tpu_custom_call.1} parent=11 // pred_check_branch
          %482 = sbr.rel (%p480) target = $region72
        $region71: #{tpu_custom_call.1} parent=11 // pred_region
          _
        $region72: #{tpu_custom_call.1} parent=11 // pred_fallthru
          _
      $region12: #{tpu_custom_call.1} parent=5 // pred_fallthru
        _
      %p483 = scmp.lt.s32.totalorder %s30, 2
      // Predicated region
      $region73: #{tpu_custom_call.1} parent=5 // pred_check
        %p484 = pneg %p483
      $region74: #{tpu_custom_call.1} parent=5 // pred_check_branch
        %486 = sbr.rel (%p484) target = $region76
      $region75: #{tpu_custom_call.1} parent=5 // pred_region
        // Predicated region
        $region77: #{tpu_custom_call.1} parent=75 // pred_check
          %p487 = pneg %p50
        $region78: #{tpu_custom_call.1} parent=75 // pred_check_branch
          %489 = sbr.rel (%p487) target = $region80
        $region79: #{tpu_custom_call.1} parent=75 // pred_region
          %p490 = scmp.lt.s32.totalorder %s30, 1
          %s491 = scalar_select %p490, %s30, 1
          %s492 = smul.addr %s491, 8
          %s493 = scalar_lea.vmem %s0, %s492
        $region80: #{tpu_custom_call.1} parent=75 // pred_fallthru
          _
      $region76: #{tpu_custom_call.1} parent=5 // pred_fallthru
        _
      %p494 = scmp.le.s32.totalorder 1, %s30
      %p495 = scmp.lt.s32.totalorder %s30, 3
      %p496 = pnand %p494, %p495
      %p497 = pneg %p496
      // Predicated region
      $region81: #{tpu_custom_call.1} parent=5 // pred_check
        _
      $region82: #{tpu_custom_call.1} parent=5 // pred_check_branch
        %499 = sbr.rel (%p496) target = $region84
      $region83: #{tpu_custom_call.1} parent=5 // pred_region
        %s500 = ssub.s32 %s30, 1
        %p501 = scmp.lt.s32.totalorder %s35, 1
        %s502 = scalar_select %p501, %s35, 1
        %s503 = smul.addr %s502, 8
        %s504 = scalar_lea.vmem %s0, %s503
        %p505 = pneg %p56
        %p506 = pneg %p53
        %p507 = pneg %p77
        %p508 = pneg %p74
        %p509 = pneg %p98
        %p510 = pneg %p95
        %p511 = pneg %p119
        %p512 = pneg %p116
        %p513 = pneg %p140
        %p514 = pneg %p137
        %p515 = pneg %p161
        %p516 = pneg %p158
        %p517 = pneg %p182
        %p518 = pneg %p179
        %p519 = pneg %p203
        %p520 = pneg %p200
        %p521 = pneg %p224
        %p522 = pneg %p221
        %p523 = pneg %p245
        %p524 = pneg %p242
        %p525 = pneg %p266
        %p526 = pneg %p263
        %p527 = pneg %p287
        %p528 = pneg %p284
        %p529 = pneg %p308
        %p530 = pneg %p305
        %p531 = pneg %p329
        %p532 = pneg %p326
        %p533 = pneg %p350
        %p534 = pneg %p347
        %p535 = pneg %p371
        %p536 = pneg %p368
        %p537 = pneg %p397
        %p538 = pneg %p394
        %s539 = sand.u32 %s384, 1
        %s540 = scalar_lea.sflag [#allocation3], %s539
        %s541 = sand.u32 %s384, 1
        %s542 = smul.addr %s541, 8
        %s543 = scalar_lea.vmem [#allocation2], %s542
        %p544 = pneg %p423
        %p545 = pneg %p420
        %s546 = sand.u32 %s410, 1
        %s547 = scalar_lea.sflag [#allocation5], %s546
        %s548 = sand.u32 %s410, 1
        %s549 = smul.addr %s548, 32
        %s550 = scalar_lea.vmem [#allocation4], %s549
        %p551 = scmp.lt.s32.totalorder %s35, 1
        %s552 = scalar_select %p551, %s35, 1
        %s553 = smul.addr %s552, 8
        %s554 = scalar_lea.vmem %s0, %s553
        %s555 = smul.u32 4, %s35
        %v556 = vld [vmem:[%s554] sm:$0xff]
        %v557 = vld [vmem:[%s2] sm:$0xff]
        %v558 = vld [vmem:[%s2 + $0x8] sm:$0xff]
        %v559 = vld [vmem:[%s2 + $0x10] sm:$0xff]
        %v560 = vld [vmem:[%s2 + $0x18] sm:$0xff]
        %s561 = scalar_lea.vmem %s2, 32
        %v562 = vld [vmem:[%s561] sm:$0xff]
        %v563 = vld [vmem:[%s561 + $0x8] sm:$0xff]
        %v564 = vld [vmem:[%s561 + $0x10] sm:$0xff]
        %v565 = vld [vmem:[%s561 + $0x18] sm:$0xff]
        %s566 = scalar_lea.vmem %s2, 64
        %v567 = vld [vmem:[%s566] sm:$0xff]
        %v568 = vld [vmem:[%s566 + $0x8] sm:$0xff]
        %v569 = vld [vmem:[%s566 + $0x10] sm:$0xff]
        %v570 = vld [vmem:[%s566 + $0x18] sm:$0xff]
        %v571 = vld [vmem:[%s3] sm:$0xff]
        %v572 = vld [vmem:[%s3 + $0x8] sm:$0xff]
        %v573 = vld [vmem:[%s3 + $0x10] sm:$0xff]
        %v574 = vld [vmem:[%s3 + $0x18] sm:$0xff]
        %vm575 = vcmask 64512
        %v577 = vsel %vm575, %v571, 0
        %v580 = vsel %vm575, %v572, 0
        %v583 = vsel %vm575, %v573, 0
        %v586 = vsel %vm575, %v574, 0
        %588 = vmatprep.subr.mxu0 0.0
        %589 = vmatpush1.msra.mxu0 %v556
        %590 = vmatprep.subr.mxu0 0.0
        %591 = vmatpush1.msra.mxu0 0.0
        %592 = vmatprep.subr.mxu0 0.0
        %593 = vmatpush1.msra.mxu0 0.0
        %594 = vmatprep.subr.mxu0 0.0
        %595 = vmatpush1.msra.mxu0 0.0
        %596 = vmatprep.subr.mxu0 0.0
        %597 = vmatpush1.msra.mxu0 0.0
        %598 = vmatprep.subr.mxu0 0.0
        %599 = vmatpush1.msra.mxu0 0.0
        %600 = vmatprep.subr.mxu0 0.0
        %601 = vmatpush1.msra.mxu0 0.0
        %602 = vmatprep.subr.mxu0 0.0
        %603 = vmatpush1.msra.mxu0 0.0
        %604 = vmatprep.subr.mxu0 0.0
        %605 = vmatpush1.msra.mxu0 0.0
        %606 = vmatprep.subr.mxu0 0.0
        %607 = vmatpush1.msra.mxu0 0.0
        %608 = vmatprep.subr.mxu0 0.0
        %609 = vmatpush1.msra.mxu0 0.0
        %610 = vmatprep.subr.mxu0 0.0
        %611 = vmatpush1.msra.mxu0 0.0
        %612 = vmatprep.subr.mxu0 0.0
        %613 = vmatpush1.msra.mxu0 0.0
        %614 = vmatprep.subr.mxu0 0.0
        %615 = vmatpush1.msra.mxu0 0.0
        %616 = vmatprep.subr.mxu0 0.0
        %617 = vmatpush1.msra.mxu0 0.0
        %618 = vmatprep.subr.mxu0 0.0
        %619 = vmatpush1.msra.mxu0 0.0
        %620 = vmatprep.subr.mxu0 0.0
        %621 = vmatpush1.msra.mxu0 0.0
        %622 = vmatprep.subr.mxu0 0.0
        %623 = vmatpush1.msra.mxu0 0.0
        %624 = vmatprep.subr.mxu0 0.0
        %625 = vmatpush1.msra.mxu0 0.0
        %626 = vmatprep.subr.mxu0 0.0
        %627 = vmatpush1.msra.mxu0 0.0
        %628 = vmatprep.subr.mxu0 0.0
        %629 = vmatpush1.msra.mxu0 0.0
        %630 = vmatprep.subr.mxu0 0.0
        %631 = vmatpush1.msra.mxu0 0.0
        %632 = vmatprep.subr.mxu0 0.0
        %633 = vmatpush1.msra.mxu0 0.0
        %634 = vmatprep.subr.mxu0 0.0
        %635 = vmatpush1.msra.mxu0 0.0
        %636 = vmatprep.subr.mxu0 0.0
        %637 = vmatpush1.msra.mxu0 0.0
        %638 = vmatprep.subr.mxu0 0.0
        %639 = vmatpush1.msra.mxu0 0.0
        %640 = vmatprep.subr.mxu0 0.0
        %641 = vmatpush1.msra.mxu0 0.0
        %642 = vmatprep.subr.mxu0 0.0
        %643 = vmatpush1.msra.mxu0 0.0
        %644 = vmatprep.subr.mxu0 0.0
        %645 = vmatpush1.msra.mxu0 0.0
        %646 = vmatprep.subr.mxu0 0.0
        %647 = vmatpush1.msra.mxu0 0.0
        %648 = vmatprep.subr.mxu0 0.0
        %649 = vmatpush1.msra.mxu0 0.0
        %650 = vmatprep.subr.mxu0 0.0
        %651 = vmatpush1.msra.mxu0 0.0
        %652 = vmatprep.mubr.f32.mxu0 0.0
        %653 = vmatmul.mubr.f32.gmra.mrb[0].mxu0 %v577
        %v654 = vpop.f32.mrb[0].mxu0
        %v655 = vadd.f32 0.0, %v654
        %v656 = vpop.f32.mrb[0].mxu0
        %657 = vmatprep.mubr.f32.mxu0 0.0
        %658 = vmatmul.mubr.f32.gmra.mrb[0].mxu0 %v580
        %v659 = vpop.f32.mrb[0].mxu0
        %v660 = vadd.f32 0.0, %v659
        %v661 = vpop.f32.mrb[0].mxu0
        %662 = vmatprep.mubr.f32.mxu0 0.0
        %663 = vmatmul.mubr.f32.gmra.mrb[0].mxu0 %v583
        %v664 = vpop.f32.mrb[0].mxu0
        %v665 = vadd.f32 0.0, %v664
        %v666 = vpop.f32.mrb[0].mxu0
        %667 = vmatprep.mubr.f32.mxu0 0.0
        %668 = vmatmul.mubr.f32.gmra.mrb[0].mxu0 %v586
        %v669 = vpop.f32.mrb[0].mxu0
        %v670 = vadd.f32 0.0, %v669
        %v671 = vpop.f32.mrb[0].mxu0
        %672 = vdwg.mxu0
        %v673 = vld [vmem:[%s1] sm:$0xff]
        %v674 = vld [vmem:[%s1 + $0x8] sm:$0xff]
        %v675 = vld [vmem:[%s1 + $0x10] sm:$0xff]
        %v676 = vld [vmem:[%s1 + $0x18] sm:$0xff]
        %vm677 = vcmask 261120
        %v679 = vsel %vm677, %v655, 0
        %v682 = vsel %vm677, %v660, 0
        %v685 = vsel %vm677, %v665, 0
        %v688 = vsel %vm677, %v670, 0
        %690 = vmatprep.subr.mxu0 0.0
        %691 = vmatpush1.msra.mxu0 %v673
        %692 = vmatprep.subr.mxu0 0.0
        %693 = vmatpush1.msra.mxu0 %v674
        %694 = vmatprep.subr.mxu0 0.0
        %695 = vmatpush1.msra.mxu0 %v675
        %696 = vmatprep.subr.mxu0 0.0
        %697 = vmatpush1.msra.mxu0 %v676
        %698 = vmatprep.subr.mxu0 0.0
        %699 = vmatpush1.msra.mxu0 0.0
        %700 = vmatprep.subr.mxu0 0.0
        %701 = vmatpush1.msra.mxu0 0.0
        %702 = vmatprep.subr.mxu0 0.0
        %703 = vmatpush1.msra.mxu0 0.0
        %704 = vmatprep.subr.mxu0 0.0
        %705 = vmatpush1.msra.mxu0 0.0
        %706 = vmatprep.subr.mxu0 0.0
        %707 = vmatpush1.msra.mxu0 0.0
        %708 = vmatprep.subr.mxu0 0.0
        %709 = vmatpush1.msra.mxu0 0.0
        %710 = vmatprep.subr.mxu0 0.0
        %711 = vmatpush1.msra.mxu0 0.0
        %712 = vmatprep.subr.mxu0 0.0
        %713 = vmatpush1.msra.mxu0 0.0
        %714 = vmatprep.subr.mxu0 0.0
        %715 = vmatpush1.msra.mxu0 0.0
        %716 = vmatprep.subr.mxu0 0.0
        %717 = vmatpush1.msra.mxu0 0.0
        %718 = vmatprep.subr.mxu0 0.0
        %719 = vmatpush1.msra.mxu0 0.0
        %720 = vmatprep.subr.mxu0 0.0
        %721 = vmatpush1.msra.mxu0 0.0
        %722 = vmatprep.subr.mxu0 0.0
        %723 = vmatpush1.msra.mxu0 0.0
        %724 = vmatprep.subr.mxu0 0.0
        %725 = vmatpush1.msra.mxu0 0.0
        %726 = vmatprep.subr.mxu0 0.0
        %727 = vmatpush1.msra.mxu0 0.0
        %728 = vmatprep.subr.mxu0 0.0
        %729 = vmatpush1.msra.mxu0 0.0
        %730 = vmatprep.subr.mxu0 0.0
        %731 = vmatpush1.msra.mxu0 0.0
        %732 = vmatprep.subr.mxu0 0.0
        %733 = vmatpush1.msra.mxu0 0.0
        %734 = vmatprep.subr.mxu0 0.0
        %735 = vmatpush1.msra.mxu0 0.0
        %736 = vmatprep.subr.mxu0 0.0
        %737 = vmatpush1.msra.mxu0 0.0
        %738 = vmatprep.subr.mxu0 0.0
        %739 = vmatpush1.msra.mxu0 0.0
        %740 = vmatprep.subr.mxu0 0.0
        %741 = vmatpush1.msra.mxu0 0.0
        %742 = vmatprep.subr.mxu0 0.0
        %743 = vmatpush1.msra.mxu0 0.0
        %744 = vmatprep.subr.mxu0 0.0
        %745 = vmatpush1.msra.mxu0 0.0
        %746 = vmatprep.subr.mxu0 0.0
        %747 = vmatpush1.msra.mxu0 0.0
        %748 = vmatprep.subr.mxu0 0.0
        %749 = vmatpush1.msra.mxu0 0.0
        %750 = vmatprep.subr.mxu0 0.0
        %751 = vmatpush1.msra.mxu0 0.0
        %752 = vmatprep.subr.mxu0 0.0
        %753 = vmatpush1.msra.mxu0 0.0
        %754 = vmatprep.mubr.f32.mxu0 0.0
        %755 = vmatmul.mubr.f32.gmra.mrb[0].mxu0 %v679
        %v756 = vpop.f32.mrb[0].mxu0
        %v757 = vadd.f32 0.0, %v756
        %v758 = vpop.f32.mrb[0].mxu0
        %759 = vmatprep.mubr.f32.mxu0 0.0
        %760 = vmatmul.mubr.f32.gmra.mrb[0].mxu0 %v682
        %v761 = vpop.f32.mrb[0].mxu0
        %v762 = vadd.f32 0.0, %v761
        %v763 = vpop.f32.mrb[0].mxu0
        %764 = vmatprep.mubr.f32.mxu0 0.0
        %765 = vmatmul.mubr.f32.gmra.mrb[0].mxu0 %v685
        %v766 = vpop.f32.mrb[0].mxu0
        %v767 = vadd.f32 0.0, %v766
        %v768 = vpop.f32.mrb[0].mxu0
        %769 = vmatprep.mubr.f32.mxu0 0.0
        %770 = vmatmul.mubr.f32.gmra.mrb[0].mxu0 %v688
        %v771 = vpop.f32.mrb[0].mxu0
        %v772 = vadd.f32 0.0, %v771
        %v773 = vpop.f32.mrb[0].mxu0
        %774 = vdwg.mxu0
        %v775 = vadd.f32 %v557, %v757
        %v776 = vadd.f32 %v558, %v762
        %v777 = vadd.f32 %v559, %v767
        %v778 = vadd.f32 %v560, %v772
        %s779 = scalar_lea.vmem %s1, 128
        %v780 = vld [vmem:[%s779] sm:$0xff]
        %v781 = vld [vmem:[%s779 + $0x8] sm:$0xff]
        %v782 = vld [vmem:[%s779 + $0x10] sm:$0xff]
        %v783 = vld [vmem:[%s779 + $0x18] sm:$0xff]
        %784 = vmatprep.subr.mxu0 0.0
        %785 = vmatpush1.msra.mxu0 %v780
        %786 = vmatprep.subr.mxu0 0.0
        %787 = vmatpush1.msra.mxu0 %v781
        %788 = vmatprep.subr.mxu0 0.0
        %789 = vmatpush1.msra.mxu0 %v782
        %790 = vmatprep.subr.mxu0 0.0
        %791 = vmatpush1.msra.mxu0 %v783
        %792 = vmatprep.subr.mxu0 0.0
        %793 = vmatpush1.msra.mxu0 0.0
        %794 = vmatprep.subr.mxu0 0.0
        %795 = vmatpush1.msra.mxu0 0.0
        %796 = vmatprep.subr.mxu0 0.0
        %797 = vmatpush1.msra.mxu0 0.0
        %798 = vmatprep.subr.mxu0 0.0
        %799 = vmatpush1.msra.mxu0 0.0
        %800 = vmatprep.subr.mxu0 0.0
        %801 = vmatpush1.msra.mxu0 0.0
        %802 = vmatprep.subr.mxu0 0.0
        %803 = vmatpush1.msra.mxu0 0.0
        %804 = vmatprep.subr.mxu0 0.0
        %805 = vmatpush1.msra.mxu0 0.0
        %806 = vmatprep.subr.mxu0 0.0
        %807 = vmatpush1.msra.mxu0 0.0
        %808 = vmatprep.subr.mxu0 0.0
        %809 = vmatpush1.msra.mxu0 0.0
        %810 = vmatprep.subr.mxu0 0.0
        %811 = vmatpush1.msra.mxu0 0.0
        %812 = vmatprep.subr.mxu0 0.0
        %813 = vmatpush1.msra.mxu0 0.0
        %814 = vmatprep.subr.mxu0 0.0
        %815 = vmatpush1.msra.mxu0 0.0
        %816 = vmatprep.subr.mxu0 0.0
        %817 = vmatpush1.msra.mxu0 0.0
        %818 = vmatprep.subr.mxu0 0.0
        %819 = vmatpush1.msra.mxu0 0.0
        %820 = vmatprep.subr.mxu0 0.0
        %821 = vmatpush1.msra.mxu0 0.0
        %822 = vmatprep.subr.mxu0 0.0
        %823 = vmatpush1.msra.mxu0 0.0
        %824 = vmatprep.subr.mxu0 0.0
        %825 = vmatpush1.msra.mxu0 0.0
        %826 = vmatprep.subr.mxu0 0.0
        %827 = vmatpush1.msra.mxu0 0.0
        %828 = vmatprep.subr.mxu0 0.0
        %829 = vmatpush1.msra.mxu0 0.0
        %830 = vmatprep.subr.mxu0 0.0
        %831 = vmatpush1.msra.mxu0 0.0
        %832 = vmatprep.subr.mxu0 0.0
        %833 = vmatpush1.msra.mxu0 0.0
        %834 = vmatprep.subr.mxu0 0.0
        %835 = vmatpush1.msra.mxu0 0.0
        %836 = vmatprep.subr.mxu0 0.0
        %837 = vmatpush1.msra.mxu0 0.0
        %838 = vmatprep.subr.mxu0 0.0
        %839 = vmatpush1.msra.mxu0 0.0
        %840 = vmatprep.subr.mxu0 0.0
        %841 = vmatpush1.msra.mxu0 0.0
        %842 = vmatprep.subr.mxu0 0.0
        %843 = vmatpush1.msra.mxu0 0.0
        %844 = vmatprep.subr.mxu0 0.0
        %845 = vmatpush1.msra.mxu0 0.0
        %846 = vmatprep.subr.mxu0 0.0
        %847 = vmatpush1.msra.mxu0 0.0
        %848 = vmatprep.mubr.f32.mxu0 0.0
        %849 = vmatmul.mubr.f32.gmra.mrb[0].mxu0 %v679
        %v850 = vpop.f32.mrb[0].mxu0
        %v851 = vadd.f32 0.0, %v850
        %v852 = vpop.f32.mrb[0].mxu0
        %853 = vmatprep.mubr.f32.mxu0 0.0
        %854 = vmatmul.mubr.f32.gmra.mrb[0].mxu0 %v682
        %v855 = vpop.f32.mrb[0].mxu0
        %v856 = vadd.f32 0.0, %v855
        %v857 = vpop.f32.mrb[0].mxu0
        %858 = vmatprep.mubr.f32.mxu0 0.0
        %859 = vmatmul.mubr.f32.gmra.mrb[0].mxu0 %v685
        %v860 = vpop.f32.mrb[0].mxu0
        %v861 = vadd.f32 0.0, %v860
        %v862 = vpop.f32.mrb[0].mxu0
        %863 = vmatprep.mubr.f32.mxu0 0.0
        %864 = vmatmul.mubr.f32.gmra.mrb[0].mxu0 %v688
        %v865 = vpop.f32.mrb[0].mxu0
        %v866 = vadd.f32 0.0, %v865
        %v867 = vpop.f32.mrb[0].mxu0
        %868 = vdwg.mxu0
        %v869 = vadd.f32 %v562, %v851
        %v870 = vadd.f32 %v563, %v856
        %v871 = vadd.f32 %v564, %v861
        %v872 = vadd.f32 %v565, %v866
        %s873 = scalar_lea.vmem %s1, 256
        %v874 = vld [vmem:[%s873] sm:$0xff]
        %v875 = vld [vmem:[%s873 + $0x8] sm:$0xff]
        %v876 = vld [vmem:[%s873 + $0x10] sm:$0xff]
        %v877 = vld [vmem:[%s873 + $0x18] sm:$0xff]
        %878 = vmatprep.subr.mxu0 0.0
        %879 = vmatpush1.msra.mxu0 %v874
        %880 = vmatprep.subr.mxu0 0.0
        %881 = vmatpush1.msra.mxu0 %v875
        %882 = vmatprep.subr.mxu0 0.0
        %883 = vmatpush1.msra.mxu0 %v876
        %884 = vmatprep.subr.mxu0 0.0
        %885 = vmatpush1.msra.mxu0 %v877
        %886 = vmatprep.subr.mxu0 0.0
        %887 = vmatpush1.msra.mxu0 0.0
        %888 = vmatprep.subr.mxu0 0.0
        %889 = vmatpush1.msra.mxu0 0.0
        %890 = vmatprep.subr.mxu0 0.0
        %891 = vmatpush1.msra.mxu0 0.0
        %892 = vmatprep.subr.mxu0 0.0
        %893 = vmatpush1.msra.mxu0 0.0
        %894 = vmatprep.subr.mxu0 0.0
        %895 = vmatpush1.msra.mxu0 0.0
        %896 = vmatprep.subr.mxu0 0.0
        %897 = vmatpush1.msra.mxu0 0.0
        %898 = vmatprep.subr.mxu0 0.0
        %899 = vmatpush1.msra.mxu0 0.0
        %900 = vmatprep.subr.mxu0 0.0
        %901 = vmatpush1.msra.mxu0 0.0
        %902 = vmatprep.subr.mxu0 0.0
        %903 = vmatpush1.msra.mxu0 0.0
        %904 = vmatprep.subr.mxu0 0.0
        %905 = vmatpush1.msra.mxu0 0.0
        %906 = vmatprep.subr.mxu0 0.0
        %907 = vmatpush1.msra.mxu0 0.0
        %908 = vmatprep.subr.mxu0 0.0
        %909 = vmatpush1.msra.mxu0 0.0
        %910 = vmatprep.subr.mxu0 0.0
        %911 = vmatpush1.msra.mxu0 0.0
        %912 = vmatprep.subr.mxu0 0.0
        %913 = vmatpush1.msra.mxu0 0.0
        %914 = vmatprep.subr.mxu0 0.0
        %915 = vmatpush1.msra.mxu0 0.0
        %916 = vmatprep.subr.mxu0 0.0
        %917 = vmatpush1.msra.mxu0 0.0
        %918 = vmatprep.subr.mxu0 0.0
        %919 = vmatpush1.msra.mxu0 0.0
        %920 = vmatprep.subr.mxu0 0.0
        %921 = vmatpush1.msra.mxu0 0.0
        %922 = vmatprep.subr.mxu0 0.0
        %923 = vmatpush1.msra.mxu0 0.0
        %924 = vmatprep.subr.mxu0 0.0
        %925 = vmatpush1.msra.mxu0 0.0
        %926 = vmatprep.subr.mxu0 0.0
        %927 = vmatpush1.msra.mxu0 0.0
        %928 = vmatprep.subr.mxu0 0.0
        %929 = vmatpush1.msra.mxu0 0.0
        %930 = vmatprep.subr.mxu0 0.0
        %931 = vmatpush1.msra.mxu0 0.0
        %932 = vmatprep.subr.mxu0 0.0
        %933 = vmatpush1.msra.mxu0 0.0
        %934 = vmatprep.subr.mxu0 0.0
        %935 = vmatpush1.msra.mxu0 0.0
        %936 = vmatprep.subr.mxu0 0.0
        %937 = vmatpush1.msra.mxu0 0.0
        %938 = vmatprep.subr.mxu0 0.0
        %939 = vmatpush1.msra.mxu0 0.0
        %940 = vmatprep.subr.mxu0 0.0
        %941 = vmatpush1.msra.mxu0 0.0
        %942 = vmatprep.mubr.f32.mxu0 0.0
        %943 = vmatmul.mubr.f32.gmra.mrb[0].mxu0 %v679
        %v944 = vpop.f32.mrb[0].mxu0
        %v945 = vadd.f32 0.0, %v944
        %v946 = vpop.f32.mrb[0].mxu0
        %947 = vmatprep.mubr.f32.mxu0 0.0
        %948 = vmatmul.mubr.f32.gmra.mrb[0].mxu0 %v682
        %v949 = vpop.f32.mrb[0].mxu0
        %v950 = vadd.f32 0.0, %v949
        %v951 = vpop.f32.mrb[0].mxu0
        %952 = vmatprep.mubr.f32.mxu0 0.0
        %953 = vmatmul.mubr.f32.gmra.mrb[0].mxu0 %v685
        %v954 = vpop.f32.mrb[0].mxu0
        %v955 = vadd.f32 0.0, %v954
        %v956 = vpop.f32.mrb[0].mxu0
        %957 = vmatprep.mubr.f32.mxu0 0.0
        %958 = vmatmul.mubr.f32.gmra.mrb[0].mxu0 %v688
        %v959 = vpop.f32.mrb[0].mxu0
        %v960 = vadd.f32 0.0, %v959
        %v961 = vpop.f32.mrb[0].mxu0
        %962 = vdwg.mxu0
        %v963 = vadd.f32 %v567, %v945
        %v964 = vadd.f32 %v568, %v950
        %v965 = vadd.f32 %v569, %v955
        %v966 = vadd.f32 %v570, %v960
        %s967 = scalar_lea.vmem %s3, 32
        %v968 = vld [vmem:[%s967] sm:$0xff]
        %v969 = vld [vmem:[%s967 + $0x8] sm:$0xff]
        %v970 = vld [vmem:[%s967 + $0x10] sm:$0xff]
        %v971 = vld [vmem:[%s967 + $0x18] sm:$0xff]
        %v973 = vsel %vm575, %v968, 0
        %v976 = vsel %vm575, %v969, 0
        %v979 = vsel %vm575, %v970, 0
        %v982 = vsel %vm575, %v971, 0
        %984 = vmatprep.subr.mxu0 0.0
        %985 = vmatpush1.msra.mxu0 %v556
        %986 = vmatprep.subr.mxu0 0.0
        %987 = vmatpush1.msra.mxu0 0.0
        %988 = vmatprep.subr.mxu0 0.0
        %989 = vmatpush1.msra.mxu0 0.0
        %990 = vmatprep.subr.mxu0 0.0
        %991 = vmatpush1.msra.mxu0 0.0
        %992 = vmatprep.subr.mxu0 0.0
        %993 = vmatpush1.msra.mxu0 0.0
        %994 = vmatprep.subr.mxu0 0.0
        %995 = vmatpush1.msra.mxu0 0.0
        %996 = vmatprep.subr.mxu0 0.0
        %997 = vmatpush1.msra.mxu0 0.0
        %998 = vmatprep.subr.mxu0 0.0
        %999 = vmatpush1.msra.mxu0 0.0
        %1000 = vmatprep.subr.mxu0 0.0
        %1001 = vmatpush1.msra.mxu0 0.0
        %1002 = vmatprep.subr.mxu0 0.0
        %1003 = vmatpush1.msra.mxu0 0.0
        %1004 = vmatprep.subr.mxu0 0.0
        %1005 = vmatpush1.msra.mxu0 0.0
        %1006 = vmatprep.subr.mxu0 0.0
        %1007 = vmatpush1.msra.mxu0 0.0
        %1008 = vmatprep.subr.mxu0 0.0
        %1009 = vmatpush1.msra.mxu0 0.0
        %1010 = vmatprep.subr.mxu0 0.0
        %1011 = vmatpush1.msra.mxu0 0.0
        %1012 = vmatprep.subr.mxu0 0.0
        %1013 = vmatpush1.msra.mxu0 0.0
        %1014 = vmatprep.subr.mxu0 0.0
        %1015 = vmatpush1.msra.mxu0 0.0
        %1016 = vmatprep.subr.mxu0 0.0
        %1017 = vmatpush1.msra.mxu0 0.0
        %1018 = vmatprep.subr.mxu0 0.0
        %1019 = vmatpush1.msra.mxu0 0.0
        %1020 = vmatprep.subr.mxu0 0.0
        %1021 = vmatpush1.msra.mxu0 0.0
        %1022 = vmatprep.subr.mxu0 0.0
        %1023 = vmatpush1.msra.mxu0 0.0
        %1024 = vmatprep.subr.mxu0 0.0
        %1025 = vmatpush1.msra.mxu0 0.0
        %1026 = vmatprep.subr.mxu0 0.0
        %1027 = vmatpush1.msra.mxu0 0.0
        %1028 = vmatprep.subr.mxu0 0.0
        %1029 = vmatpush1.msra.mxu0 0.0
        %1030 = vmatprep.subr.mxu0 0.0
        %1031 = vmatpush1.msra.mxu0 0.0
        %1032 = vmatprep.subr.mxu0 0.0
        %1033 = vmatpush1.msra.mxu0 0.0
        %1034 = vmatprep.subr.mxu0 0.0
        %1035 = vmatpush1.msra.mxu0 0.0
        %1036 = vmatprep.subr.mxu0 0.0
        %1037 = vmatpush1.msra.mxu0 0.0
        %1038 = vmatprep.subr.mxu0 0.0
        %1039 = vmatpush1.msra.mxu0 0.0
        %1040 = vmatprep.subr.mxu0 0.0
        %1041 = vmatpush1.msra.mxu0 0.0
        %1042 = vmatprep.subr.mxu0 0.0
        %1043 = vmatpush1.msra.mxu0 0.0
        %1044 = vmatprep.subr.mxu0 0.0
        %1045 = vmatpush1.msra.mxu0 0.0
        %1046 = vmatprep.subr.mxu0 0.0
        %1047 = vmatpush1.msra.mxu0 0.0
        %1048 = vmatprep.mubr.f32.mxu0 0.0
        %1049 = vmatmul.mubr.f32.gmra.mrb[0].mxu0 %v973
        %v1050 = vpop.f32.mrb[0].mxu0
        %v1051 = vadd.f32 0.0, %v1050
        %v1052 = vpop.f32.mrb[0].mxu0
        %1053 = vmatprep.mubr.f32.mxu0 0.0
        %1054 = vmatmul.mubr.f32.gmra.mrb[0].mxu0 %v976
        %v1055 = vpop.f32.mrb[0].mxu0
        %v1056 = vadd.f32 0.0, %v1055
        %v1057 = vpop.f32.mrb[0].mxu0
        %1058 = vmatprep.mubr.f32.mxu0 0.0
        %1059 = vmatmul.mubr.f32.gmra.mrb[0].mxu0 %v979
        %v1060 = vpop.f32.mrb[0].mxu0
        %v1061 = vadd.f32 0.0, %v1060
        %v1062 = vpop.f32.mrb[0].mxu0
        %1063 = vmatprep.mubr.f32.mxu0 0.0
        %1064 = vmatmul.mubr.f32.gmra.mrb[0].mxu0 %v982
        %v1065 = vpop.f32.mrb[0].mxu0
        %v1066 = vadd.f32 0.0, %v1065
        %v1067 = vpop.f32.mrb[0].mxu0
        %1068 = vdwg.mxu0
        %s1069 = scalar_lea.vmem %s1, 32
        %v1070 = vld [vmem:[%s1069] sm:$0xff]
        %v1071 = vld [vmem:[%s1069 + $0x8] sm:$0xff]
        %v1072 = vld [vmem:[%s1069 + $0x10] sm:$0xff]
        %v1073 = vld [vmem:[%s1069 + $0x18] sm:$0xff]
        %v1075 = vsel %vm677, %v1051, 0
        %v1078 = vsel %vm677, %v1056, 0
        %v1081 = vsel %vm677, %v1061, 0
        %v1084 = vsel %vm677, %v1066, 0
        %1086 = vmatprep.subr.mxu0 0.0
        %1087 = vmatpush1.msra.mxu0 %v1070
        %1088 = vmatprep.subr.mxu0 0.0
        %1089 = vmatpush1.msra.mxu0 %v1071
        %1090 = vmatprep.subr.mxu0 0.0
        %1091 = vmatpush1.msra.mxu0 %v1072
        %1092 = vmatprep.subr.mxu0 0.0
        %1093 = vmatpush1.msra.mxu0 %v1073
        %1094 = vmatprep.subr.mxu0 0.0
        %1095 = vmatpush1.msra.mxu0 0.0
        %1096 = vmatprep.subr.mxu0 0.0
        %1097 = vmatpush1.msra.mxu0 0.0
        %1098 = vmatprep.subr.mxu0 0.0
        %1099 = vmatpush1.msra.mxu0 0.0
        %1100 = vmatprep.subr.mxu0 0.0
        %1101 = vmatpush1.msra.mxu0 0.0
        %1102 = vmatprep.subr.mxu0 0.0
        %1103 = vmatpush1.msra.mxu0 0.0
        %1104 = vmatprep.subr.mxu0 0.0
        %1105 = vmatpush1.msra.mxu0 0.0
        %1106 = vmatprep.subr.mxu0 0.0
        %1107 = vmatpush1.msra.mxu0 0.0
        %1108 = vmatprep.subr.mxu0 0.0
        %1109 = vmatpush1.msra.mxu0 0.0
        %1110 = vmatprep.subr.mxu0 0.0
        %1111 = vmatpush1.msra.mxu0 0.0
        %1112 = vmatprep.subr.mxu0 0.0
        %1113 = vmatpush1.msra.mxu0 0.0
        %1114 = vmatprep.subr.mxu0 0.0
        %1115 = vmatpush1.msra.mxu0 0.0
        %1116 = vmatprep.subr.mxu0 0.0
        %1117 = vmatpush1.msra.mxu0 0.0
        %1118 = vmatprep.subr.mxu0 0.0
        %1119 = vmatpush1.msra.mxu0 0.0
        %1120 = vmatprep.subr.mxu0 0.0
        %1121 = vmatpush1.msra.mxu0 0.0
        %1122 = vmatprep.subr.mxu0 0.0
        %1123 = vmatpush1.msra.mxu0 0.0
        %1124 = vmatprep.subr.mxu0 0.0
        %1125 = vmatpush1.msra.mxu0 0.0
        %1126 = vmatprep.subr.mxu0 0.0
        %1127 = vmatpush1.msra.mxu0 0.0
        %1128 = vmatprep.subr.mxu0 0.0
        %1129 = vmatpush1.msra.mxu0 0.0
        %1130 = vmatprep.subr.mxu0 0.0
        %1131 = vmatpush1.msra.mxu0 0.0
        %1132 = vmatprep.subr.mxu0 0.0
        %1133 = vmatpush1.msra.mxu0 0.0
        %1134 = vmatprep.subr.mxu0 0.0
        %1135 = vmatpush1.msra.mxu0 0.0
        %1136 = vmatprep.subr.mxu0 0.0
        %1137 = vmatpush1.msra.mxu0 0.0
        %1138 = vmatprep.subr.mxu0 0.0
        %1139 = vmatpush1.msra.mxu0 0.0
        %1140 = vmatprep.subr.mxu0 0.0
        %1141 = vmatpush1.msra.mxu0 0.0
        %1142 = vmatprep.subr.mxu0 0.0
        %1143 = vmatpush1.msra.mxu0 0.0
        %1144 = vmatprep.subr.mxu0 0.0
        %1145 = vmatpush1.msra.mxu0 0.0
        %1146 = vmatprep.subr.mxu0 0.0
        %1147 = vmatpush1.msra.mxu0 0.0
        %1148 = vmatprep.subr.mxu0 0.0
        %1149 = vmatpush1.msra.mxu0 0.0
        %1150 = vmatprep.mubr.f32.mxu0 0.0
        %1151 = vmatmul.mubr.f32.gmra.mrb[0].mxu0 %v1075
        %v1152 = vpop.f32.mrb[0].mxu0
        %v1153 = vadd.f32 0.0, %v1152
        %v1154 = vpop.f32.mrb[0].mxu0
        %1155 = vmatprep.mubr.f32.mxu0 0.0
        %1156 = vmatmul.mubr.f32.gmra.mrb[0].mxu0 %v1078
        %v1157 = vpop.f32.mrb[0].mxu0
        %v1158 = vadd.f32 0.0, %v1157
        %v1159 = vpop.f32.mrb[0].mxu0
        %1160 = vmatprep.mubr.f32.mxu0 0.0
        %1161 = vmatmul.mubr.f32.gmra.mrb[0].mxu0 %v1081
        %v1162 = vpop.f32.mrb[0].mxu0
        %v1163 = vadd.f32 0.0, %v1162
        %v1164 = vpop.f32.mrb[0].mxu0
        %1165 = vmatprep.mubr.f32.mxu0 0.0
        %1166 = vmatmul.mubr.f32.gmra.mrb[0].mxu0 %v1084
        %v1167 = vpop.f32.mrb[0].mxu0
        %v1168 = vadd.f32 0.0, %v1167
        %v1169 = vpop.f32.mrb[0].mxu0
        %1170 = vdwg.mxu0
        %v1171 = vadd.f32 %v775, %v1153
        %v1172 = vadd.f32 %v776, %v1158
        %v1173 = vadd.f32 %v777, %v1163
        %v1174 = vadd.f32 %v778, %v1168
        %s1175 = scalar_lea.vmem %s1, 160
        %v1176 = vld [vmem:[%s1175] sm:$0xff]
        %v1177 = vld [vmem:[%s1175 + $0x8] sm:$0xff]
        %v1178 = vld [vmem:[%s1175 + $0x10] sm:$0xff]
        %v1179 = vld [vmem:[%s1175 + $0x18] sm:$0xff]
        %1180 = vmatprep.subr.mxu0 0.0
        %1181 = vmatpush1.msra.mxu0 %v1176
        %1182 = vmatprep.subr.mxu0 0.0
        %1183 = vmatpush1.msra.mxu0 %v1177
        %1184 = vmatprep.subr.mxu0 0.0
        %1185 = vmatpush1.msra.mxu0 %v1178
        %1186 = vmatprep.subr.mxu0 0.0
        %1187 = vmatpush1.msra.mxu0 %v1179
        %1188 = vmatprep.subr.mxu0 0.0
        %1189 = vmatpush1.msra.mxu0 0.0
        %1190 = vmatprep.subr.mxu0 0.0
        %1191 = vmatpush1.msra.mxu0 0.0
        %1192 = vmatprep.subr.mxu0 0.0
        %1193 = vmatpush1.msra.mxu0 0.0
        %1194 = vmatprep.subr.mxu0 0.0
        %1195 = vmatpush1.msra.mxu0 0.0
        %1196 = vmatprep.subr.mxu0 0.0
        %1197 = vmatpush1.msra.mxu0 0.0
        %1198 = vmatprep.subr.mxu0 0.0
        %1199 = vmatpush1.msra.mxu0 0.0
        %1200 = vmatprep.subr.mxu0 0.0
        %1201 = vmatpush1.msra.mxu0 0.0
        %1202 = vmatprep.subr.mxu0 0.0
        %1203 = vmatpush1.msra.mxu0 0.0
        %1204 = vmatprep.subr.mxu0 0.0
        %1205 = vmatpush1.msra.mxu0 0.0
        %1206 = vmatprep.subr.mxu0 0.0
        %1207 = vmatpush1.msra.mxu0 0.0
        %1208 = vmatprep.subr.mxu0 0.0
        %1209 = vmatpush1.msra.mxu0 0.0
        %1210 = vmatprep.subr.mxu0 0.0
        %1211 = vmatpush1.msra.mxu0 0.0
        %1212 = vmatprep.subr.mxu0 0.0
        %1213 = vmatpush1.msra.mxu0 0.0
        %1214 = vmatprep.subr.mxu0 0.0
        %1215 = vmatpush1.msra.mxu0 0.0
        %1216 = vmatprep.subr.mxu0 0.0
        %1217 = vmatpush1.msra.mxu0 0.0
        %1218 = vmatprep.subr.mxu0 0.0
        %1219 = vmatpush1.msra.mxu0 0.0
        %1220 = vmatprep.subr.mxu0 0.0
        %1221 = vmatpush1.msra.mxu0 0.0
        %1222 = vmatprep.subr.mxu0 0.0
        %1223 = vmatpush1.msra.mxu0 0.0
        %1224 = vmatprep.subr.mxu0 0.0
        %1225 = vmatpush1.msra.mxu0 0.0
        %1226 = vmatprep.subr.mxu0 0.0
        %1227 = vmatpush1.msra.mxu0 0.0
        %1228 = vmatprep.subr.mxu0 0.0
        %1229 = vmatpush1.msra.mxu0 0.0
        %1230 = vmatprep.subr.mxu0 0.0
        %1231 = vmatpush1.msra.mxu0 0.0
        %1232 = vmatprep.subr.mxu0 0.0
        %1233 = vmatpush1.msra.mxu0 0.0
        %1234 = vmatprep.subr.mxu0 0.0
        %1235 = vmatpush1.msra.mxu0 0.0
        %1236 = vmatprep.subr.mxu0 0.0
        %1237 = vmatpush1.msra.mxu0 0.0
        %1238 = vmatprep.subr.mxu0 0.0
        %1239 = vmatpush1.msra.mxu0 0.0
        %1240 = vmatprep.subr.mxu0 0.0
        %1241 = vmatpush1.msra.mxu0 0.0
        %1242 = vmatprep.subr.mxu0 0.0
        %1243 = vmatpush1.msra.mxu0 0.0
        %1244 = vmatprep.mubr.f32.mxu0 0.0
        %1245 = vmatmul.mubr.f32.gmra.mrb[0].mxu0 %v1075
        %v1246 = vpop.f32.mrb[0].mxu0
        %v1247 = vadd.f32 0.0, %v1246
        %v1248 = vpop.f32.mrb[0].mxu0
        %1249 = vmatprep.mubr.f32.mxu0 0.0
        %1250 = vmatmul.mubr.f32.gmra.mrb[0].mxu0 %v1078
        %v1251 = vpop.f32.mrb[0].mxu0
        %v1252 = vadd.f32 0.0, %v1251
        %v1253 = vpop.f32.mrb[0].mxu0
        %1254 = vmatprep.mubr.f32.mxu0 0.0
        %1255 = vmatmul.mubr.f32.gmra.mrb[0].mxu0 %v1081
        %v1256 = vpop.f32.mrb[0].mxu0
        %v1257 = vadd.f32 0.0, %v1256
        %v1258 = vpop.f32.mrb[0].mxu0
        %1259 = vmatprep.mubr.f32.mxu0 0.0
        %1260 = vmatmul.mubr.f32.gmra.mrb[0].mxu0 %v1084
        %v1261 = vpop.f32.mrb[0].mxu0
        %v1262 = vadd.f32 0.0, %v1261
        %v1263 = vpop.f32.mrb[0].mxu0
        %1264 = vdwg.mxu0
        %v1265 = vadd.f32 %v869, %v1247
        %v1266 = vadd.f32 %v870, %v1252
        %v1267 = vadd.f32 %v871, %v1257
        %v1268 = vadd.f32 %v872, %v1262
        %s1269 = scalar_lea.vmem %s1, 288
        %v1270 = vld [vmem:[%s1269] sm:$0xff]
        %v1271 = vld [vmem:[%s1269 + $0x8] sm:$0xff]
        %v1272 = vld [vmem:[%s1269 + $0x10] sm:$0xff]
        %v1273 = vld [vmem:[%s1269 + $0x18] sm:$0xff]
        %1274 = vmatprep.subr.mxu0 0.0
        %1275 = vmatpush1.msra.mxu0 %v1270
        %1276 = vmatprep.subr.mxu0 0.0
        %1277 = vmatpush1.msra.mxu0 %v1271
        %1278 = vmatprep.subr.mxu0 0.0
        %1279 = vmatpush1.msra.mxu0 %v1272
        %1280 = vmatprep.subr.mxu0 0.0
        %1281 = vmatpush1.msra.mxu0 %v1273
        %1282 = vmatprep.subr.mxu0 0.0
        %1283 = vmatpush1.msra.mxu0 0.0
        %1284 = vmatprep.subr.mxu0 0.0
        %1285 = vmatpush1.msra.mxu0 0.0
        %1286 = vmatprep.subr.mxu0 0.0
        %1287 = vmatpush1.msra.mxu0 0.0
        %1288 = vmatprep.subr.mxu0 0.0
        %1289 = vmatpush1.msra.mxu0 0.0
        %1290 = vmatprep.subr.mxu0 0.0
        %1291 = vmatpush1.msra.mxu0 0.0
        %1292 = vmatprep.subr.mxu0 0.0
        %1293 = vmatpush1.msra.mxu0 0.0
        %1294 = vmatprep.subr.mxu0 0.0
        %1295 = vmatpush1.msra.mxu0 0.0
        %1296 = vmatprep.subr.mxu0 0.0
        %1297 = vmatpush1.msra.mxu0 0.0
        %1298 = vmatprep.subr.mxu0 0.0
        %1299 = vmatpush1.msra.mxu0 0.0
        %1300 = vmatprep.subr.mxu0 0.0
        %1301 = vmatpush1.msra.mxu0 0.0
        %1302 = vmatprep.subr.mxu0 0.0
        %1303 = vmatpush1.msra.mxu0 0.0
        %1304 = vmatprep.subr.mxu0 0.0
        %1305 = vmatpush1.msra.mxu0 0.0
        %1306 = vmatprep.subr.mxu0 0.0
        %1307 = vmatpush1.msra.mxu0 0.0
        %1308 = vmatprep.subr.mxu0 0.0
        %1309 = vmatpush1.msra.mxu0 0.0
        %1310 = vmatprep.subr.mxu0 0.0
        %1311 = vmatpush1.msra.mxu0 0.0
        %1312 = vmatprep.subr.mxu0 0.0
        %1313 = vmatpush1.msra.mxu0 0.0
        %1314 = vmatprep.subr.mxu0 0.0
        %1315 = vmatpush1.msra.mxu0 0.0
        %1316 = vmatprep.subr.mxu0 0.0
        %1317 = vmatpush1.msra.mxu0 0.0
        %1318 = vmatprep.subr.mxu0 0.0
        %1319 = vmatpush1.msra.mxu0 0.0
        %1320 = vmatprep.subr.mxu0 0.0
        %1321 = vmatpush1.msra.mxu0 0.0
        %1322 = vmatprep.subr.mxu0 0.0
        %1323 = vmatpush1.msra.mxu0 0.0
        %1324 = vmatprep.subr.mxu0 0.0
        %1325 = vmatpush1.msra.mxu0 0.0
        %1326 = vmatprep.subr.mxu0 0.0
        %1327 = vmatpush1.msra.mxu0 0.0
        %1328 = vmatprep.subr.mxu0 0.0
        %1329 = vmatpush1.msra.mxu0 0.0
        %1330 = vmatprep.subr.mxu0 0.0
        %1331 = vmatpush1.msra.mxu0 0.0
        %1332 = vmatprep.subr.mxu0 0.0
        %1333 = vmatpush1.msra.mxu0 0.0
        %1334 = vmatprep.subr.mxu0 0.0
        %1335 = vmatpush1.msra.mxu0 0.0
        %1336 = vmatprep.subr.mxu0 0.0
        %1337 = vmatpush1.msra.mxu0 0.0
        %1338 = vmatprep.mubr.f32.mxu0 0.0
        %1339 = vmatmul.mubr.f32.gmra.mrb[0].mxu0 %v1075
        %v1340 = vpop.f32.mrb[0].mxu0
        %v1341 = vadd.f32 0.0, %v1340
        %v1342 = vpop.f32.mrb[0].mxu0
        %1343 = vmatprep.mubr.f32.mxu0 0.0
        %1344 = vmatmul.mubr.f32.gmra.mrb[0].mxu0 %v1078
        %v1345 = vpop.f32.mrb[0].mxu0
        %v1346 = vadd.f32 0.0, %v1345
        %v1347 = vpop.f32.mrb[0].mxu0
        %1348 = vmatprep.mubr.f32.mxu0 0.0
        %1349 = vmatmul.mubr.f32.gmra.mrb[0].mxu0 %v1081
        %v1350 = vpop.f32.mrb[0].mxu0
        %v1351 = vadd.f32 0.0, %v1350
        %v1352 = vpop.f32.mrb[0].mxu0
        %1353 = vmatprep.mubr.f32.mxu0 0.0
        %1354 = vmatmul.mubr.f32.gmra.mrb[0].mxu0 %v1084
        %v1355 = vpop.f32.mrb[0].mxu0
        %v1356 = vadd.f32 0.0, %v1355
        %v1357 = vpop.f32.mrb[0].mxu0
        %1358 = vdwg.mxu0
        %v1359 = vadd.f32 %v963, %v1341
        %v1360 = vadd.f32 %v964, %v1346
        %v1361 = vadd.f32 %v965, %v1351
        %v1362 = vadd.f32 %v966, %v1356
        %s1363 = scalar_lea.vmem %s3, 64
        %v1364 = vld [vmem:[%s1363] sm:$0xff]
        %v1365 = vld [vmem:[%s1363 + $0x8] sm:$0xff]
        %v1366 = vld [vmem:[%s1363 + $0x10] sm:$0xff]
        %v1367 = vld [vmem:[%s1363 + $0x18] sm:$0xff]
        %v1369 = vsel %vm575, %v1364, 0
        %v1372 = vsel %vm575, %v1365, 0
        %v1375 = vsel %vm575, %v1366, 0
        %v1378 = vsel %vm575, %v1367, 0
        %1380 = vmatprep.subr.mxu0 0.0
        %1381 = vmatpush1.msra.mxu0 %v556
        %1382 = vmatprep.subr.mxu0 0.0
        %1383 = vmatpush1.msra.mxu0 0.0
        %1384 = vmatprep.subr.mxu0 0.0
        %1385 = vmatpush1.msra.mxu0 0.0
        %1386 = vmatprep.subr.mxu0 0.0
        %1387 = vmatpush1.msra.mxu0 0.0
        %1388 = vmatprep.subr.mxu0 0.0
        %1389 = vmatpush1.msra.mxu0 0.0
        %1390 = vmatprep.subr.mxu0 0.0
        %1391 = vmatpush1.msra.mxu0 0.0
        %1392 = vmatprep.subr.mxu0 0.0
        %1393 = vmatpush1.msra.mxu0 0.0
        %1394 = vmatprep.subr.mxu0 0.0
        %1395 = vmatpush1.msra.mxu0 0.0
        %1396 = vmatprep.subr.mxu0 0.0
        %1397 = vmatpush1.msra.mxu0 0.0
        %1398 = vmatprep.subr.mxu0 0.0
        %1399 = vmatpush1.msra.mxu0 0.0
        %1400 = vmatprep.subr.mxu0 0.0
        %1401 = vmatpush1.msra.mxu0 0.0
        %1402 = vmatprep.subr.mxu0 0.0
        %1403 = vmatpush1.msra.mxu0 0.0
        %1404 = vmatprep.subr.mxu0 0.0
        %1405 = vmatpush1.msra.mxu0 0.0
        %1406 = vmatprep.subr.mxu0 0.0
        %1407 = vmatpush1.msra.mxu0 0.0
        %1408 = vmatprep.subr.mxu0 0.0
        %1409 = vmatpush1.msra.mxu0 0.0
        %1410 = vmatprep.subr.mxu0 0.0
        %1411 = vmatpush1.msra.mxu0 0.0
        %1412 = vmatprep.subr.mxu0 0.0
        %1413 = vmatpush1.msra.mxu0 0.0
        %1414 = vmatprep.subr.mxu0 0.0
        %1415 = vmatpush1.msra.mxu0 0.0
        %1416 = vmatprep.subr.mxu0 0.0
        %1417 = vmatpush1.msra.mxu0 0.0
        %1418 = vmatprep.subr.mxu0 0.0
        %1419 = vmatpush1.msra.mxu0 0.0
        %1420 = vmatprep.subr.mxu0 0.0
        %1421 = vmatpush1.msra.mxu0 0.0
        %1422 = vmatprep.subr.mxu0 0.0
        %1423 = vmatpush1.msra.mxu0 0.0
        %1424 = vmatprep.subr.mxu0 0.0
        %1425 = vmatpush1.msra.mxu0 0.0
        %1426 = vmatprep.subr.mxu0 0.0
        %1427 = vmatpush1.msra.mxu0 0.0
        %1428 = vmatprep.subr.mxu0 0.0
        %1429 = vmatpush1.msra.mxu0 0.0
        %1430 = vmatprep.subr.mxu0 0.0
        %1431 = vmatpush1.msra.mxu0 0.0
        %1432 = vmatprep.subr.mxu0 0.0
        %1433 = vmatpush1.msra.mxu0 0.0
        %1434 = vmatprep.subr.mxu0 0.0
        %1435 = vmatpush1.msra.mxu0 0.0
        %1436 = vmatprep.subr.mxu0 0.0
        %1437 = vmatpush1.msra.mxu0 0.0
        %1438 = vmatprep.subr.mxu0 0.0
        %1439 = vmatpush1.msra.mxu0 0.0
        %1440 = vmatprep.subr.mxu0 0.0
        %1441 = vmatpush1.msra.mxu0 0.0
        %1442 = vmatprep.subr.mxu0 0.0
        %1443 = vmatpush1.msra.mxu0 0.0
        %1444 = vmatprep.mubr.f32.mxu0 0.0
        %1445 = vmatmul.mubr.f32.gmra.mrb[0].mxu0 %v1369
        %v1446 = vpop.f32.mrb[0].mxu0
        %v1447 = vadd.f32 0.0, %v1446
        %v1448 = vpop.f32.mrb[0].mxu0
        %1449 = vmatprep.mubr.f32.mxu0 0.0
        %1450 = vmatmul.mubr.f32.gmra.mrb[0].mxu0 %v1372
        %v1451 = vpop.f32.mrb[0].mxu0
        %v1452 = vadd.f32 0.0, %v1451
        %v1453 = vpop.f32.mrb[0].mxu0
        %1454 = vmatprep.mubr.f32.mxu0 0.0
        %1455 = vmatmul.mubr.f32.gmra.mrb[0].mxu0 %v1375
        %v1456 = vpop.f32.mrb[0].mxu0
        %v1457 = vadd.f32 0.0, %v1456
        %v1458 = vpop.f32.mrb[0].mxu0
        %1459 = vmatprep.mubr.f32.mxu0 0.0
        %1460 = vmatmul.mubr.f32.gmra.mrb[0].mxu0 %v1378
        %v1461 = vpop.f32.mrb[0].mxu0
        %v1462 = vadd.f32 0.0, %v1461
        %v1463 = vpop.f32.mrb[0].mxu0
        %1464 = vdwg.mxu0
        %s1465 = scalar_lea.vmem %s1, 64
        %v1466 = vld [vmem:[%s1465] sm:$0xff]
        %v1467 = vld [vmem:[%s1465 + $0x8] sm:$0xff]
        %v1468 = vld [vmem:[%s1465 + $0x10] sm:$0xff]
        %v1469 = vld [vmem:[%s1465 + $0x18] sm:$0xff]
        %v1471 = vsel %vm677, %v1447, 0
        %v1474 = vsel %vm677, %v1452, 0
        %v1477 = vsel %vm677, %v1457, 0
        %v1480 = vsel %vm677, %v1462, 0
        %1482 = vmatprep.subr.mxu0 0.0
        %1483 = vmatpush1.msra.mxu0 %v1466
        %1484 = vmatprep.subr.mxu0 0.0
        %1485 = vmatpush1.msra.mxu0 %v1467
        %1486 = vmatprep.subr.mxu0 0.0
        %1487 = vmatpush1.msra.mxu0 %v1468
        %1488 = vmatprep.subr.mxu0 0.0
        %1489 = vmatpush1.msra.mxu0 %v1469
        %1490 = vmatprep.subr.mxu0 0.0
        %1491 = vmatpush1.msra.mxu0 0.0
        %1492 = vmatprep.subr.mxu0 0.0
        %1493 = vmatpush1.msra.mxu0 0.0
        %1494 = vmatprep.subr.mxu0 0.0
        %1495 = vmatpush1.msra.mxu0 0.0
        %1496 = vmatprep.subr.mxu0 0.0
        %1497 = vmatpush1.msra.mxu0 0.0
        %1498 = vmatprep.subr.mxu0 0.0
        %1499 = vmatpush1.msra.mxu0 0.0
        %1500 = vmatprep.subr.mxu0 0.0
        %1501 = vmatpush1.msra.mxu0 0.0
        %1502 = vmatprep.subr.mxu0 0.0
        %1503 = vmatpush1.msra.mxu0 0.0
        %1504 = vmatprep.subr.mxu0 0.0
        %1505 = vmatpush1.msra.mxu0 0.0
        %1506 = vmatprep.subr.mxu0 0.0
        %1507 = vmatpush1.msra.mxu0 0.0
        %1508 = vmatprep.subr.mxu0 0.0
        %1509 = vmatpush1.msra.mxu0 0.0
        %1510 = vmatprep.subr.mxu0 0.0
        %1511 = vmatpush1.msra.mxu0 0.0
        %1512 = vmatprep.subr.mxu0 0.0
        %1513 = vmatpush1.msra.mxu0 0.0
        %1514 = vmatprep.subr.mxu0 0.0
        %1515 = vmatpush1.msra.mxu0 0.0
        %1516 = vmatprep.subr.mxu0 0.0
        %1517 = vmatpush1.msra.mxu0 0.0
        %1518 = vmatprep.subr.mxu0 0.0
        %1519 = vmatpush1.msra.mxu0 0.0
        %1520 = vmatprep.subr.mxu0 0.0
        %1521 = vmatpush1.msra.mxu0 0.0
        %1522 = vmatprep.subr.mxu0 0.0
        %1523 = vmatpush1.msra.mxu0 0.0
        %1524 = vmatprep.subr.mxu0 0.0
        %1525 = vmatpush1.msra.mxu0 0.0
        %1526 = vmatprep.subr.mxu0 0.0
        %1527 = vmatpush1.msra.mxu0 0.0
        %1528 = vmatprep.subr.mxu0 0.0
        %1529 = vmatpush1.msra.mxu0 0.0
        %1530 = vmatprep.subr.mxu0 0.0
        %1531 = vmatpush1.msra.mxu0 0.0
        %1532 = vmatprep.subr.mxu0 0.0
        %1533 = vmatpush1.msra.mxu0 0.0
        %1534 = vmatprep.subr.mxu0 0.0
        %1535 = vmatpush1.msra.mxu0 0.0
        %1536 = vmatprep.subr.mxu0 0.0
        %1537 = vmatpush1.msra.mxu0 0.0
        %1538 = vmatprep.subr.mxu0 0.0
        %1539 = vmatpush1.msra.mxu0 0.0
        %1540 = vmatprep.subr.mxu0 0.0
        %1541 = vmatpush1.msra.mxu0 0.0
        %1542 = vmatprep.subr.mxu0 0.0
        %1543 = vmatpush1.msra.mxu0 0.0
        %1544 = vmatprep.subr.mxu0 0.0
        %1545 = vmatpush1.msra.mxu0 0.0
        %1546 = vmatprep.mubr.f32.mxu0 0.0
        %1547 = vmatmul.mubr.f32.gmra.mrb[0].mxu0 %v1471
        %v1548 = vpop.f32.mrb[0].mxu0
        %v1549 = vadd.f32 0.0, %v1548
        %v1550 = vpop.f32.mrb[0].mxu0
        %1551 = vmatprep.mubr.f32.mxu0 0.0
        %1552 = vmatmul.mubr.f32.gmra.mrb[0].mxu0 %v1474
        %v1553 = vpop.f32.mrb[0].mxu0
        %v1554 = vadd.f32 0.0, %v1553
        %v1555 = vpop.f32.mrb[0].mxu0
        %1556 = vmatprep.mubr.f32.mxu0 0.0
        %1557 = vmatmul.mubr.f32.gmra.mrb[0].mxu0 %v1477
        %v1558 = vpop.f32.mrb[0].mxu0
        %v1559 = vadd.f32 0.0, %v1558
        %v1560 = vpop.f32.mrb[0].mxu0
        %1561 = vmatprep.mubr.f32.mxu0 0.0
        %1562 = vmatmul.mubr.f32.gmra.mrb[0].mxu0 %v1480
        %v1563 = vpop.f32.mrb[0].mxu0
        %v1564 = vadd.f32 0.0, %v1563
        %v1565 = vpop.f32.mrb[0].mxu0
        %1566 = vdwg.mxu0
        %v1567 = vadd.f32 %v1171, %v1549
        %v1568 = vadd.f32 %v1172, %v1554
        %v1569 = vadd.f32 %v1173, %v1559
        %v1570 = vadd.f32 %v1174, %v1564
        %s1571 = scalar_lea.vmem %s1, 192
        %v1572 = vld [vmem:[%s1571] sm:$0xff]
        %v1573 = vld [vmem:[%s1571 + $0x8] sm:$0xff]
        %v1574 = vld [vmem:[%s1571 + $0x10] sm:$0xff]
        %v1575 = vld [vmem:[%s1571 + $0x18] sm:$0xff]
        %1576 = vmatprep.subr.mxu0 0.0
        %1577 = vmatpush1.msra.mxu0 %v1572
        %1578 = vmatprep.subr.mxu0 0.0
        %1579 = vmatpush1.msra.mxu0 %v1573
        %1580 = vmatprep.subr.mxu0 0.0
        %1581 = vmatpush1.msra.mxu0 %v1574
        %1582 = vmatprep.subr.mxu0 0.0
        %1583 = vmatpush1.msra.mxu0 %v1575
        %1584 = vmatprep.subr.mxu0 0.0
        %1585 = vmatpush1.msra.mxu0 0.0
        %1586 = vmatprep.subr.mxu0 0.0
        %1587 = vmatpush1.msra.mxu0 0.0
        %1588 = vmatprep.subr.mxu0 0.0
        %1589 = vmatpush1.msra.mxu0 0.0
        %1590 = vmatprep.subr.mxu0 0.0
        %1591 = vmatpush1.msra.mxu0 0.0
        %1592 = vmatprep.subr.mxu0 0.0
        %1593 = vmatpush1.msra.mxu0 0.0
        %1594 = vmatprep.subr.mxu0 0.0
        %1595 = vmatpush1.msra.mxu0 0.0
        %1596 = vmatprep.subr.mxu0 0.0
        %1597 = vmatpush1.msra.mxu0 0.0
        %1598 = vmatprep.subr.mxu0 0.0
        %1599 = vmatpush1.msra.mxu0 0.0
        %1600 = vmatprep.subr.mxu0 0.0
        %1601 = vmatpush1.msra.mxu0 0.0
        %1602 = vmatprep.subr.mxu0 0.0
        %1603 = vmatpush1.msra.mxu0 0.0
        %1604 = vmatprep.subr.mxu0 0.0
        %1605 = vmatpush1.msra.mxu0 0.0
        %1606 = vmatprep.subr.mxu0 0.0
        %1607 = vmatpush1.msra.mxu0 0.0
        %1608 = vmatprep.subr.mxu0 0.0
        %1609 = vmatpush1.msra.mxu0 0.0
        %1610 = vmatprep.subr.mxu0 0.0
        %1611 = vmatpush1.msra.mxu0 0.0
        %1612 = vmatprep.subr.mxu0 0.0
        %1613 = vmatpush1.msra.mxu0 0.0
        %1614 = vmatprep.subr.mxu0 0.0
        %1615 = vmatpush1.msra.mxu0 0.0
        %1616 = vmatprep.subr.mxu0 0.0
        %1617 = vmatpush1.msra.mxu0 0.0
        %1618 = vmatprep.subr.mxu0 0.0
        %1619 = vmatpush1.msra.mxu0 0.0
        %1620 = vmatprep.subr.mxu0 0.0
        %1621 = vmatpush1.msra.mxu0 0.0
        %1622 = vmatprep.subr.mxu0 0.0
        %1623 = vmatpush1.msra.mxu0 0.0
        %1624 = vmatprep.subr.mxu0 0.0
        %1625 = vmatpush1.msra.mxu0 0.0
        %1626 = vmatprep.subr.mxu0 0.0
        %1627 = vmatpush1.msra.mxu0 0.0
        %1628 = vmatprep.subr.mxu0 0.0
        %1629 = vmatpush1.msra.mxu0 0.0
        %1630 = vmatprep.subr.mxu0 0.0
        %1631 = vmatpush1.msra.mxu0 0.0
        %1632 = vmatprep.subr.mxu0 0.0
        %1633 = vmatpush1.msra.mxu0 0.0
        %1634 = vmatprep.subr.mxu0 0.0
        %1635 = vmatpush1.msra.mxu0 0.0
        %1636 = vmatprep.subr.mxu0 0.0
        %1637 = vmatpush1.msra.mxu0 0.0
        %1638 = vmatprep.subr.mxu0 0.0
        %1639 = vmatpush1.msra.mxu0 0.0
        %1640 = vmatprep.mubr.f32.mxu0 0.0
        %1641 = vmatmul.mubr.f32.gmra.mrb[0].mxu0 %v1471
        %v1642 = vpop.f32.mrb[0].mxu0
        %v1643 = vadd.f32 0.0, %v1642
        %v1644 = vpop.f32.mrb[0].mxu0
        %1645 = vmatprep.mubr.f32.mxu0 0.0
        %1646 = vmatmul.mubr.f32.gmra.mrb[0].mxu0 %v1474
        %v1647 = vpop.f32.mrb[0].mxu0
        %v1648 = vadd.f32 0.0, %v1647
        %v1649 = vpop.f32.mrb[0].mxu0
        %1650 = vmatprep.mubr.f32.mxu0 0.0
        %1651 = vmatmul.mubr.f32.gmra.mrb[0].mxu0 %v1477
        %v1652 = vpop.f32.mrb[0].mxu0
        %v1653 = vadd.f32 0.0, %v1652
        %v1654 = vpop.f32.mrb[0].mxu0
        %1655 = vmatprep.mubr.f32.mxu0 0.0
        %1656 = vmatmul.mubr.f32.gmra.mrb[0].mxu0 %v1480
        %v1657 = vpop.f32.mrb[0].mxu0
        %v1658 = vadd.f32 0.0, %v1657
        %v1659 = vpop.f32.mrb[0].mxu0
        %1660 = vdwg.mxu0
        %v1661 = vadd.f32 %v1265, %v1643
        %v1662 = vadd.f32 %v1266, %v1648
        %v1663 = vadd.f32 %v1267, %v1653
        %v1664 = vadd.f32 %v1268, %v1658
        %s1665 = scalar_lea.vmem %s1, 320
        %v1666 = vld [vmem:[%s1665] sm:$0xff]
        %v1667 = vld [vmem:[%s1665 + $0x8] sm:$0xff]
        %v1668 = vld [vmem:[%s1665 + $0x10] sm:$0xff]
        %v1669 = vld [vmem:[%s1665 + $0x18] sm:$0xff]
        %1670 = vmatprep.subr.mxu0 0.0
        %1671 = vmatpush1.msra.mxu0 %v1666
        %1672 = vmatprep.subr.mxu0 0.0
        %1673 = vmatpush1.msra.mxu0 %v1667
        %1674 = vmatprep.subr.mxu0 0.0
        %1675 = vmatpush1.msra.mxu0 %v1668
        %1676 = vmatprep.subr.mxu0 0.0
        %1677 = vmatpush1.msra.mxu0 %v1669
        %1678 = vmatprep.subr.mxu0 0.0
        %1679 = vmatpush1.msra.mxu0 0.0
        %1680 = vmatprep.subr.mxu0 0.0
        %1681 = vmatpush1.msra.mxu0 0.0
        %1682 = vmatprep.subr.mxu0 0.0
        %1683 = vmatpush1.msra.mxu0 0.0
        %1684 = vmatprep.subr.mxu0 0.0
        %1685 = vmatpush1.msra.mxu0 0.0
        %1686 = vmatprep.subr.mxu0 0.0
        %1687 = vmatpush1.msra.mxu0 0.0
        %1688 = vmatprep.subr.mxu0 0.0
        %1689 = vmatpush1.msra.mxu0 0.0
        %1690 = vmatprep.subr.mxu0 0.0
        %1691 = vmatpush1.msra.mxu0 0.0
        %1692 = vmatprep.subr.mxu0 0.0
        %1693 = vmatpush1.msra.mxu0 0.0
        %1694 = vmatprep.subr.mxu0 0.0
        %1695 = vmatpush1.msra.mxu0 0.0
        %1696 = vmatprep.subr.mxu0 0.0
        %1697 = vmatpush1.msra.mxu0 0.0
        %1698 = vmatprep.subr.mxu0 0.0
        %1699 = vmatpush1.msra.mxu0 0.0
        %1700 = vmatprep.subr.mxu0 0.0
        %1701 = vmatpush1.msra.mxu0 0.0
        %1702 = vmatprep.subr.mxu0 0.0
        %1703 = vmatpush1.msra.mxu0 0.0
        %1704 = vmatprep.subr.mxu0 0.0
        %1705 = vmatpush1.msra.mxu0 0.0
        %1706 = vmatprep.subr.mxu0 0.0
        %1707 = vmatpush1.msra.mxu0 0.0
        %1708 = vmatprep.subr.mxu0 0.0
        %1709 = vmatpush1.msra.mxu0 0.0
        %1710 = vmatprep.subr.mxu0 0.0
        %1711 = vmatpush1.msra.mxu0 0.0
        %1712 = vmatprep.subr.mxu0 0.0
        %1713 = vmatpush1.msra.mxu0 0.0
        %1714 = vmatprep.subr.mxu0 0.0
        %1715 = vmatpush1.msra.mxu0 0.0
        %1716 = vmatprep.subr.mxu0 0.0
        %1717 = vmatpush1.msra.mxu0 0.0
        %1718 = vmatprep.subr.mxu0 0.0
        %1719 = vmatpush1.msra.mxu0 0.0
        %1720 = vmatprep.subr.mxu0 0.0
        %1721 = vmatpush1.msra.mxu0 0.0
        %1722 = vmatprep.subr.mxu0 0.0
        %1723 = vmatpush1.msra.mxu0 0.0
        %1724 = vmatprep.subr.mxu0 0.0
        %1725 = vmatpush1.msra.mxu0 0.0
        %1726 = vmatprep.subr.mxu0 0.0
        %1727 = vmatpush1.msra.mxu0 0.0
        %1728 = vmatprep.subr.mxu0 0.0
        %1729 = vmatpush1.msra.mxu0 0.0
        %1730 = vmatprep.subr.mxu0 0.0
        %1731 = vmatpush1.msra.mxu0 0.0
        %1732 = vmatprep.subr.mxu0 0.0
        %1733 = vmatpush1.msra.mxu0 0.0
        %1734 = vmatprep.mubr.f32.mxu0 0.0
        %1735 = vmatmul.mubr.f32.gmra.mrb[0].mxu0 %v1471
        %v1736 = vpop.f32.mrb[0].mxu0
        %v1737 = vadd.f32 0.0, %v1736
        %v1738 = vpop.f32.mrb[0].mxu0
        %1739 = vmatprep.mubr.f32.mxu0 0.0
        %1740 = vmatmul.mubr.f32.gmra.mrb[0].mxu0 %v1474
        %v1741 = vpop.f32.mrb[0].mxu0
        %v1742 = vadd.f32 0.0, %v1741
        %v1743 = vpop.f32.mrb[0].mxu0
        %1744 = vmatprep.mubr.f32.mxu0 0.0
        %1745 = vmatmul.mubr.f32.gmra.mrb[0].mxu0 %v1477
        %v1746 = vpop.f32.mrb[0].mxu0
        %v1747 = vadd.f32 0.0, %v1746
        %v1748 = vpop.f32.mrb[0].mxu0
        %1749 = vmatprep.mubr.f32.mxu0 0.0
        %1750 = vmatmul.mubr.f32.gmra.mrb[0].mxu0 %v1480
        %v1751 = vpop.f32.mrb[0].mxu0
        %v1752 = vadd.f32 0.0, %v1751
        %v1753 = vpop.f32.mrb[0].mxu0
        %1754 = vdwg.mxu0
        %v1755 = vadd.f32 %v1359, %v1737
        %v1756 = vadd.f32 %v1360, %v1742
        %v1757 = vadd.f32 %v1361, %v1747
        %v1758 = vadd.f32 %v1362, %v1752
        %s1759 = scalar_lea.vmem %s3, 96
        %v1760 = vld [vmem:[%s1759] sm:$0xff]
        %v1761 = vld [vmem:[%s1759 + $0x8] sm:$0xff]
        %v1762 = vld [vmem:[%s1759 + $0x10] sm:$0xff]
        %v1763 = vld [vmem:[%s1759 + $0x18] sm:$0xff]
        %v1765 = vsel %vm575, %v1760, 0
        %v1768 = vsel %vm575, %v1761, 0
        %v1771 = vsel %vm575, %v1762, 0
        %v1774 = vsel %vm575, %v1763, 0
        %1776 = vmatprep.subr.mxu0 0.0
        %1777 = vmatpush1.msra.mxu0 %v556
        %1778 = vmatprep.subr.mxu0 0.0
        %1779 = vmatpush1.msra.mxu0 0.0
        %1780 = vmatprep.subr.mxu0 0.0
        %1781 = vmatpush1.msra.mxu0 0.0
        %1782 = vmatprep.subr.mxu0 0.0
        %1783 = vmatpush1.msra.mxu0 0.0
        %1784 = vmatprep.subr.mxu0 0.0
        %1785 = vmatpush1.msra.mxu0 0.0
        %1786 = vmatprep.subr.mxu0 0.0
        %1787 = vmatpush1.msra.mxu0 0.0
        %1788 = vmatprep.subr.mxu0 0.0
        %1789 = vmatpush1.msra.mxu0 0.0
        %1790 = vmatprep.subr.mxu0 0.0
        %1791 = vmatpush1.msra.mxu0 0.0
        %1792 = vmatprep.subr.mxu0 0.0
        %1793 = vmatpush1.msra.mxu0 0.0
        %1794 = vmatprep.subr.mxu0 0.0
        %1795 = vmatpush1.msra.mxu0 0.0
        %1796 = vmatprep.subr.mxu0 0.0
        %1797 = vmatpush1.msra.mxu0 0.0
        %1798 = vmatprep.subr.mxu0 0.0
        %1799 = vmatpush1.msra.mxu0 0.0
        %1800 = vmatprep.subr.mxu0 0.0
        %1801 = vmatpush1.msra.mxu0 0.0
        %1802 = vmatprep.subr.mxu0 0.0
        %1803 = vmatpush1.msra.mxu0 0.0
        %1804 = vmatprep.subr.mxu0 0.0
        %1805 = vmatpush1.msra.mxu0 0.0
        %1806 = vmatprep.subr.mxu0 0.0
        %1807 = vmatpush1.msra.mxu0 0.0
        %1808 = vmatprep.subr.mxu0 0.0
        %1809 = vmatpush1.msra.mxu0 0.0
        %1810 = vmatprep.subr.mxu0 0.0
        %1811 = vmatpush1.msra.mxu0 0.0
        %1812 = vmatprep.subr.mxu0 0.0
        %1813 = vmatpush1.msra.mxu0 0.0
        %1814 = vmatprep.subr.mxu0 0.0
        %1815 = vmatpush1.msra.mxu0 0.0
        %1816 = vmatprep.subr.mxu0 0.0
        %1817 = vmatpush1.msra.mxu0 0.0
        %1818 = vmatprep.subr.mxu0 0.0
        %1819 = vmatpush1.msra.mxu0 0.0
        %1820 = vmatprep.subr.mxu0 0.0
        %1821 = vmatpush1.msra.mxu0 0.0
        %1822 = vmatprep.subr.mxu0 0.0
        %1823 = vmatpush1.msra.mxu0 0.0
        %1824 = vmatprep.subr.mxu0 0.0
        %1825 = vmatpush1.msra.mxu0 0.0
        %1826 = vmatprep.subr.mxu0 0.0
        %1827 = vmatpush1.msra.mxu0 0.0
        %1828 = vmatprep.subr.mxu0 0.0
        %1829 = vmatpush1.msra.mxu0 0.0
        %1830 = vmatprep.subr.mxu0 0.0
        %1831 = vmatpush1.msra.mxu0 0.0
        %1832 = vmatprep.subr.mxu0 0.0
        %1833 = vmatpush1.msra.mxu0 0.0
        %1834 = vmatprep.subr.mxu0 0.0
        %1835 = vmatpush1.msra.mxu0 0.0
        %1836 = vmatprep.subr.mxu0 0.0
        %1837 = vmatpush1.msra.mxu0 0.0
        %1838 = vmatprep.subr.mxu0 0.0
        %1839 = vmatpush1.msra.mxu0 0.0
        %1840 = vmatprep.mubr.f32.mxu0 0.0
        %1841 = vmatmul.mubr.f32.gmra.mrb[0].mxu0 %v1765
        %v1842 = vpop.f32.mrb[0].mxu0
        %v1843 = vadd.f32 0.0, %v1842
        %v1844 = vpop.f32.mrb[0].mxu0
        %1845 = vmatprep.mubr.f32.mxu0 0.0
        %1846 = vmatmul.mubr.f32.gmra.mrb[0].mxu0 %v1768
        %v1847 = vpop.f32.mrb[0].mxu0
        %v1848 = vadd.f32 0.0, %v1847
        %v1849 = vpop.f32.mrb[0].mxu0
        %1850 = vmatprep.mubr.f32.mxu0 0.0
        %1851 = vmatmul.mubr.f32.gmra.mrb[0].mxu0 %v1771
        %v1852 = vpop.f32.mrb[0].mxu0
        %v1853 = vadd.f32 0.0, %v1852
        %v1854 = vpop.f32.mrb[0].mxu0
        %1855 = vmatprep.mubr.f32.mxu0 0.0
        %1856 = vmatmul.mubr.f32.gmra.mrb[0].mxu0 %v1774
        %v1857 = vpop.f32.mrb[0].mxu0
        %v1858 = vadd.f32 0.0, %v1857
        %v1859 = vpop.f32.mrb[0].mxu0
        %1860 = vdwg.mxu0
        %s1861 = scalar_lea.vmem %s1, 96
        %v1862 = vld [vmem:[%s1861] sm:$0xff]
        %v1863 = vld [vmem:[%s1861 + $0x8] sm:$0xff]
        %v1864 = vld [vmem:[%s1861 + $0x10] sm:$0xff]
        %v1865 = vld [vmem:[%s1861 + $0x18] sm:$0xff]
        %v1867 = vsel %vm677, %v1843, 0
        %v1870 = vsel %vm677, %v1848, 0
        %v1873 = vsel %vm677, %v1853, 0
        %v1876 = vsel %vm677, %v1858, 0
        %1878 = vmatprep.subr.mxu0 0.0
        %1879 = vmatpush1.msra.mxu0 %v1862
        %1880 = vmatprep.subr.mxu0 0.0
        %1881 = vmatpush1.msra.mxu0 %v1863
        %1882 = vmatprep.subr.mxu0 0.0
        %1883 = vmatpush1.msra.mxu0 %v1864
        %1884 = vmatprep.subr.mxu0 0.0
        %1885 = vmatpush1.msra.mxu0 %v1865
        %1886 = vmatprep.subr.mxu0 0.0
        %1887 = vmatpush1.msra.mxu0 0.0
        %1888 = vmatprep.subr.mxu0 0.0
        %1889 = vmatpush1.msra.mxu0 0.0
        %1890 = vmatprep.subr.mxu0 0.0
        %1891 = vmatpush1.msra.mxu0 0.0
        %1892 = vmatprep.subr.mxu0 0.0
        %1893 = vmatpush1.msra.mxu0 0.0
        %1894 = vmatprep.subr.mxu0 0.0
        %1895 = vmatpush1.msra.mxu0 0.0
        %1896 = vmatprep.subr.mxu0 0.0
        %1897 = vmatpush1.msra.mxu0 0.0
        %1898 = vmatprep.subr.mxu0 0.0
        %1899 = vmatpush1.msra.mxu0 0.0
        %1900 = vmatprep.subr.mxu0 0.0
        %1901 = vmatpush1.msra.mxu0 0.0
        %1902 = vmatprep.subr.mxu0 0.0
        %1903 = vmatpush1.msra.mxu0 0.0
        %1904 = vmatprep.subr.mxu0 0.0
        %1905 = vmatpush1.msra.mxu0 0.0
        %1906 = vmatprep.subr.mxu0 0.0
        %1907 = vmatpush1.msra.mxu0 0.0
        %1908 = vmatprep.subr.mxu0 0.0
        %1909 = vmatpush1.msra.mxu0 0.0
        %1910 = vmatprep.subr.mxu0 0.0
        %1911 = vmatpush1.msra.mxu0 0.0
        %1912 = vmatprep.subr.mxu0 0.0
        %1913 = vmatpush1.msra.mxu0 0.0
        %1914 = vmatprep.subr.mxu0 0.0
        %1915 = vmatpush1.msra.mxu0 0.0
        %1916 = vmatprep.subr.mxu0 0.0
        %1917 = vmatpush1.msra.mxu0 0.0
        %1918 = vmatprep.subr.mxu0 0.0
        %1919 = vmatpush1.msra.mxu0 0.0
        %1920 = vmatprep.subr.mxu0 0.0
        %1921 = vmatpush1.msra.mxu0 0.0
        %1922 = vmatprep.subr.mxu0 0.0
        %1923 = vmatpush1.msra.mxu0 0.0
        %1924 = vmatprep.subr.mxu0 0.0
        %1925 = vmatpush1.msra.mxu0 0.0
        %1926 = vmatprep.subr.mxu0 0.0
        %1927 = vmatpush1.msra.mxu0 0.0
        %1928 = vmatprep.subr.mxu0 0.0
        %1929 = vmatpush1.msra.mxu0 0.0
        %1930 = vmatprep.subr.mxu0 0.0
        %1931 = vmatpush1.msra.mxu0 0.0
        %1932 = vmatprep.subr.mxu0 0.0
        %1933 = vmatpush1.msra.mxu0 0.0
        %1934 = vmatprep.subr.mxu0 0.0
        %1935 = vmatpush1.msra.mxu0 0.0
        %1936 = vmatprep.subr.mxu0 0.0
        %1937 = vmatpush1.msra.mxu0 0.0
        %1938 = vmatprep.subr.mxu0 0.0
        %1939 = vmatpush1.msra.mxu0 0.0
        %1940 = vmatprep.subr.mxu0 0.0
        %1941 = vmatpush1.msra.mxu0 0.0
        %1942 = vmatprep.mubr.f32.mxu0 0.0
        %1943 = vmatmul.mubr.f32.gmra.mrb[0].mxu0 %v1867
        %v1944 = vpop.f32.mrb[0].mxu0
        %v1945 = vadd.f32 0.0, %v1944
        %v1946 = vpop.f32.mrb[0].mxu0
        %1947 = vmatprep.mubr.f32.mxu0 0.0
        %1948 = vmatmul.mubr.f32.gmra.mrb[0].mxu0 %v1870
        %v1949 = vpop.f32.mrb[0].mxu0
        %v1950 = vadd.f32 0.0, %v1949
        %v1951 = vpop.f32.mrb[0].mxu0
        %1952 = vmatprep.mubr.f32.mxu0 0.0
        %1953 = vmatmul.mubr.f32.gmra.mrb[0].mxu0 %v1873
        %v1954 = vpop.f32.mrb[0].mxu0
        %v1955 = vadd.f32 0.0, %v1954
        %v1956 = vpop.f32.mrb[0].mxu0
        %1957 = vmatprep.mubr.f32.mxu0 0.0
        %1958 = vmatmul.mubr.f32.gmra.mrb[0].mxu0 %v1876
        %v1959 = vpop.f32.mrb[0].mxu0
        %v1960 = vadd.f32 0.0, %v1959
        %v1961 = vpop.f32.mrb[0].mxu0
        %1962 = vdwg.mxu0
        %v1963 = vadd.f32 %v1567, %v1945
        %v1964 = vadd.f32 %v1568, %v1950
        %v1965 = vadd.f32 %v1569, %v1955
        %v1966 = vadd.f32 %v1570, %v1960
        %s1967 = scalar_lea.vmem %s1, 224
        %v1968 = vld [vmem:[%s1967] sm:$0xff]
        %v1969 = vld [vmem:[%s1967 + $0x8] sm:$0xff]
        %v1970 = vld [vmem:[%s1967 + $0x10] sm:$0xff]
        %v1971 = vld [vmem:[%s1967 + $0x18] sm:$0xff]
        %1972 = vmatprep.subr.mxu0 0.0
        %1973 = vmatpush1.msra.mxu0 %v1968
        %1974 = vmatprep.subr.mxu0 0.0
        %1975 = vmatpush1.msra.mxu0 %v1969
        %1976 = vmatprep.subr.mxu0 0.0
        %1977 = vmatpush1.msra.mxu0 %v1970
        %1978 = vmatprep.subr.mxu0 0.0
        %1979 = vmatpush1.msra.mxu0 %v1971
        %1980 = vmatprep.subr.mxu0 0.0
        %1981 = vmatpush1.msra.mxu0 0.0
        %1982 = vmatprep.subr.mxu0 0.0
        %1983 = vmatpush1.msra.mxu0 0.0
        %1984 = vmatprep.subr.mxu0 0.0
        %1985 = vmatpush1.msra.mxu0 0.0
        %1986 = vmatprep.subr.mxu0 0.0
        %1987 = vmatpush1.msra.mxu0 0.0
        %1988 = vmatprep.subr.mxu0 0.0
        %1989 = vmatpush1.msra.mxu0 0.0
        %1990 = vmatprep.subr.mxu0 0.0
        %1991 = vmatpush1.msra.mxu0 0.0
        %1992 = vmatprep.subr.mxu0 0.0
        %1993 = vmatpush1.msra.mxu0 0.0
        %1994 = vmatprep.subr.mxu0 0.0
        %1995 = vmatpush1.msra.mxu0 0.0
        %1996 = vmatprep.subr.mxu0 0.0
        %1997 = vmatpush1.msra.mxu0 0.0
        %1998 = vmatprep.subr.mxu0 0.0
        %1999 = vmatpush1.msra.mxu0 0.0
        %2000 = vmatprep.subr.mxu0 0.0
        %2001 = vmatpush1.msra.mxu0 0.0
        %2002 = vmatprep.subr.mxu0 0.0
        %2003 = vmatpush1.msra.mxu0 0.0
        %2004 = vmatprep.subr.mxu0 0.0
        %2005 = vmatpush1.msra.mxu0 0.0
        %2006 = vmatprep.subr.mxu0 0.0
        %2007 = vmatpush1.msra.mxu0 0.0
        %2008 = vmatprep.subr.mxu0 0.0
        %2009 = vmatpush1.msra.mxu0 0.0
        %2010 = vmatprep.subr.mxu0 0.0
        %2011 = vmatpush1.msra.mxu0 0.0
        %2012 = vmatprep.subr.mxu0 0.0
        %2013 = vmatpush1.msra.mxu0 0.0
        %2014 = vmatprep.subr.mxu0 0.0
        %2015 = vmatpush1.msra.mxu0 0.0
        %2016 = vmatprep.subr.mxu0 0.0
        %2017 = vmatpush1.msra.mxu0 0.0
        %2018 = vmatprep.subr.mxu0 0.0
        %2019 = vmatpush1.msra.mxu0 0.0
        %2020 = vmatprep.subr.mxu0 0.0
        %2021 = vmatpush1.msra.mxu0 0.0
        %2022 = vmatprep.subr.mxu0 0.0
        %2023 = vmatpush1.msra.mxu0 0.0
        %2024 = vmatprep.subr.mxu0 0.0
        %2025 = vmatpush1.msra.mxu0 0.0
        %2026 = vmatprep.subr.mxu0 0.0
        %2027 = vmatpush1.msra.mxu0 0.0
        %2028 = vmatprep.subr.mxu0 0.0
        %2029 = vmatpush1.msra.mxu0 0.0
        %2030 = vmatprep.subr.mxu0 0.0
        %2031 = vmatpush1.msra.mxu0 0.0
        %2032 = vmatprep.subr.mxu0 0.0
        %2033 = vmatpush1.msra.mxu0 0.0
        %2034 = vmatprep.subr.mxu0 0.0
        %2035 = vmatpush1.msra.mxu0 0.0
        %2036 = vmatprep.mubr.f32.mxu0 0.0
        %2037 = vmatmul.mubr.f32.gmra.mrb[0].mxu0 %v1867
        %v2038 = vpop.f32.mrb[0].mxu0
        %v2039 = vadd.f32 0.0, %v2038
        %v2040 = vpop.f32.mrb[0].mxu0
        %2041 = vmatprep.mubr.f32.mxu0 0.0
        %2042 = vmatmul.mubr.f32.gmra.mrb[0].mxu0 %v1870
        %v2043 = vpop.f32.mrb[0].mxu0
        %v2044 = vadd.f32 0.0, %v2043
        %v2045 = vpop.f32.mrb[0].mxu0
        %2046 = vmatprep.mubr.f32.mxu0 0.0
        %2047 = vmatmul.mubr.f32.gmra.mrb[0].mxu0 %v1873
        %v2048 = vpop.f32.mrb[0].mxu0
        %v2049 = vadd.f32 0.0, %v2048
        %v2050 = vpop.f32.mrb[0].mxu0
        %2051 = vmatprep.mubr.f32.mxu0 0.0
        %2052 = vmatmul.mubr.f32.gmra.mrb[0].mxu0 %v1876
        %v2053 = vpop.f32.mrb[0].mxu0
        %v2054 = vadd.f32 0.0, %v2053
        %v2055 = vpop.f32.mrb[0].mxu0
        %2056 = vdwg.mxu0
        %v2057 = vadd.f32 %v1661, %v2039
        %v2058 = vadd.f32 %v1662, %v2044
        %v2059 = vadd.f32 %v1663, %v2049
        %v2060 = vadd.f32 %v1664, %v2054
        %s2061 = scalar_lea.vmem %s1, 352
        %v2062 = vld [vmem:[%s2061] sm:$0xff]
        %v2063 = vld [vmem:[%s2061 + $0x8] sm:$0xff]
        %v2064 = vld [vmem:[%s2061 + $0x10] sm:$0xff]
        %v2065 = vld [vmem:[%s2061 + $0x18] sm:$0xff]
        %2066 = vmatprep.subr.mxu0 0.0
        %2067 = vmatpush1.msra.mxu0 %v2062
        %2068 = vmatprep.subr.mxu0 0.0
        %2069 = vmatpush1.msra.mxu0 %v2063
        %2070 = vmatprep.subr.mxu0 0.0
        %2071 = vmatpush1.msra.mxu0 %v2064
        %2072 = vmatprep.subr.mxu0 0.0
        %2073 = vmatpush1.msra.mxu0 %v2065
        %2074 = vmatprep.subr.mxu0 0.0
        %2075 = vmatpush1.msra.mxu0 0.0
        %2076 = vmatprep.subr.mxu0 0.0
        %2077 = vmatpush1.msra.mxu0 0.0
        %2078 = vmatprep.subr.mxu0 0.0
        %2079 = vmatpush1.msra.mxu0 0.0
        %2080 = vmatprep.subr.mxu0 0.0
        %2081 = vmatpush1.msra.mxu0 0.0
        %2082 = vmatprep.subr.mxu0 0.0
        %2083 = vmatpush1.msra.mxu0 0.0
        %2084 = vmatprep.subr.mxu0 0.0
        %2085 = vmatpush1.msra.mxu0 0.0
        %2086 = vmatprep.subr.mxu0 0.0
        %2087 = vmatpush1.msra.mxu0 0.0
        %2088 = vmatprep.subr.mxu0 0.0
        %2089 = vmatpush1.msra.mxu0 0.0
        %2090 = vmatprep.subr.mxu0 0.0
        %2091 = vmatpush1.msra.mxu0 0.0
        %2092 = vmatprep.subr.mxu0 0.0
        %2093 = vmatpush1.msra.mxu0 0.0
        %2094 = vmatprep.subr.mxu0 0.0
        %2095 = vmatpush1.msra.mxu0 0.0
        %2096 = vmatprep.subr.mxu0 0.0
        %2097 = vmatpush1.msra.mxu0 0.0
        %2098 = vmatprep.subr.mxu0 0.0
        %2099 = vmatpush1.msra.mxu0 0.0
        %2100 = vmatprep.subr.mxu0 0.0
        %2101 = vmatpush1.msra.mxu0 0.0
        %2102 = vmatprep.subr.mxu0 0.0
        %2103 = vmatpush1.msra.mxu0 0.0
        %2104 = vmatprep.subr.mxu0 0.0
        %2105 = vmatpush1.msra.mxu0 0.0
        %2106 = vmatprep.subr.mxu0 0.0
        %2107 = vmatpush1.msra.mxu0 0.0
        %2108 = vmatprep.subr.mxu0 0.0
        %2109 = vmatpush1.msra.mxu0 0.0
        %2110 = vmatprep.subr.mxu0 0.0
        %2111 = vmatpush1.msra.mxu0 0.0
        %2112 = vmatprep.subr.mxu0 0.0
        %2113 = vmatpush1.msra.mxu0 0.0
        %2114 = vmatprep.subr.mxu0 0.0
        %2115 = vmatpush1.msra.mxu0 0.0
        %2116 = vmatprep.subr.mxu0 0.0
        %2117 = vmatpush1.msra.mxu0 0.0
        %2118 = vmatprep.subr.mxu0 0.0
        %2119 = vmatpush1.msra.mxu0 0.0
        %2120 = vmatprep.subr.mxu0 0.0
        %2121 = vmatpush1.msra.mxu0 0.0
        %2122 = vmatprep.subr.mxu0 0.0
        %2123 = vmatpush1.msra.mxu0 0.0
        %2124 = vmatprep.subr.mxu0 0.0
        %2125 = vmatpush1.msra.mxu0 0.0
        %2126 = vmatprep.subr.mxu0 0.0
        %2127 = vmatpush1.msra.mxu0 0.0
        %2128 = vmatprep.subr.mxu0 0.0
        %2129 = vmatpush1.msra.mxu0 0.0
        %2130 = vmatprep.mubr.f32.mxu0 0.0
        %2131 = vmatmul.mubr.f32.gmra.mrb[0].mxu0 %v1867
        %v2132 = vpop.f32.mrb[0].mxu0
        %v2133 = vadd.f32 0.0, %v2132
        %v2134 = vpop.f32.mrb[0].mxu0
        %2135 = vmatprep.mubr.f32.mxu0 0.0
        %2136 = vmatmul.mubr.f32.gmra.mrb[0].mxu0 %v1870
        %v2137 = vpop.f32.mrb[0].mxu0
        %v2138 = vadd.f32 0.0, %v2137
        %v2139 = vpop.f32.mrb[0].mxu0
        %2140 = vmatprep.mubr.f32.mxu0 0.0
        %2141 = vmatmul.mubr.f32.gmra.mrb[0].mxu0 %v1873
        %v2142 = vpop.f32.mrb[0].mxu0
        %v2143 = vadd.f32 0.0, %v2142
        %v2144 = vpop.f32.mrb[0].mxu0
        %2145 = vmatprep.mubr.f32.mxu0 0.0
        %2146 = vmatmul.mubr.f32.gmra.mrb[0].mxu0 %v1876
        %v2147 = vpop.f32.mrb[0].mxu0
        %v2148 = vadd.f32 0.0, %v2147
        %v2149 = vpop.f32.mrb[0].mxu0
        %2150 = vdwg.mxu0
        %v2151 = vadd.f32 %v1755, %v2133
        %v2152 = vadd.f32 %v1756, %v2138
        %v2153 = vadd.f32 %v1757, %v2143
        %v2154 = vadd.f32 %v1758, %v2148
        %v2156 = vsel %vm575, %v1963, 0
        %v2159 = vsel %vm575, %v1964, 0
        %v2162 = vsel %vm575, %v1965, 0
        %v2165 = vsel %vm575, %v1966, 0
        %v2168 = vsel %vm575, %v2057, 0
        %v2171 = vsel %vm575, %v2058, 0
        %v2174 = vsel %vm575, %v2059, 0
        %v2177 = vsel %vm575, %v2060, 0
        %2179 = vmatprep.subr.mxu0 0.0
        %2180 = vmatpush1.xpose.msra.mxu0 %v2168
        %2181 = vmatprep.subr.mxu0 0.0
        %2182 = vmatpush1.xpose.msra.mxu0 %v2171
        %2183 = vmatprep.subr.mxu0 0.0
        %2184 = vmatpush1.xpose.msra.mxu0 %v2174
        %2185 = vmatprep.subr.mxu0 0.0
        %2186 = vmatpush1.xpose.msra.mxu0 %v2177
        %2187 = vmatprep.subr.mxu0 0.0
        %2188 = vmatpush1.xpose.msra.mxu0 0.0
        %2189 = vmatprep.subr.mxu0 0.0
        %2190 = vmatpush1.xpose.msra.mxu0 0.0
        %2191 = vmatprep.subr.mxu0 0.0
        %2192 = vmatpush1.xpose.msra.mxu0 0.0
        %2193 = vmatprep.subr.mxu0 0.0
        %2194 = vmatpush1.xpose.msra.mxu0 0.0
        %2195 = vmatprep.subr.mxu0 0.0
        %2196 = vmatpush1.xpose.msra.mxu0 0.0
        %2197 = vmatprep.subr.mxu0 0.0
        %2198 = vmatpush1.xpose.msra.mxu0 0.0
        %2199 = vmatprep.subr.mxu0 0.0
        %2200 = vmatpush1.xpose.msra.mxu0 0.0
        %2201 = vmatprep.subr.mxu0 0.0
        %2202 = vmatpush1.xpose.msra.mxu0 0.0
        %2203 = vmatprep.subr.mxu0 0.0
        %2204 = vmatpush1.xpose.msra.mxu0 0.0
        %2205 = vmatprep.subr.mxu0 0.0
        %2206 = vmatpush1.xpose.msra.mxu0 0.0
        %2207 = vmatprep.subr.mxu0 0.0
        %2208 = vmatpush1.xpose.msra.mxu0 0.0
        %2209 = vmatprep.subr.mxu0 0.0
        %2210 = vmatpush1.xpose.msra.mxu0 0.0
        %2211 = vmatprep.subr.mxu0 0.0
        %2212 = vmatpush1.xpose.msra.mxu0 0.0
        %2213 = vmatprep.subr.mxu0 0.0
        %2214 = vmatpush1.xpose.msra.mxu0 0.0
        %2215 = vmatprep.subr.mxu0 0.0
        %2216 = vmatpush1.xpose.msra.mxu0 0.0
        %2217 = vmatprep.subr.mxu0 0.0
        %2218 = vmatpush1.xpose.msra.mxu0 0.0
        %2219 = vmatprep.subr.mxu0 0.0
        %2220 = vmatpush1.xpose.msra.mxu0 0.0
        %2221 = vmatprep.subr.mxu0 0.0
        %2222 = vmatpush1.xpose.msra.mxu0 0.0
        %2223 = vmatprep.subr.mxu0 0.0
        %2224 = vmatpush1.xpose.msra.mxu0 0.0
        %2225 = vmatprep.subr.mxu0 0.0
        %2226 = vmatpush1.xpose.msra.mxu0 0.0
        %2227 = vmatprep.subr.mxu0 0.0
        %2228 = vmatpush1.xpose.msra.mxu0 0.0
        %2229 = vmatprep.subr.mxu0 0.0
        %2230 = vmatpush1.xpose.msra.mxu0 0.0
        %2231 = vmatprep.subr.mxu0 0.0
        %2232 = vmatpush1.xpose.msra.mxu0 0.0
        %2233 = vmatprep.subr.mxu0 0.0
        %2234 = vmatpush1.xpose.msra.mxu0 0.0
        %2235 = vmatprep.subr.mxu0 0.0
        %2236 = vmatpush1.xpose.msra.mxu0 0.0
        %2237 = vmatprep.subr.mxu0 0.0
        %2238 = vmatpush1.xpose.msra.mxu0 0.0
        %2239 = vmatprep.subr.mxu0 0.0
        %2240 = vmatpush1.xpose.msra.mxu0 0.0
        %2241 = vmatprep.subr.mxu0 0.0
        %2242 = vmatpush1.xpose.msra.mxu0 0.0
        %2243 = vmatprep.mubr.f32.mxu0 0.0
        %2244 = vmatmul.mubr.f32.gmra.mrb[0].mxu0 %v2156
        %v2245 = vpop.f32.mrb[0].mxu0
        %v2246 = vadd.f32 0.0, %v2245
        %v2247 = vpop.f32.mrb[0].mxu0
        %2248 = vmatprep.mubr.f32.mxu0 0.0
        %2249 = vmatmul.mubr.f32.gmra.mrb[0].mxu0 %v2159
        %v2250 = vpop.f32.mrb[0].mxu0
        %v2251 = vadd.f32 0.0, %v2250
        %v2252 = vpop.f32.mrb[0].mxu0
        %2253 = vmatprep.mubr.f32.mxu0 0.0
        %2254 = vmatmul.mubr.f32.gmra.mrb[0].mxu0 %v2162
        %v2255 = vpop.f32.mrb[0].mxu0
        %v2256 = vadd.f32 0.0, %v2255
        %v2257 = vpop.f32.mrb[0].mxu0
        %2258 = vmatprep.mubr.f32.mxu0 0.0
        %2259 = vmatmul.mubr.f32.gmra.mrb[0].mxu0 %v2165
        %v2260 = vpop.f32.mrb[0].mxu0
        %v2261 = vadd.f32 0.0, %v2260
        %v2262 = vpop.f32.mrb[0].mxu0
        %2263 = vdwg.mxu0
        %v2264 = vmul.f32 %v2246, 0.70710677
        %v2265 = vmul.f32 %v2251, 0.70710677
        %v2266 = vmul.f32 %v2256, 0.70710677
        %v2267 = vmul.f32 %v2261, 0.70710677
        %v2268 = vld [vmem:[%s5] sm:$0xff]
        %v2269 = vld [vmem:[%s5 + $0x8] sm:$0xff]
        %v2270 = vld [vmem:[%s5 + $0x10] sm:$0xff]
        %v2271 = vld [vmem:[%s5 + $0x18] sm:$0xff]
        %v2272 = vadd.f32 %v2264, %v2268
        %v2273 = vadd.f32 %v2265, %v2269
        %v2274 = vadd.f32 %v2266, %v2270
        %v2275 = vadd.f32 %v2267, %v2271
        %v2276 = vsel %vm677, %v2272, -inf
        %2277 = vmax.xlane.f32.xlu0 %v2276
        %v2278 = vpop.xlane.xlu0 %2277
        %v2279 = vsel %vm677, %v2273, -inf
        %2280 = vmax.xlane.f32.xlu0 %v2279
        %v2281 = vpop.xlane.xlu0 %2280
        %v2282 = vsel %vm677, %v2274, -inf
        %2283 = vmax.xlane.f32.xlu0 %v2282
        %v2284 = vpop.xlane.xlu0 %2283
        %v2285 = vsel %vm677, %v2275, -inf
        %2286 = vmax.xlane.f32.xlu0 %v2285
        %v2287 = vpop.xlane.xlu0 %2286
        %v2288 = vsub.f32 %v2272, %v2278
        %v2289 = vsub.f32 %v2273, %v2281
        %v2290 = vsub.f32 %v2274, %v2284
        %v2291 = vsub.f32 %v2275, %v2287
        %v2292 = vmul.f32 %v2288, 1.442695
        %v2293 = vpow.pop %v2292
        %v2294 = vmul.f32 %v2289, 1.442695
        %v2295 = vpow.pop %v2294
        %v2296 = vmul.f32 %v2290, 1.442695
        %v2297 = vpow.pop %v2296
        %v2298 = vmul.f32 %v2291, 1.442695
        %v2299 = vpow.pop %v2298
        %v2300 = vsel %vm677, %v2293, 0.0
        %2301 = vadd.xlane.f32.xlu0 %v2300
        %v2302 = vpop.xlane.xlu0 %2301
        %v2303 = vsel %vm677, %v2295, 0.0
        %2304 = vadd.xlane.f32.xlu0 %v2303
        %v2305 = vpop.xlane.xlu0 %2304
        %v2306 = vsel %vm677, %v2297, 0.0
        %2307 = vadd.xlane.f32.xlu0 %v2306
        %v2308 = vpop.xlane.xlu0 %2307
        %v2309 = vsel %vm677, %v2299, 0.0
        %2310 = vadd.xlane.f32.xlu0 %v2309
        %v2311 = vpop.xlane.xlu0 %2310
        %v2312 = vrcp.pop %v2302
        %v2313 = vrcp.pop %v2305
        %v2314 = vrcp.pop %v2308
        %v2315 = vrcp.pop %v2311
        %v2316 = vmul.f32 %v2293, %v2312
        %v2317 = vmul.f32 %v2295, %v2313
        %v2318 = vmul.f32 %v2297, %v2314
        %v2319 = vmul.f32 %v2299, %v2315
        %v2321 = vsel %vm677, %v2316, 0
        %v2324 = vsel %vm677, %v2317, 0
        %v2327 = vsel %vm677, %v2318, 0
        %v2330 = vsel %vm677, %v2319, 0
        %2332 = vmatprep.subr.mxu0 0.0
        %2333 = vmatpush1.msra.mxu0 %v2151
        %2334 = vmatprep.subr.mxu0 0.0
        %2335 = vmatpush1.msra.mxu0 %v2152
        %2336 = vmatprep.subr.mxu0 0.0
        %2337 = vmatpush1.msra.mxu0 %v2153
        %2338 = vmatprep.subr.mxu0 0.0
        %2339 = vmatpush1.msra.mxu0 %v2154
        %2340 = vmatprep.subr.mxu0 0.0
        %2341 = vmatpush1.msra.mxu0 0.0
        %2342 = vmatprep.subr.mxu0 0.0
        %2343 = vmatpush1.msra.mxu0 0.0
        %2344 = vmatprep.subr.mxu0 0.0
        %2345 = vmatpush1.msra.mxu0 0.0
        %2346 = vmatprep.subr.mxu0 0.0
        %2347 = vmatpush1.msra.mxu0 0.0
        %2348 = vmatprep.subr.mxu0 0.0
        %2349 = vmatpush1.msra.mxu0 0.0
        %2350 = vmatprep.subr.mxu0 0.0
        %2351 = vmatpush1.msra.mxu0 0.0
        %2352 = vmatprep.subr.mxu0 0.0
        %2353 = vmatpush1.msra.mxu0 0.0
        %2354 = vmatprep.subr.mxu0 0.0
        %2355 = vmatpush1.msra.mxu0 0.0
        %2356 = vmatprep.subr.mxu0 0.0
        %2357 = vmatpush1.msra.mxu0 0.0
        %2358 = vmatprep.subr.mxu0 0.0
        %2359 = vmatpush1.msra.mxu0 0.0
        %2360 = vmatprep.subr.mxu0 0.0
        %2361 = vmatpush1.msra.mxu0 0.0
        %2362 = vmatprep.subr.mxu0 0.0
        %2363 = vmatpush1.msra.mxu0 0.0
        %2364 = vmatprep.subr.mxu0 0.0
        %2365 = vmatpush1.msra.mxu0 0.0
        %2366 = vmatprep.subr.mxu0 0.0
        %2367 = vmatpush1.msra.mxu0 0.0
        %2368 = vmatprep.subr.mxu0 0.0
        %2369 = vmatpush1.msra.mxu0 0.0
        %2370 = vmatprep.subr.mxu0 0.0
        %2371 = vmatpush1.msra.mxu0 0.0
        %2372 = vmatprep.subr.mxu0 0.0
        %2373 = vmatpush1.msra.mxu0 0.0
        %2374 = vmatprep.subr.mxu0 0.0
        %2375 = vmatpush1.msra.mxu0 0.0
        %2376 = vmatprep.subr.mxu0 0.0
        %2377 = vmatpush1.msra.mxu0 0.0
        %2378 = vmatprep.subr.mxu0 0.0
        %2379 = vmatpush1.msra.mxu0 0.0
        %2380 = vmatprep.subr.mxu0 0.0
        %2381 = vmatpush1.msra.mxu0 0.0
        %2382 = vmatprep.subr.mxu0 0.0
        %2383 = vmatpush1.msra.mxu0 0.0
        %2384 = vmatprep.subr.mxu0 0.0
        %2385 = vmatpush1.msra.mxu0 0.0
        %2386 = vmatprep.subr.mxu0 0.0
        %2387 = vmatpush1.msra.mxu0 0.0
        %2388 = vmatprep.subr.mxu0 0.0
        %2389 = vmatpush1.msra.mxu0 0.0
        %2390 = vmatprep.subr.mxu0 0.0
        %2391 = vmatpush1.msra.mxu0 0.0
        %2392 = vmatprep.subr.mxu0 0.0
        %2393 = vmatpush1.msra.mxu0 0.0
        %2394 = vmatprep.subr.mxu0 0.0
        %2395 = vmatpush1.msra.mxu0 0.0
        %2396 = vmatprep.mubr.f32.mxu0 0.0
        %2397 = vmatmul.mubr.f32.gmra.mrb[0].mxu0 %v2321
        %v2398 = vpop.f32.mrb[0].mxu0
        %v2399 = vadd.f32 0.0, %v2398
        %v2400 = vpop.f32.mrb[0].mxu0
        %2401 = vmatprep.mubr.f32.mxu0 0.0
        %2402 = vmatmul.mubr.f32.gmra.mrb[0].mxu0 %v2324
        %v2403 = vpop.f32.mrb[0].mxu0
        %v2404 = vadd.f32 0.0, %v2403
        %v2405 = vpop.f32.mrb[0].mxu0
        %2406 = vmatprep.mubr.f32.mxu0 0.0
        %2407 = vmatmul.mubr.f32.gmra.mrb[0].mxu0 %v2327
        %v2408 = vpop.f32.mrb[0].mxu0
        %v2409 = vadd.f32 0.0, %v2408
        %v2410 = vpop.f32.mrb[0].mxu0
        %2411 = vmatprep.mubr.f32.mxu0 0.0
        %2412 = vmatmul.mubr.f32.gmra.mrb[0].mxu0 %v2330
        %v2413 = vpop.f32.mrb[0].mxu0
        %v2414 = vadd.f32 0.0, %v2413
        %v2415 = vpop.f32.mrb[0].mxu0
        %2416 = vdwg.mxu0
        %s2417 = scalar_lea.vmem %s4, 32
        %v2418 = vld [vmem:[%s2417] sm:$0xff]
        %v2420 = vsel %vm677, %v2418, 0
        %2422 = vmatprep.subr.mxu0 0.0
        %2423 = vmatpush1.msra.mxu0 %v2316
        %2424 = vmatprep.subr.mxu0 0.0
        %2425 = vmatpush1.msra.mxu0 %v2317
        %2426 = vmatprep.subr.mxu0 0.0
        %2427 = vmatpush1.msra.mxu0 %v2318
        %2428 = vmatprep.subr.mxu0 0.0
        %2429 = vmatpush1.msra.mxu0 %v2319
        %2430 = vmatprep.subr.mxu0 0.0
        %2431 = vmatpush1.msra.mxu0 0.0
        %2432 = vmatprep.subr.mxu0 0.0
        %2433 = vmatpush1.msra.mxu0 0.0
        %2434 = vmatprep.subr.mxu0 0.0
        %2435 = vmatpush1.msra.mxu0 0.0
        %2436 = vmatprep.subr.mxu0 0.0
        %2437 = vmatpush1.msra.mxu0 0.0
        %2438 = vmatprep.subr.mxu0 0.0
        %2439 = vmatpush1.msra.mxu0 0.0
        %2440 = vmatprep.subr.mxu0 0.0
        %2441 = vmatpush1.msra.mxu0 0.0
        %2442 = vmatprep.subr.mxu0 0.0
        %2443 = vmatpush1.msra.mxu0 0.0
        %2444 = vmatprep.subr.mxu0 0.0
        %2445 = vmatpush1.msra.mxu0 0.0
        %2446 = vmatprep.subr.mxu0 0.0
        %2447 = vmatpush1.msra.mxu0 0.0
        %2448 = vmatprep.subr.mxu0 0.0
        %2449 = vmatpush1.msra.mxu0 0.0
        %2450 = vmatprep.subr.mxu0 0.0
        %2451 = vmatpush1.msra.mxu0 0.0
        %2452 = vmatprep.subr.mxu0 0.0
        %2453 = vmatpush1.msra.mxu0 0.0
        %2454 = vmatprep.subr.mxu0 0.0
        %2455 = vmatpush1.msra.mxu0 0.0
        %2456 = vmatprep.subr.mxu0 0.0
        %2457 = vmatpush1.msra.mxu0 0.0
        %2458 = vmatprep.subr.mxu0 0.0
        %2459 = vmatpush1.msra.mxu0 0.0
        %2460 = vmatprep.subr.mxu0 0.0
        %2461 = vmatpush1.msra.mxu0 0.0
        %2462 = vmatprep.subr.mxu0 0.0
        %2463 = vmatpush1.msra.mxu0 0.0
        %2464 = vmatprep.subr.mxu0 0.0
        %2465 = vmatpush1.msra.mxu0 0.0
        %2466 = vmatprep.subr.mxu0 0.0
        %2467 = vmatpush1.msra.mxu0 0.0
        %2468 = vmatprep.subr.mxu0 0.0
        %2469 = vmatpush1.msra.mxu0 0.0
        %2470 = vmatprep.subr.mxu0 0.0
        %2471 = vmatpush1.msra.mxu0 0.0
        %2472 = vmatprep.subr.mxu0 0.0
        %2473 = vmatpush1.msra.mxu0 0.0
        %2474 = vmatprep.subr.mxu0 0.0
        %2475 = vmatpush1.msra.mxu0 0.0
        %2476 = vmatprep.subr.mxu0 0.0
        %2477 = vmatpush1.msra.mxu0 0.0
        %2478 = vmatprep.subr.mxu0 0.0
        %2479 = vmatpush1.msra.mxu0 0.0
        %2480 = vmatprep.subr.mxu0 0.0
        %2481 = vmatpush1.msra.mxu0 0.0
        %2482 = vmatprep.subr.mxu0 0.0
        %2483 = vmatpush1.msra.mxu0 0.0
        %2484 = vmatprep.subr.mxu0 0.0
        %2485 = vmatpush1.msra.mxu0 0.0
        %2486 = vmatprep.mubr.f32.mxu0 0.0
        %2487 = vmatmul.mubr.f32.gmra.mrb[0].mxu0 %v2420
        %v2488 = vpop.f32.mrb[0].mxu0
        %v2489 = vadd.f32 0.0, %v2488
        %v2490 = vpop.f32.mrb[0].mxu0
        %2491 = vdwg.mxu0
        %s2492 = scalar_lea.vmem %s3, 128
        %v2493 = vld [vmem:[%s2492] sm:$0xff]
        %v2494 = vld [vmem:[%s2492 + $0x8] sm:$0xff]
        %v2495 = vld [vmem:[%s2492 + $0x10] sm:$0xff]
        %v2496 = vld [vmem:[%s2492 + $0x18] sm:$0xff]
        %v2498 = vsel %vm677, %v2489, 0
        %2500 = vmatprep.subr.mxu0 0.0
        %2501 = vmatpush1.msra.mxu0 %v2493
        %2502 = vmatprep.subr.mxu0 0.0
        %2503 = vmatpush1.msra.mxu0 %v2494
        %2504 = vmatprep.subr.mxu0 0.0
        %2505 = vmatpush1.msra.mxu0 %v2495
        %2506 = vmatprep.subr.mxu0 0.0
        %2507 = vmatpush1.msra.mxu0 %v2496
        %2508 = vmatprep.subr.mxu0 0.0
        %2509 = vmatpush1.msra.mxu0 0.0
        %2510 = vmatprep.subr.mxu0 0.0
        %2511 = vmatpush1.msra.mxu0 0.0
        %2512 = vmatprep.subr.mxu0 0.0
        %2513 = vmatpush1.msra.mxu0 0.0
        %2514 = vmatprep.subr.mxu0 0.0
        %2515 = vmatpush1.msra.mxu0 0.0
        %2516 = vmatprep.subr.mxu0 0.0
        %2517 = vmatpush1.msra.mxu0 0.0
        %2518 = vmatprep.subr.mxu0 0.0
        %2519 = vmatpush1.msra.mxu0 0.0
        %2520 = vmatprep.subr.mxu0 0.0
        %2521 = vmatpush1.msra.mxu0 0.0
        %2522 = vmatprep.subr.mxu0 0.0
        %2523 = vmatpush1.msra.mxu0 0.0
        %2524 = vmatprep.subr.mxu0 0.0
        %2525 = vmatpush1.msra.mxu0 0.0
        %2526 = vmatprep.subr.mxu0 0.0
        %2527 = vmatpush1.msra.mxu0 0.0
        %2528 = vmatprep.subr.mxu0 0.0
        %2529 = vmatpush1.msra.mxu0 0.0
        %2530 = vmatprep.subr.mxu0 0.0
        %2531 = vmatpush1.msra.mxu0 0.0
        %2532 = vmatprep.subr.mxu0 0.0
        %2533 = vmatpush1.msra.mxu0 0.0
        %2534 = vmatprep.subr.mxu0 0.0
        %2535 = vmatpush1.msra.mxu0 0.0
        %2536 = vmatprep.subr.mxu0 0.0
        %2537 = vmatpush1.msra.mxu0 0.0
        %2538 = vmatprep.subr.mxu0 0.0
        %2539 = vmatpush1.msra.mxu0 0.0
        %2540 = vmatprep.subr.mxu0 0.0
        %2541 = vmatpush1.msra.mxu0 0.0
        %2542 = vmatprep.subr.mxu0 0.0
        %2543 = vmatpush1.msra.mxu0 0.0
        %2544 = vmatprep.subr.mxu0 0.0
        %2545 = vmatpush1.msra.mxu0 0.0
        %2546 = vmatprep.subr.mxu0 0.0
        %2547 = vmatpush1.msra.mxu0 0.0
        %2548 = vmatprep.subr.mxu0 0.0
        %2549 = vmatpush1.msra.mxu0 0.0
        %2550 = vmatprep.subr.mxu0 0.0
        %2551 = vmatpush1.msra.mxu0 0.0
        %2552 = vmatprep.subr.mxu0 0.0
        %2553 = vmatpush1.msra.mxu0 0.0
        %2554 = vmatprep.subr.mxu0 0.0
        %2555 = vmatpush1.msra.mxu0 0.0
        %2556 = vmatprep.subr.mxu0 0.0
        %2557 = vmatpush1.msra.mxu0 0.0
        %2558 = vmatprep.subr.mxu0 0.0
        %2559 = vmatpush1.msra.mxu0 0.0
        %2560 = vmatprep.subr.mxu0 0.0
        %2561 = vmatpush1.msra.mxu0 0.0
        %2562 = vmatprep.subr.mxu0 0.0
        %2563 = vmatpush1.msra.mxu0 0.0
        %2564 = vmatprep.mubr.f32.mxu0 0.0
        %2565 = vmatmul.mubr.f32.gmra.mrb[0].mxu0 %v2498
        %v2566 = vpop.f32.mrb[0].mxu0
        %v2567 = vadd.f32 0.0, %v2566
        %v2568 = vpop.f32.mrb[0].mxu0
        %2569 = vdwg.mxu0
        %2570 = vst.msk [vmem:[%s550] sm:$0xff] %vm575, %v2567
        %s2571 = scalar_lea.vmem %s4, 40
        %v2572 = vld [vmem:[%s2571] sm:$0xff]
        %v2574 = vsel %vm677, %v2572, 0
        %2576 = vmatprep.subr.mxu0 0.0
        %2577 = vmatpush1.msra.mxu0 %v2316
        %2578 = vmatprep.subr.mxu0 0.0
        %2579 = vmatpush1.msra.mxu0 %v2317
        %2580 = vmatprep.subr.mxu0 0.0
        %2581 = vmatpush1.msra.mxu0 %v2318
        %2582 = vmatprep.subr.mxu0 0.0
        %2583 = vmatpush1.msra.mxu0 %v2319
        %2584 = vmatprep.subr.mxu0 0.0
        %2585 = vmatpush1.msra.mxu0 0.0
        %2586 = vmatprep.subr.mxu0 0.0
        %2587 = vmatpush1.msra.mxu0 0.0
        %2588 = vmatprep.subr.mxu0 0.0
        %2589 = vmatpush1.msra.mxu0 0.0
        %2590 = vmatprep.subr.mxu0 0.0
        %2591 = vmatpush1.msra.mxu0 0.0
        %2592 = vmatprep.subr.mxu0 0.0
        %2593 = vmatpush1.msra.mxu0 0.0
        %2594 = vmatprep.subr.mxu0 0.0
        %2595 = vmatpush1.msra.mxu0 0.0
        %2596 = vmatprep.subr.mxu0 0.0
        %2597 = vmatpush1.msra.mxu0 0.0
        %2598 = vmatprep.subr.mxu0 0.0
        %2599 = vmatpush1.msra.mxu0 0.0
        %2600 = vmatprep.subr.mxu0 0.0
        %2601 = vmatpush1.msra.mxu0 0.0
        %2602 = vmatprep.subr.mxu0 0.0
        %2603 = vmatpush1.msra.mxu0 0.0
        %2604 = vmatprep.subr.mxu0 0.0
        %2605 = vmatpush1.msra.mxu0 0.0
        %2606 = vmatprep.subr.mxu0 0.0
        %2607 = vmatpush1.msra.mxu0 0.0
        %2608 = vmatprep.subr.mxu0 0.0
        %2609 = vmatpush1.msra.mxu0 0.0
        %2610 = vmatprep.subr.mxu0 0.0
        %2611 = vmatpush1.msra.mxu0 0.0
        %2612 = vmatprep.subr.mxu0 0.0
        %2613 = vmatpush1.msra.mxu0 0.0
        %2614 = vmatprep.subr.mxu0 0.0
        %2615 = vmatpush1.msra.mxu0 0.0
        %2616 = vmatprep.subr.mxu0 0.0
        %2617 = vmatpush1.msra.mxu0 0.0
        %2618 = vmatprep.subr.mxu0 0.0
        %2619 = vmatpush1.msra.mxu0 0.0
        %2620 = vmatprep.subr.mxu0 0.0
        %2621 = vmatpush1.msra.mxu0 0.0
        %2622 = vmatprep.subr.mxu0 0.0
        %2623 = vmatpush1.msra.mxu0 0.0
        %2624 = vmatprep.subr.mxu0 0.0
        %2625 = vmatpush1.msra.mxu0 0.0
        %2626 = vmatprep.subr.mxu0 0.0
        %2627 = vmatpush1.msra.mxu0 0.0
        %2628 = vmatprep.subr.mxu0 0.0
        %2629 = vmatpush1.msra.mxu0 0.0
        %2630 = vmatprep.subr.mxu0 0.0
        %2631 = vmatpush1.msra.mxu0 0.0
        %2632 = vmatprep.subr.mxu0 0.0
        %2633 = vmatpush1.msra.mxu0 0.0
        %2634 = vmatprep.subr.mxu0 0.0
        %2635 = vmatpush1.msra.mxu0 0.0
        %2636 = vmatprep.subr.mxu0 0.0
        %2637 = vmatpush1.msra.mxu0 0.0
        %2638 = vmatprep.subr.mxu0 0.0
        %2639 = vmatpush1.msra.mxu0 0.0
        %2640 = vmatprep.mubr.f32.mxu0 0.0
        %2641 = vmatmul.mubr.f32.gmra.mrb[0].mxu0 %v2574
        %v2642 = vpop.f32.mrb[0].mxu0
        %v2643 = vadd.f32 0.0, %v2642
        %v2644 = vpop.f32.mrb[0].mxu0
        %2645 = vdwg.mxu0
        %s2646 = scalar_lea.vmem %s3, 160
        %v2647 = vld [vmem:[%s2646] sm:$0xff]
        %v2648 = vld [vmem:[%s2646 + $0x8] sm:$0xff]
        %v2649 = vld [vmem:[%s2646 + $0x10] sm:$0xff]
        %v2650 = vld [vmem:[%s2646 + $0x18] sm:$0xff]
        %v2652 = vsel %vm677, %v2643, 0
        %2654 = vmatprep.subr.mxu0 0.0
        %2655 = vmatpush1.msra.mxu0 %v2647
        %2656 = vmatprep.subr.mxu0 0.0
        %2657 = vmatpush1.msra.mxu0 %v2648
        %2658 = vmatprep.subr.mxu0 0.0
        %2659 = vmatpush1.msra.mxu0 %v2649
        %2660 = vmatprep.subr.mxu0 0.0
        %2661 = vmatpush1.msra.mxu0 %v2650
        %2662 = vmatprep.subr.mxu0 0.0
        %2663 = vmatpush1.msra.mxu0 0.0
        %2664 = vmatprep.subr.mxu0 0.0
        %2665 = vmatpush1.msra.mxu0 0.0
        %2666 = vmatprep.subr.mxu0 0.0
        %2667 = vmatpush1.msra.mxu0 0.0
        %2668 = vmatprep.subr.mxu0 0.0
        %2669 = vmatpush1.msra.mxu0 0.0
        %2670 = vmatprep.subr.mxu0 0.0
        %2671 = vmatpush1.msra.mxu0 0.0
        %2672 = vmatprep.subr.mxu0 0.0
        %2673 = vmatpush1.msra.mxu0 0.0
        %2674 = vmatprep.subr.mxu0 0.0
        %2675 = vmatpush1.msra.mxu0 0.0
        %2676 = vmatprep.subr.mxu0 0.0
        %2677 = vmatpush1.msra.mxu0 0.0
        %2678 = vmatprep.subr.mxu0 0.0
        %2679 = vmatpush1.msra.mxu0 0.0
        %2680 = vmatprep.subr.mxu0 0.0
        %2681 = vmatpush1.msra.mxu0 0.0
        %2682 = vmatprep.subr.mxu0 0.0
        %2683 = vmatpush1.msra.mxu0 0.0
        %2684 = vmatprep.subr.mxu0 0.0
        %2685 = vmatpush1.msra.mxu0 0.0
        %2686 = vmatprep.subr.mxu0 0.0
        %2687 = vmatpush1.msra.mxu0 0.0
        %2688 = vmatprep.subr.mxu0 0.0
        %2689 = vmatpush1.msra.mxu0 0.0
        %2690 = vmatprep.subr.mxu0 0.0
        %2691 = vmatpush1.msra.mxu0 0.0
        %2692 = vmatprep.subr.mxu0 0.0
        %2693 = vmatpush1.msra.mxu0 0.0
        %2694 = vmatprep.subr.mxu0 0.0
        %2695 = vmatpush1.msra.mxu0 0.0
        %2696 = vmatprep.subr.mxu0 0.0
        %2697 = vmatpush1.msra.mxu0 0.0
        %2698 = vmatprep.subr.mxu0 0.0
        %2699 = vmatpush1.msra.mxu0 0.0
        %2700 = vmatprep.subr.mxu0 0.0
        %2701 = vmatpush1.msra.mxu0 0.0
        %2702 = vmatprep.subr.mxu0 0.0
        %2703 = vmatpush1.msra.mxu0 0.0
        %2704 = vmatprep.subr.mxu0 0.0
        %2705 = vmatpush1.msra.mxu0 0.0
        %2706 = vmatprep.subr.mxu0 0.0
        %2707 = vmatpush1.msra.mxu0 0.0
        %2708 = vmatprep.subr.mxu0 0.0
        %2709 = vmatpush1.msra.mxu0 0.0
        %2710 = vmatprep.subr.mxu0 0.0
        %2711 = vmatpush1.msra.mxu0 0.0
        %2712 = vmatprep.subr.mxu0 0.0
        %2713 = vmatpush1.msra.mxu0 0.0
        %2714 = vmatprep.subr.mxu0 0.0
        %2715 = vmatpush1.msra.mxu0 0.0
        %2716 = vmatprep.subr.mxu0 0.0
        %2717 = vmatpush1.msra.mxu0 0.0
        %2718 = vmatprep.mubr.f32.mxu0 0.0
        %2719 = vmatmul.mubr.f32.gmra.mrb[0].mxu0 %v2652
        %v2720 = vpop.f32.mrb[0].mxu0
        %v2721 = vadd.f32 0.0, %v2720
        %v2722 = vpop.f32.mrb[0].mxu0
        %2723 = vdwg.mxu0
        %s2724 = scalar_lea.vmem %s550, 8 [#allocation4]
        %2725 = vst.msk [vmem:[%s2724] sm:$0xff] %vm575, %v2721
        %s2726 = scalar_lea.vmem %s4, 48
        %v2727 = vld [vmem:[%s2726] sm:$0xff]
        %v2729 = vsel %vm677, %v2727, 0
        %2731 = vmatprep.subr.mxu0 0.0
        %2732 = vmatpush1.msra.mxu0 %v2316
        %2733 = vmatprep.subr.mxu0 0.0
        %2734 = vmatpush1.msra.mxu0 %v2317
        %2735 = vmatprep.subr.mxu0 0.0
        %2736 = vmatpush1.msra.mxu0 %v2318
        %2737 = vmatprep.subr.mxu0 0.0
        %2738 = vmatpush1.msra.mxu0 %v2319
        %2739 = vmatprep.subr.mxu0 0.0
        %2740 = vmatpush1.msra.mxu0 0.0
        %2741 = vmatprep.subr.mxu0 0.0
        %2742 = vmatpush1.msra.mxu0 0.0
        %2743 = vmatprep.subr.mxu0 0.0
        %2744 = vmatpush1.msra.mxu0 0.0
        %2745 = vmatprep.subr.mxu0 0.0
        %2746 = vmatpush1.msra.mxu0 0.0
        %2747 = vmatprep.subr.mxu0 0.0
        %2748 = vmatpush1.msra.mxu0 0.0
        %2749 = vmatprep.subr.mxu0 0.0
        %2750 = vmatpush1.msra.mxu0 0.0
        %2751 = vmatprep.subr.mxu0 0.0
        %2752 = vmatpush1.msra.mxu0 0.0
        %2753 = vmatprep.subr.mxu0 0.0
        %2754 = vmatpush1.msra.mxu0 0.0
        %2755 = vmatprep.subr.mxu0 0.0
        %2756 = vmatpush1.msra.mxu0 0.0
        %2757 = vmatprep.subr.mxu0 0.0
        %2758 = vmatpush1.msra.mxu0 0.0
        %2759 = vmatprep.subr.mxu0 0.0
        %2760 = vmatpush1.msra.mxu0 0.0
        %2761 = vmatprep.subr.mxu0 0.0
        %2762 = vmatpush1.msra.mxu0 0.0
        %2763 = vmatprep.subr.mxu0 0.0
        %2764 = vmatpush1.msra.mxu0 0.0
        %2765 = vmatprep.subr.mxu0 0.0
        %2766 = vmatpush1.msra.mxu0 0.0
        %2767 = vmatprep.subr.mxu0 0.0
        %2768 = vmatpush1.msra.mxu0 0.0
        %2769 = vmatprep.subr.mxu0 0.0
        %2770 = vmatpush1.msra.mxu0 0.0
        %2771 = vmatprep.subr.mxu0 0.0
        %2772 = vmatpush1.msra.mxu0 0.0
        %2773 = vmatprep.subr.mxu0 0.0
        %2774 = vmatpush1.msra.mxu0 0.0
        %2775 = vmatprep.subr.mxu0 0.0
        %2776 = vmatpush1.msra.mxu0 0.0
        %2777 = vmatprep.subr.mxu0 0.0
        %2778 = vmatpush1.msra.mxu0 0.0
        %2779 = vmatprep.subr.mxu0 0.0
        %2780 = vmatpush1.msra.mxu0 0.0
        %2781 = vmatprep.subr.mxu0 0.0
        %2782 = vmatpush1.msra.mxu0 0.0
        %2783 = vmatprep.subr.mxu0 0.0
        %2784 = vmatpush1.msra.mxu0 0.0
        %2785 = vmatprep.subr.mxu0 0.0
        %2786 = vmatpush1.msra.mxu0 0.0
        %2787 = vmatprep.subr.mxu0 0.0
        %2788 = vmatpush1.msra.mxu0 0.0
        %2789 = vmatprep.subr.mxu0 0.0
        %2790 = vmatpush1.msra.mxu0 0.0
        %2791 = vmatprep.subr.mxu0 0.0
        %2792 = vmatpush1.msra.mxu0 0.0
        %2793 = vmatprep.subr.mxu0 0.0
        %2794 = vmatpush1.msra.mxu0 0.0
        %2795 = vmatprep.mubr.f32.mxu0 0.0
        %2796 = vmatmul.mubr.f32.gmra.mrb[0].mxu0 %v2729
        %v2797 = vpop.f32.mrb[0].mxu0
        %v2798 = vadd.f32 0.0, %v2797
        %v2799 = vpop.f32.mrb[0].mxu0
        %2800 = vdwg.mxu0
        %s2801 = scalar_lea.vmem %s3, 192
        %v2802 = vld [vmem:[%s2801] sm:$0xff]
        %v2803 = vld [vmem:[%s2801 + $0x8] sm:$0xff]
        %v2804 = vld [vmem:[%s2801 + $0x10] sm:$0xff]
        %v2805 = vld [vmem:[%s2801 + $0x18] sm:$0xff]
        %v2807 = vsel %vm677, %v2798, 0
        %2809 = vmatprep.subr.mxu0 0.0
        %2810 = vmatpush1.msra.mxu0 %v2802
        %2811 = vmatprep.subr.mxu0 0.0
        %2812 = vmatpush1.msra.mxu0 %v2803
        %2813 = vmatprep.subr.mxu0 0.0
        %2814 = vmatpush1.msra.mxu0 %v2804
        %2815 = vmatprep.subr.mxu0 0.0
        %2816 = vmatpush1.msra.mxu0 %v2805
        %2817 = vmatprep.subr.mxu0 0.0
        %2818 = vmatpush1.msra.mxu0 0.0
        %2819 = vmatprep.subr.mxu0 0.0
        %2820 = vmatpush1.msra.mxu0 0.0
        %2821 = vmatprep.subr.mxu0 0.0
        %2822 = vmatpush1.msra.mxu0 0.0
        %2823 = vmatprep.subr.mxu0 0.0
        %2824 = vmatpush1.msra.mxu0 0.0
        %2825 = vmatprep.subr.mxu0 0.0
        %2826 = vmatpush1.msra.mxu0 0.0
        %2827 = vmatprep.subr.mxu0 0.0
        %2828 = vmatpush1.msra.mxu0 0.0
        %2829 = vmatprep.subr.mxu0 0.0
        %2830 = vmatpush1.msra.mxu0 0.0
        %2831 = vmatprep.subr.mxu0 0.0
        %2832 = vmatpush1.msra.mxu0 0.0
        %2833 = vmatprep.subr.mxu0 0.0
        %2834 = vmatpush1.msra.mxu0 0.0
        %2835 = vmatprep.subr.mxu0 0.0
        %2836 = vmatpush1.msra.mxu0 0.0
        %2837 = vmatprep.subr.mxu0 0.0
        %2838 = vmatpush1.msra.mxu0 0.0
        %2839 = vmatprep.subr.mxu0 0.0
        %2840 = vmatpush1.msra.mxu0 0.0
        %2841 = vmatprep.subr.mxu0 0.0
        %2842 = vmatpush1.msra.mxu0 0.0
        %2843 = vmatprep.subr.mxu0 0.0
        %2844 = vmatpush1.msra.mxu0 0.0
        %2845 = vmatprep.subr.mxu0 0.0
        %2846 = vmatpush1.msra.mxu0 0.0
        %2847 = vmatprep.subr.mxu0 0.0
        %2848 = vmatpush1.msra.mxu0 0.0
        %2849 = vmatprep.subr.mxu0 0.0
        %2850 = vmatpush1.msra.mxu0 0.0
        %2851 = vmatprep.subr.mxu0 0.0
        %2852 = vmatpush1.msra.mxu0 0.0
        %2853 = vmatprep.subr.mxu0 0.0
        %2854 = vmatpush1.msra.mxu0 0.0
        %2855 = vmatprep.subr.mxu0 0.0
        %2856 = vmatpush1.msra.mxu0 0.0
        %2857 = vmatprep.subr.mxu0 0.0
        %2858 = vmatpush1.msra.mxu0 0.0
        %2859 = vmatprep.subr.mxu0 0.0
        %2860 = vmatpush1.msra.mxu0 0.0
        %2861 = vmatprep.subr.mxu0 0.0
        %2862 = vmatpush1.msra.mxu0 0.0
        %2863 = vmatprep.subr.mxu0 0.0
        %2864 = vmatpush1.msra.mxu0 0.0
        %2865 = vmatprep.subr.mxu0 0.0
        %2866 = vmatpush1.msra.mxu0 0.0
        %2867 = vmatprep.subr.mxu0 0.0
        %2868 = vmatpush1.msra.mxu0 0.0
        %2869 = vmatprep.subr.mxu0 0.0
        %2870 = vmatpush1.msra.mxu0 0.0
        %2871 = vmatprep.subr.mxu0 0.0
        %2872 = vmatpush1.msra.mxu0 0.0
        %2873 = vmatprep.mubr.f32.mxu0 0.0
        %2874 = vmatmul.mubr.f32.gmra.mrb[0].mxu0 %v2807
        %v2875 = vpop.f32.mrb[0].mxu0
        %v2876 = vadd.f32 0.0, %v2875
        %v2877 = vpop.f32.mrb[0].mxu0
        %2878 = vdwg.mxu0
        %s2879 = scalar_lea.vmem %s550, 16 [#allocation4]
        %2880 = vst.msk [vmem:[%s2879] sm:$0xff] %vm575, %v2876
        %s2881 = scalar_lea.vmem %s4, 56
        %v2882 = vld [vmem:[%s2881] sm:$0xff]
        %v2884 = vsel %vm677, %v2882, 0
        %2886 = vmatprep.subr.mxu0 0.0
        %2887 = vmatpush1.msra.mxu0 %v2316
        %2888 = vmatprep.subr.mxu0 0.0
        %2889 = vmatpush1.msra.mxu0 %v2317
        %2890 = vmatprep.subr.mxu0 0.0
        %2891 = vmatpush1.msra.mxu0 %v2318
        %2892 = vmatprep.subr.mxu0 0.0
        %2893 = vmatpush1.msra.mxu0 %v2319
        %2894 = vmatprep.subr.mxu0 0.0
        %2895 = vmatpush1.msra.mxu0 0.0
        %2896 = vmatprep.subr.mxu0 0.0
        %2897 = vmatpush1.msra.mxu0 0.0
        %2898 = vmatprep.subr.mxu0 0.0
        %2899 = vmatpush1.msra.mxu0 0.0
        %2900 = vmatprep.subr.mxu0 0.0
        %2901 = vmatpush1.msra.mxu0 0.0
        %2902 = vmatprep.subr.mxu0 0.0
        %2903 = vmatpush1.msra.mxu0 0.0
        %2904 = vmatprep.subr.mxu0 0.0
        %2905 = vmatpush1.msra.mxu0 0.0
        %2906 = vmatprep.subr.mxu0 0.0
        %2907 = vmatpush1.msra.mxu0 0.0
        %2908 = vmatprep.subr.mxu0 0.0
        %2909 = vmatpush1.msra.mxu0 0.0
        %2910 = vmatprep.subr.mxu0 0.0
        %2911 = vmatpush1.msra.mxu0 0.0
        %2912 = vmatprep.subr.mxu0 0.0
        %2913 = vmatpush1.msra.mxu0 0.0
        %2914 = vmatprep.subr.mxu0 0.0
        %2915 = vmatpush1.msra.mxu0 0.0
        %2916 = vmatprep.subr.mxu0 0.0
        %2917 = vmatpush1.msra.mxu0 0.0
        %2918 = vmatprep.subr.mxu0 0.0
        %2919 = vmatpush1.msra.mxu0 0.0
        %2920 = vmatprep.subr.mxu0 0.0
        %2921 = vmatpush1.msra.mxu0 0.0
        %2922 = vmatprep.subr.mxu0 0.0
        %2923 = vmatpush1.msra.mxu0 0.0
        %2924 = vmatprep.subr.mxu0 0.0
        %2925 = vmatpush1.msra.mxu0 0.0
        %2926 = vmatprep.subr.mxu0 0.0
        %2927 = vmatpush1.msra.mxu0 0.0
        %2928 = vmatprep.subr.mxu0 0.0
        %2929 = vmatpush1.msra.mxu0 0.0
        %2930 = vmatprep.subr.mxu0 0.0
        %2931 = vmatpush1.msra.mxu0 0.0
        %2932 = vmatprep.subr.mxu0 0.0
        %2933 = vmatpush1.msra.mxu0 0.0
        %2934 = vmatprep.subr.mxu0 0.0
        %2935 = vmatpush1.msra.mxu0 0.0
        %2936 = vmatprep.subr.mxu0 0.0
        %2937 = vmatpush1.msra.mxu0 0.0
        %2938 = vmatprep.subr.mxu0 0.0
        %2939 = vmatpush1.msra.mxu0 0.0
        %2940 = vmatprep.subr.mxu0 0.0
        %2941 = vmatpush1.msra.mxu0 0.0
        %2942 = vmatprep.subr.mxu0 0.0
        %2943 = vmatpush1.msra.mxu0 0.0
        %2944 = vmatprep.subr.mxu0 0.0
        %2945 = vmatpush1.msra.mxu0 0.0
        %2946 = vmatprep.subr.mxu0 0.0
        %2947 = vmatpush1.msra.mxu0 0.0
        %2948 = vmatprep.subr.mxu0 0.0
        %2949 = vmatpush1.msra.mxu0 0.0
        %2950 = vmatprep.mubr.f32.mxu0 0.0
        %2951 = vmatmul.mubr.f32.gmra.mrb[0].mxu0 %v2884
        %v2952 = vpop.f32.mrb[0].mxu0
        %v2953 = vadd.f32 0.0, %v2952
        %v2954 = vpop.f32.mrb[0].mxu0
        %2955 = vdwg.mxu0
        %s2956 = scalar_lea.vmem %s3, 224
        %v2957 = vld [vmem:[%s2956] sm:$0xff]
        %v2958 = vld [vmem:[%s2956 + $0x8] sm:$0xff]
        %v2959 = vld [vmem:[%s2956 + $0x10] sm:$0xff]
        %v2960 = vld [vmem:[%s2956 + $0x18] sm:$0xff]
        %v2962 = vsel %vm677, %v2953, 0
        %2964 = vmatprep.subr.mxu0 0.0
        %2965 = vmatpush1.msra.mxu0 %v2957
        %2966 = vmatprep.subr.mxu0 0.0
        %2967 = vmatpush1.msra.mxu0 %v2958
        %2968 = vmatprep.subr.mxu0 0.0
        %2969 = vmatpush1.msra.mxu0 %v2959
        %2970 = vmatprep.subr.mxu0 0.0
        %2971 = vmatpush1.msra.mxu0 %v2960
        %2972 = vmatprep.subr.mxu0 0.0
        %2973 = vmatpush1.msra.mxu0 0.0
        %2974 = vmatprep.subr.mxu0 0.0
        %2975 = vmatpush1.msra.mxu0 0.0
        %2976 = vmatprep.subr.mxu0 0.0
        %2977 = vmatpush1.msra.mxu0 0.0
        %2978 = vmatprep.subr.mxu0 0.0
        %2979 = vmatpush1.msra.mxu0 0.0
        %2980 = vmatprep.subr.mxu0 0.0
        %2981 = vmatpush1.msra.mxu0 0.0
        %2982 = vmatprep.subr.mxu0 0.0
        %2983 = vmatpush1.msra.mxu0 0.0
        %2984 = vmatprep.subr.mxu0 0.0
        %2985 = vmatpush1.msra.mxu0 0.0
        %2986 = vmatprep.subr.mxu0 0.0
        %2987 = vmatpush1.msra.mxu0 0.0
        %2988 = vmatprep.subr.mxu0 0.0
        %2989 = vmatpush1.msra.mxu0 0.0
        %2990 = vmatprep.subr.mxu0 0.0
        %2991 = vmatpush1.msra.mxu0 0.0
        %2992 = vmatprep.subr.mxu0 0.0
        %2993 = vmatpush1.msra.mxu0 0.0
        %2994 = vmatprep.subr.mxu0 0.0
        %2995 = vmatpush1.msra.mxu0 0.0
        %2996 = vmatprep.subr.mxu0 0.0
        %2997 = vmatpush1.msra.mxu0 0.0
        %2998 = vmatprep.subr.mxu0 0.0
        %2999 = vmatpush1.msra.mxu0 0.0
        %3000 = vmatprep.subr.mxu0 0.0
        %3001 = vmatpush1.msra.mxu0 0.0
        %3002 = vmatprep.subr.mxu0 0.0
        %3003 = vmatpush1.msra.mxu0 0.0
        %3004 = vmatprep.subr.mxu0 0.0
        %3005 = vmatpush1.msra.mxu0 0.0
        %3006 = vmatprep.subr.mxu0 0.0
        %3007 = vmatpush1.msra.mxu0 0.0
        %3008 = vmatprep.subr.mxu0 0.0
        %3009 = vmatpush1.msra.mxu0 0.0
        %3010 = vmatprep.subr.mxu0 0.0
        %3011 = vmatpush1.msra.mxu0 0.0
        %3012 = vmatprep.subr.mxu0 0.0
        %3013 = vmatpush1.msra.mxu0 0.0
        %3014 = vmatprep.subr.mxu0 0.0
        %3015 = vmatpush1.msra.mxu0 0.0
        %3016 = vmatprep.subr.mxu0 0.0
        %3017 = vmatpush1.msra.mxu0 0.0
        %3018 = vmatprep.subr.mxu0 0.0
        %3019 = vmatpush1.msra.mxu0 0.0
        %3020 = vmatprep.subr.mxu0 0.0
        %3021 = vmatpush1.msra.mxu0 0.0
        %3022 = vmatprep.subr.mxu0 0.0
        %3023 = vmatpush1.msra.mxu0 0.0
        %3024 = vmatprep.subr.mxu0 0.0
        %3025 = vmatpush1.msra.mxu0 0.0
        %3026 = vmatprep.subr.mxu0 0.0
        %3027 = vmatpush1.msra.mxu0 0.0
        %3028 = vmatprep.mubr.f32.mxu0 0.0
        %3029 = vmatmul.mubr.f32.gmra.mrb[0].mxu0 %v2962
        %v3030 = vpop.f32.mrb[0].mxu0
        %v3031 = vadd.f32 0.0, %v3030
        %v3032 = vpop.f32.mrb[0].mxu0
        %3033 = vdwg.mxu0
        %s3034 = scalar_lea.vmem %s550, 24 [#allocation4]
        %3035 = vst.msk [vmem:[%s3034] sm:$0xff] %vm575, %v3031
        %v3036 = vld [vmem:[%s4] sm:$0xff]
        %v3038 = vsel %vm677, %v3036, 0
        %3040 = vmatprep.subr.mxu0 0.0
        %3041 = vmatpush1.msra.mxu0 %v2399
        %3042 = vmatprep.subr.mxu0 0.0
        %3043 = vmatpush1.msra.mxu0 %v2404
        %3044 = vmatprep.subr.mxu0 0.0
        %3045 = vmatpush1.msra.mxu0 %v2409
        %3046 = vmatprep.subr.mxu0 0.0
        %3047 = vmatpush1.msra.mxu0 %v2414
        %3048 = vmatprep.subr.mxu0 0.0
        %3049 = vmatpush1.msra.mxu0 0.0
        %3050 = vmatprep.subr.mxu0 0.0
        %3051 = vmatpush1.msra.mxu0 0.0
        %3052 = vmatprep.subr.mxu0 0.0
        %3053 = vmatpush1.msra.mxu0 0.0
        %3054 = vmatprep.subr.mxu0 0.0
        %3055 = vmatpush1.msra.mxu0 0.0
        %3056 = vmatprep.subr.mxu0 0.0
        %3057 = vmatpush1.msra.mxu0 0.0
        %3058 = vmatprep.subr.mxu0 0.0
        %3059 = vmatpush1.msra.mxu0 0.0
        %3060 = vmatprep.subr.mxu0 0.0
        %3061 = vmatpush1.msra.mxu0 0.0
        %3062 = vmatprep.subr.mxu0 0.0
        %3063 = vmatpush1.msra.mxu0 0.0
        %3064 = vmatprep.subr.mxu0 0.0
        %3065 = vmatpush1.msra.mxu0 0.0
        %3066 = vmatprep.subr.mxu0 0.0
        %3067 = vmatpush1.msra.mxu0 0.0
        %3068 = vmatprep.subr.mxu0 0.0
        %3069 = vmatpush1.msra.mxu0 0.0
        %3070 = vmatprep.subr.mxu0 0.0
        %3071 = vmatpush1.msra.mxu0 0.0
        %3072 = vmatprep.subr.mxu0 0.0
        %3073 = vmatpush1.msra.mxu0 0.0
        %3074 = vmatprep.subr.mxu0 0.0
        %3075 = vmatpush1.msra.mxu0 0.0
        %3076 = vmatprep.subr.mxu0 0.0
        %3077 = vmatpush1.msra.mxu0 0.0
        %3078 = vmatprep.subr.mxu0 0.0
        %3079 = vmatpush1.msra.mxu0 0.0
        %3080 = vmatprep.subr.mxu0 0.0
        %3081 = vmatpush1.msra.mxu0 0.0
        %3082 = vmatprep.subr.mxu0 0.0
        %3083 = vmatpush1.msra.mxu0 0.0
        %3084 = vmatprep.subr.mxu0 0.0
        %3085 = vmatpush1.msra.mxu0 0.0
        %3086 = vmatprep.subr.mxu0 0.0
        %3087 = vmatpush1.msra.mxu0 0.0
        %3088 = vmatprep.subr.mxu0 0.0
        %3089 = vmatpush1.msra.mxu0 0.0
        %3090 = vmatprep.subr.mxu0 0.0
        %3091 = vmatpush1.msra.mxu0 0.0
        %3092 = vmatprep.subr.mxu0 0.0
        %3093 = vmatpush1.msra.mxu0 0.0
        %3094 = vmatprep.subr.mxu0 0.0
        %3095 = vmatpush1.msra.mxu0 0.0
        %3096 = vmatprep.subr.mxu0 0.0
        %3097 = vmatpush1.msra.mxu0 0.0
        %3098 = vmatprep.subr.mxu0 0.0
        %3099 = vmatpush1.msra.mxu0 0.0
        %3100 = vmatprep.subr.mxu0 0.0
        %3101 = vmatpush1.msra.mxu0 0.0
        %3102 = vmatprep.subr.mxu0 0.0
        %3103 = vmatpush1.msra.mxu0 0.0
        %3104 = vmatprep.mubr.f32.mxu0 0.0
        %3105 = vmatmul.mubr.f32.gmra.mrb[0].mxu0 %v3038
        %v3106 = vpop.f32.mrb[0].mxu0
        %v3107 = vadd.f32 0.0, %v3106
        %v3108 = vpop.f32.mrb[0].mxu0
        %3109 = vdwg.mxu0
        %v3110 = vld [vmem:[%s6] sm:$0xff]
        %s3111 = scalar_lea.vmem %s4, 8
        %v3112 = vld [vmem:[%s3111] sm:$0xff]
        %v3114 = vsel %vm677, %v3112, 0
        %3116 = vmatprep.subr.mxu0 0.0
        %3117 = vmatpush1.msra.mxu0 %v2399
        %3118 = vmatprep.subr.mxu0 0.0
        %3119 = vmatpush1.msra.mxu0 %v2404
        %3120 = vmatprep.subr.mxu0 0.0
        %3121 = vmatpush1.msra.mxu0 %v2409
        %3122 = vmatprep.subr.mxu0 0.0
        %3123 = vmatpush1.msra.mxu0 %v2414
        %3124 = vmatprep.subr.mxu0 0.0
        %3125 = vmatpush1.msra.mxu0 0.0
        %3126 = vmatprep.subr.mxu0 0.0
        %3127 = vmatpush1.msra.mxu0 0.0
        %3128 = vmatprep.subr.mxu0 0.0
        %3129 = vmatpush1.msra.mxu0 0.0
        %3130 = vmatprep.subr.mxu0 0.0
        %3131 = vmatpush1.msra.mxu0 0.0
        %3132 = vmatprep.subr.mxu0 0.0
        %3133 = vmatpush1.msra.mxu0 0.0
        %3134 = vmatprep.subr.mxu0 0.0
        %3135 = vmatpush1.msra.mxu0 0.0
        %3136 = vmatprep.subr.mxu0 0.0
        %3137 = vmatpush1.msra.mxu0 0.0
        %3138 = vmatprep.subr.mxu0 0.0
        %3139 = vmatpush1.msra.mxu0 0.0
        %3140 = vmatprep.subr.mxu0 0.0
        %3141 = vmatpush1.msra.mxu0 0.0
        %3142 = vmatprep.subr.mxu0 0.0
        %3143 = vmatpush1.msra.mxu0 0.0
        %3144 = vmatprep.subr.mxu0 0.0
        %3145 = vmatpush1.msra.mxu0 0.0
        %3146 = vmatprep.subr.mxu0 0.0
        %3147 = vmatpush1.msra.mxu0 0.0
        %3148 = vmatprep.subr.mxu0 0.0
        %3149 = vmatpush1.msra.mxu0 0.0
        %3150 = vmatprep.subr.mxu0 0.0
        %3151 = vmatpush1.msra.mxu0 0.0
        %3152 = vmatprep.subr.mxu0 0.0
        %3153 = vmatpush1.msra.mxu0 0.0
        %3154 = vmatprep.subr.mxu0 0.0
        %3155 = vmatpush1.msra.mxu0 0.0
        %3156 = vmatprep.subr.mxu0 0.0
        %3157 = vmatpush1.msra.mxu0 0.0
        %3158 = vmatprep.subr.mxu0 0.0
        %3159 = vmatpush1.msra.mxu0 0.0
        %3160 = vmatprep.subr.mxu0 0.0
        %3161 = vmatpush1.msra.mxu0 0.0
        %3162 = vmatprep.subr.mxu0 0.0
        %3163 = vmatpush1.msra.mxu0 0.0
        %3164 = vmatprep.subr.mxu0 0.0
        %3165 = vmatpush1.msra.mxu0 0.0
        %3166 = vmatprep.subr.mxu0 0.0
        %3167 = vmatpush1.msra.mxu0 0.0
        %3168 = vmatprep.subr.mxu0 0.0
        %3169 = vmatpush1.msra.mxu0 0.0
        %3170 = vmatprep.subr.mxu0 0.0
        %3171 = vmatpush1.msra.mxu0 0.0
        %3172 = vmatprep.subr.mxu0 0.0
        %3173 = vmatpush1.msra.mxu0 0.0
        %3174 = vmatprep.subr.mxu0 0.0
        %3175 = vmatpush1.msra.mxu0 0.0
        %3176 = vmatprep.subr.mxu0 0.0
        %3177 = vmatpush1.msra.mxu0 0.0
        %3178 = vmatprep.subr.mxu0 0.0
        %3179 = vmatpush1.msra.mxu0 0.0
        %3180 = vmatprep.mubr.f32.mxu0 0.0
        %3181 = vmatmul.mubr.f32.gmra.mrb[0].mxu0 %v3114
        %v3182 = vpop.f32.mrb[0].mxu0
        %v3183 = vadd.f32 0.0, %v3182
        %v3184 = vpop.f32.mrb[0].mxu0
        %3185 = vdwg.mxu0
        %s3186 = scalar_lea.vmem %s6, 8
        %v3187 = vld [vmem:[%s3186] sm:$0xff]
        %v3189 = vsel %vm575, %v3183, 0
        %3191 = vmatprep.subr.mxu0 0.0
        %3192 = vmatpush1.msra.mxu0 %v3187
        %3193 = vmatprep.subr.mxu0 0.0
        %3194 = vmatpush1.msra.mxu0 0.0
        %3195 = vmatprep.subr.mxu0 0.0
        %3196 = vmatpush1.msra.mxu0 0.0
        %3197 = vmatprep.subr.mxu0 0.0
        %3198 = vmatpush1.msra.mxu0 0.0
        %3199 = vmatprep.subr.mxu0 0.0
        %3200 = vmatpush1.msra.mxu0 0.0
        %3201 = vmatprep.subr.mxu0 0.0
        %3202 = vmatpush1.msra.mxu0 0.0
        %3203 = vmatprep.subr.mxu0 0.0
        %3204 = vmatpush1.msra.mxu0 0.0
        %3205 = vmatprep.subr.mxu0 0.0
        %3206 = vmatpush1.msra.mxu0 0.0
        %3207 = vmatprep.subr.mxu0 0.0
        %3208 = vmatpush1.msra.mxu0 0.0
        %3209 = vmatprep.subr.mxu0 0.0
        %3210 = vmatpush1.msra.mxu0 0.0
        %3211 = vmatprep.subr.mxu0 0.0
        %3212 = vmatpush1.msra.mxu0 0.0
        %3213 = vmatprep.subr.mxu0 0.0
        %3214 = vmatpush1.msra.mxu0 0.0
        %3215 = vmatprep.subr.mxu0 0.0
        %3216 = vmatpush1.msra.mxu0 0.0
        %3217 = vmatprep.subr.mxu0 0.0
        %3218 = vmatpush1.msra.mxu0 0.0
        %3219 = vmatprep.subr.mxu0 0.0
        %3220 = vmatpush1.msra.mxu0 0.0
        %3221 = vmatprep.subr.mxu0 0.0
        %3222 = vmatpush1.msra.mxu0 0.0
        %3223 = vmatprep.subr.mxu0 0.0
        %3224 = vmatpush1.msra.mxu0 0.0
        %3225 = vmatprep.subr.mxu0 0.0
        %3226 = vmatpush1.msra.mxu0 0.0
        %3227 = vmatprep.subr.mxu0 0.0
        %3228 = vmatpush1.msra.mxu0 0.0
        %3229 = vmatprep.subr.mxu0 0.0
        %3230 = vmatpush1.msra.mxu0 0.0
        %3231 = vmatprep.subr.mxu0 0.0
        %3232 = vmatpush1.msra.mxu0 0.0
        %3233 = vmatprep.subr.mxu0 0.0
        %3234 = vmatpush1.msra.mxu0 0.0
        %3235 = vmatprep.subr.mxu0 0.0
        %3236 = vmatpush1.msra.mxu0 0.0
        %3237 = vmatprep.subr.mxu0 0.0
        %3238 = vmatpush1.msra.mxu0 0.0
        %3239 = vmatprep.subr.mxu0 0.0
        %3240 = vmatpush1.msra.mxu0 0.0
        %3241 = vmatprep.subr.mxu0 0.0
        %3242 = vmatpush1.msra.mxu0 0.0
        %3243 = vmatprep.subr.mxu0 0.0
        %3244 = vmatpush1.msra.mxu0 0.0
        %3245 = vmatprep.subr.mxu0 0.0
        %3246 = vmatpush1.msra.mxu0 0.0
        %3247 = vmatprep.subr.mxu0 0.0
        %3248 = vmatpush1.msra.mxu0 0.0
        %3249 = vmatprep.subr.mxu0 0.0
        %3250 = vmatpush1.msra.mxu0 0.0
        %3251 = vmatprep.subr.mxu0 0.0
        %3252 = vmatpush1.msra.mxu0 0.0
        %3253 = vmatprep.subr.mxu0 0.0
        %3254 = vmatpush1.msra.mxu0 0.0
        %3255 = vmatprep.mubr.f32.mxu0 0.0
        %3256 = vmatmul.mubr.f32.gmra.mrb[0].mxu0 %v3189
        %v3257 = vpop.f32.mrb[0].mxu0
        %v3258 = vadd.f32 0.0, %v3257
        %v3259 = vpop.f32.mrb[0].mxu0
        %3260 = vdwg.mxu0
        %v3262 = vsel %vm575, %v3107, 0
        %3264 = vmatprep.subr.mxu0 0.0
        %3265 = vmatpush1.msra.mxu0 %v3110
        %3266 = vmatprep.subr.mxu0 0.0
        %3267 = vmatpush1.msra.mxu0 0.0
        %3268 = vmatprep.subr.mxu0 0.0
        %3269 = vmatpush1.msra.mxu0 0.0
        %3270 = vmatprep.subr.mxu0 0.0
        %3271 = vmatpush1.msra.mxu0 0.0
        %3272 = vmatprep.subr.mxu0 0.0
        %3273 = vmatpush1.msra.mxu0 0.0
        %3274 = vmatprep.subr.mxu0 0.0
        %3275 = vmatpush1.msra.mxu0 0.0
        %3276 = vmatprep.subr.mxu0 0.0
        %3277 = vmatpush1.msra.mxu0 0.0
        %3278 = vmatprep.subr.mxu0 0.0
        %3279 = vmatpush1.msra.mxu0 0.0
        %3280 = vmatprep.subr.mxu0 0.0
        %3281 = vmatpush1.msra.mxu0 0.0
        %3282 = vmatprep.subr.mxu0 0.0
        %3283 = vmatpush1.msra.mxu0 0.0
        %3284 = vmatprep.subr.mxu0 0.0
        %3285 = vmatpush1.msra.mxu0 0.0
        %3286 = vmatprep.subr.mxu0 0.0
        %3287 = vmatpush1.msra.mxu0 0.0
        %3288 = vmatprep.subr.mxu0 0.0
        %3289 = vmatpush1.msra.mxu0 0.0
        %3290 = vmatprep.subr.mxu0 0.0
        %3291 = vmatpush1.msra.mxu0 0.0
        %3292 = vmatprep.subr.mxu0 0.0
        %3293 = vmatpush1.msra.mxu0 0.0
        %3294 = vmatprep.subr.mxu0 0.0
        %3295 = vmatpush1.msra.mxu0 0.0
        %3296 = vmatprep.subr.mxu0 0.0
        %3297 = vmatpush1.msra.mxu0 0.0
        %3298 = vmatprep.subr.mxu0 0.0
        %3299 = vmatpush1.msra.mxu0 0.0
        %3300 = vmatprep.subr.mxu0 0.0
        %3301 = vmatpush1.msra.mxu0 0.0
        %3302 = vmatprep.subr.mxu0 0.0
        %3303 = vmatpush1.msra.mxu0 0.0
        %3304 = vmatprep.subr.mxu0 0.0
        %3305 = vmatpush1.msra.mxu0 0.0
        %3306 = vmatprep.subr.mxu0 0.0
        %3307 = vmatpush1.msra.mxu0 0.0
        %3308 = vmatprep.subr.mxu0 0.0
        %3309 = vmatpush1.msra.mxu0 0.0
        %3310 = vmatprep.subr.mxu0 0.0
        %3311 = vmatpush1.msra.mxu0 0.0
        %3312 = vmatprep.subr.mxu0 0.0
        %3313 = vmatpush1.msra.mxu0 0.0
        %3314 = vmatprep.subr.mxu0 0.0
        %3315 = vmatpush1.msra.mxu0 0.0
        %3316 = vmatprep.subr.mxu0 0.0
        %3317 = vmatpush1.msra.mxu0 0.0
        %3318 = vmatprep.subr.mxu0 0.0
        %3319 = vmatpush1.msra.mxu0 0.0
        %3320 = vmatprep.subr.mxu0 0.0
        %3321 = vmatpush1.msra.mxu0 0.0
        %3322 = vmatprep.subr.mxu0 0.0
        %3323 = vmatpush1.msra.mxu0 0.0
        %3324 = vmatprep.subr.mxu0 0.0
        %3325 = vmatpush1.msra.mxu0 0.0
        %3326 = vmatprep.subr.mxu0 0.0
        %3327 = vmatpush1.msra.mxu0 0.0
        %3328 = vmatprep.mubr.f32.mxu0 0.0
        %3329 = vmatmul.mubr.f32.gmra.mrb[0].mxu0 %v3262
        %v3330 = vpop.f32.mrb[0].mxu0
        %v3331 = vadd.f32 %v3258, %v3330
        %v3332 = vpop.f32.mrb[0].mxu0
        %3333 = vdwg.mxu0
        %s3334 = scalar_lea.vmem %s4, 16
        %v3335 = vld [vmem:[%s3334] sm:$0xff]
        %v3337 = vsel %vm677, %v3335, 0
        %3339 = vmatprep.subr.mxu0 0.0
        %3340 = vmatpush1.msra.mxu0 %v2399
        %3341 = vmatprep.subr.mxu0 0.0
        %3342 = vmatpush1.msra.mxu0 %v2404
        %3343 = vmatprep.subr.mxu0 0.0
        %3344 = vmatpush1.msra.mxu0 %v2409
        %3345 = vmatprep.subr.mxu0 0.0
        %3346 = vmatpush1.msra.mxu0 %v2414
        %3347 = vmatprep.subr.mxu0 0.0
        %3348 = vmatpush1.msra.mxu0 0.0
        %3349 = vmatprep.subr.mxu0 0.0
        %3350 = vmatpush1.msra.mxu0 0.0
        %3351 = vmatprep.subr.mxu0 0.0
        %3352 = vmatpush1.msra.mxu0 0.0
        %3353 = vmatprep.subr.mxu0 0.0
        %3354 = vmatpush1.msra.mxu0 0.0
        %3355 = vmatprep.subr.mxu0 0.0
        %3356 = vmatpush1.msra.mxu0 0.0
        %3357 = vmatprep.subr.mxu0 0.0
        %3358 = vmatpush1.msra.mxu0 0.0
        %3359 = vmatprep.subr.mxu0 0.0
        %3360 = vmatpush1.msra.mxu0 0.0
        %3361 = vmatprep.subr.mxu0 0.0
        %3362 = vmatpush1.msra.mxu0 0.0
        %3363 = vmatprep.subr.mxu0 0.0
        %3364 = vmatpush1.msra.mxu0 0.0
        %3365 = vmatprep.subr.mxu0 0.0
        %3366 = vmatpush1.msra.mxu0 0.0
        %3367 = vmatprep.subr.mxu0 0.0
        %3368 = vmatpush1.msra.mxu0 0.0
        %3369 = vmatprep.subr.mxu0 0.0
        %3370 = vmatpush1.msra.mxu0 0.0
        %3371 = vmatprep.subr.mxu0 0.0
        %3372 = vmatpush1.msra.mxu0 0.0
        %3373 = vmatprep.subr.mxu0 0.0
        %3374 = vmatpush1.msra.mxu0 0.0
        %3375 = vmatprep.subr.mxu0 0.0
        %3376 = vmatpush1.msra.mxu0 0.0
        %3377 = vmatprep.subr.mxu0 0.0
        %3378 = vmatpush1.msra.mxu0 0.0
        %3379 = vmatprep.subr.mxu0 0.0
        %3380 = vmatpush1.msra.mxu0 0.0
        %3381 = vmatprep.subr.mxu0 0.0
        %3382 = vmatpush1.msra.mxu0 0.0
        %3383 = vmatprep.subr.mxu0 0.0
        %3384 = vmatpush1.msra.mxu0 0.0
        %3385 = vmatprep.subr.mxu0 0.0
        %3386 = vmatpush1.msra.mxu0 0.0
        %3387 = vmatprep.subr.mxu0 0.0
        %3388 = vmatpush1.msra.mxu0 0.0
        %3389 = vmatprep.subr.mxu0 0.0
        %3390 = vmatpush1.msra.mxu0 0.0
        %3391 = vmatprep.subr.mxu0 0.0
        %3392 = vmatpush1.msra.mxu0 0.0
        %3393 = vmatprep.subr.mxu0 0.0
        %3394 = vmatpush1.msra.mxu0 0.0
        %3395 = vmatprep.subr.mxu0 0.0
        %3396 = vmatpush1.msra.mxu0 0.0
        %3397 = vmatprep.subr.mxu0 0.0
        %3398 = vmatpush1.msra.mxu0 0.0
        %3399 = vmatprep.subr.mxu0 0.0
        %3400 = vmatpush1.msra.mxu0 0.0
        %3401 = vmatprep.subr.mxu0 0.0
        %3402 = vmatpush1.msra.mxu0 0.0
        %3403 = vmatprep.mubr.f32.mxu0 0.0
        %3404 = vmatmul.mubr.f32.gmra.mrb[0].mxu0 %v3337
        %v3405 = vpop.f32.mrb[0].mxu0
        %v3406 = vadd.f32 0.0, %v3405
        %v3407 = vpop.f32.mrb[0].mxu0
        %3408 = vdwg.mxu0
        %s3409 = scalar_lea.vmem %s6, 16
        %v3410 = vld [vmem:[%s3409] sm:$0xff]
        %v3412 = vsel %vm575, %v3406, 0
        %3414 = vmatprep.subr.mxu0 0.0
        %3415 = vmatpush1.msra.mxu0 %v3410
        %3416 = vmatprep.subr.mxu0 0.0
        %3417 = vmatpush1.msra.mxu0 0.0
        %3418 = vmatprep.subr.mxu0 0.0
        %3419 = vmatpush1.msra.mxu0 0.0
        %3420 = vmatprep.subr.mxu0 0.0
        %3421 = vmatpush1.msra.mxu0 0.0
        %3422 = vmatprep.subr.mxu0 0.0
        %3423 = vmatpush1.msra.mxu0 0.0
        %3424 = vmatprep.subr.mxu0 0.0
        %3425 = vmatpush1.msra.mxu0 0.0
        %3426 = vmatprep.subr.mxu0 0.0
        %3427 = vmatpush1.msra.mxu0 0.0
        %3428 = vmatprep.subr.mxu0 0.0
        %3429 = vmatpush1.msra.mxu0 0.0
        %3430 = vmatprep.subr.mxu0 0.0
        %3431 = vmatpush1.msra.mxu0 0.0
        %3432 = vmatprep.subr.mxu0 0.0
        %3433 = vmatpush1.msra.mxu0 0.0
        %3434 = vmatprep.subr.mxu0 0.0
        %3435 = vmatpush1.msra.mxu0 0.0
        %3436 = vmatprep.subr.mxu0 0.0
        %3437 = vmatpush1.msra.mxu0 0.0
        %3438 = vmatprep.subr.mxu0 0.0
        %3439 = vmatpush1.msra.mxu0 0.0
        %3440 = vmatprep.subr.mxu0 0.0
        %3441 = vmatpush1.msra.mxu0 0.0
        %3442 = vmatprep.subr.mxu0 0.0
        %3443 = vmatpush1.msra.mxu0 0.0
        %3444 = vmatprep.subr.mxu0 0.0
        %3445 = vmatpush1.msra.mxu0 0.0
        %3446 = vmatprep.subr.mxu0 0.0
        %3447 = vmatpush1.msra.mxu0 0.0
        %3448 = vmatprep.subr.mxu0 0.0
        %3449 = vmatpush1.msra.mxu0 0.0
        %3450 = vmatprep.subr.mxu0 0.0
        %3451 = vmatpush1.msra.mxu0 0.0
        %3452 = vmatprep.subr.mxu0 0.0
        %3453 = vmatpush1.msra.mxu0 0.0
        %3454 = vmatprep.subr.mxu0 0.0
        %3455 = vmatpush1.msra.mxu0 0.0
        %3456 = vmatprep.subr.mxu0 0.0
        %3457 = vmatpush1.msra.mxu0 0.0
        %3458 = vmatprep.subr.mxu0 0.0
        %3459 = vmatpush1.msra.mxu0 0.0
        %3460 = vmatprep.subr.mxu0 0.0
        %3461 = vmatpush1.msra.mxu0 0.0
        %3462 = vmatprep.subr.mxu0 0.0
        %3463 = vmatpush1.msra.mxu0 0.0
        %3464 = vmatprep.subr.mxu0 0.0
        %3465 = vmatpush1.msra.mxu0 0.0
        %3466 = vmatprep.subr.mxu0 0.0
        %3467 = vmatpush1.msra.mxu0 0.0
        %3468 = vmatprep.subr.mxu0 0.0
        %3469 = vmatpush1.msra.mxu0 0.0
        %3470 = vmatprep.subr.mxu0 0.0
        %3471 = vmatpush1.msra.mxu0 0.0
        %3472 = vmatprep.subr.mxu0 0.0
        %3473 = vmatpush1.msra.mxu0 0.0
        %3474 = vmatprep.subr.mxu0 0.0
        %3475 = vmatpush1.msra.mxu0 0.0
        %3476 = vmatprep.subr.mxu0 0.0
        %3477 = vmatpush1.msra.mxu0 0.0
        %3478 = vmatprep.mubr.f32.mxu0 0.0
        %3479 = vmatmul.mubr.f32.gmra.mrb[0].mxu0 %v3412
        %v3480 = vpop.f32.mrb[0].mxu0
        %v3481 = vadd.f32 0.0, %v3480
        %v3482 = vpop.f32.mrb[0].mxu0
        %3483 = vdwg.mxu0
        %v3484 = vadd.f32 %v3331, %v3481
        %s3485 = scalar_lea.vmem %s4, 24
        %v3486 = vld [vmem:[%s3485] sm:$0xff]
        %v3488 = vsel %vm677, %v3486, 0
        %3490 = vmatprep.subr.mxu0 0.0
        %3491 = vmatpush1.msra.mxu0 %v2399
        %3492 = vmatprep.subr.mxu0 0.0
        %3493 = vmatpush1.msra.mxu0 %v2404
        %3494 = vmatprep.subr.mxu0 0.0
        %3495 = vmatpush1.msra.mxu0 %v2409
        %3496 = vmatprep.subr.mxu0 0.0
        %3497 = vmatpush1.msra.mxu0 %v2414
        %3498 = vmatprep.subr.mxu0 0.0
        %3499 = vmatpush1.msra.mxu0 0.0
        %3500 = vmatprep.subr.mxu0 0.0
        %3501 = vmatpush1.msra.mxu0 0.0
        %3502 = vmatprep.subr.mxu0 0.0
        %3503 = vmatpush1.msra.mxu0 0.0
        %3504 = vmatprep.subr.mxu0 0.0
        %3505 = vmatpush1.msra.mxu0 0.0
        %3506 = vmatprep.subr.mxu0 0.0
        %3507 = vmatpush1.msra.mxu0 0.0
        %3508 = vmatprep.subr.mxu0 0.0
        %3509 = vmatpush1.msra.mxu0 0.0
        %3510 = vmatprep.subr.mxu0 0.0
        %3511 = vmatpush1.msra.mxu0 0.0
        %3512 = vmatprep.subr.mxu0 0.0
        %3513 = vmatpush1.msra.mxu0 0.0
        %3514 = vmatprep.subr.mxu0 0.0
        %3515 = vmatpush1.msra.mxu0 0.0
        %3516 = vmatprep.subr.mxu0 0.0
        %3517 = vmatpush1.msra.mxu0 0.0
        %3518 = vmatprep.subr.mxu0 0.0
        %3519 = vmatpush1.msra.mxu0 0.0
        %3520 = vmatprep.subr.mxu0 0.0
        %3521 = vmatpush1.msra.mxu0 0.0
        %3522 = vmatprep.subr.mxu0 0.0
        %3523 = vmatpush1.msra.mxu0 0.0
        %3524 = vmatprep.subr.mxu0 0.0
        %3525 = vmatpush1.msra.mxu0 0.0
        %3526 = vmatprep.subr.mxu0 0.0
        %3527 = vmatpush1.msra.mxu0 0.0
        %3528 = vmatprep.subr.mxu0 0.0
        %3529 = vmatpush1.msra.mxu0 0.0
        %3530 = vmatprep.subr.mxu0 0.0
        %3531 = vmatpush1.msra.mxu0 0.0
        %3532 = vmatprep.subr.mxu0 0.0
        %3533 = vmatpush1.msra.mxu0 0.0
        %3534 = vmatprep.subr.mxu0 0.0
        %3535 = vmatpush1.msra.mxu0 0.0
        %3536 = vmatprep.subr.mxu0 0.0
        %3537 = vmatpush1.msra.mxu0 0.0
        %3538 = vmatprep.subr.mxu0 0.0
        %3539 = vmatpush1.msra.mxu0 0.0
        %3540 = vmatprep.subr.mxu0 0.0
        %3541 = vmatpush1.msra.mxu0 0.0
        %3542 = vmatprep.subr.mxu0 0.0
        %3543 = vmatpush1.msra.mxu0 0.0
        %3544 = vmatprep.subr.mxu0 0.0
        %3545 = vmatpush1.msra.mxu0 0.0
        %3546 = vmatprep.subr.mxu0 0.0
        %3547 = vmatpush1.msra.mxu0 0.0
        %3548 = vmatprep.subr.mxu0 0.0
        %3549 = vmatpush1.msra.mxu0 0.0
        %3550 = vmatprep.subr.mxu0 0.0
        %3551 = vmatpush1.msra.mxu0 0.0
        %3552 = vmatprep.subr.mxu0 0.0
        %3553 = vmatpush1.msra.mxu0 0.0
        %3554 = vmatprep.mubr.f32.mxu0 0.0
        %3555 = vmatmul.mubr.f32.gmra.mrb[0].mxu0 %v3488
        %v3556 = vpop.f32.mrb[0].mxu0
        %v3557 = vadd.f32 0.0, %v3556
        %v3558 = vpop.f32.mrb[0].mxu0
        %3559 = vdwg.mxu0
        %s3560 = scalar_lea.vmem %s6, 24
        %v3561 = vld [vmem:[%s3560] sm:$0xff]
        %v3563 = vsel %vm575, %v3557, 0
        %3565 = vmatprep.subr.mxu0 0.0
        %3566 = vmatpush1.msra.mxu0 %v3561
        %3567 = vmatprep.subr.mxu0 0.0
        %3568 = vmatpush1.msra.mxu0 0.0
        %3569 = vmatprep.subr.mxu0 0.0
        %3570 = vmatpush1.msra.mxu0 0.0
        %3571 = vmatprep.subr.mxu0 0.0
        %3572 = vmatpush1.msra.mxu0 0.0
        %3573 = vmatprep.subr.mxu0 0.0
        %3574 = vmatpush1.msra.mxu0 0.0
        %3575 = vmatprep.subr.mxu0 0.0
        %3576 = vmatpush1.msra.mxu0 0.0
        %3577 = vmatprep.subr.mxu0 0.0
        %3578 = vmatpush1.msra.mxu0 0.0
        %3579 = vmatprep.subr.mxu0 0.0
        %3580 = vmatpush1.msra.mxu0 0.0
        %3581 = vmatprep.subr.mxu0 0.0
        %3582 = vmatpush1.msra.mxu0 0.0
        %3583 = vmatprep.subr.mxu0 0.0
        %3584 = vmatpush1.msra.mxu0 0.0
        %3585 = vmatprep.subr.mxu0 0.0
        %3586 = vmatpush1.msra.mxu0 0.0
        %3587 = vmatprep.subr.mxu0 0.0
        %3588 = vmatpush1.msra.mxu0 0.0
        %3589 = vmatprep.subr.mxu0 0.0
        %3590 = vmatpush1.msra.mxu0 0.0
        %3591 = vmatprep.subr.mxu0 0.0
        %3592 = vmatpush1.msra.mxu0 0.0
        %3593 = vmatprep.subr.mxu0 0.0
        %3594 = vmatpush1.msra.mxu0 0.0
        %3595 = vmatprep.subr.mxu0 0.0
        %3596 = vmatpush1.msra.mxu0 0.0
        %3597 = vmatprep.subr.mxu0 0.0
        %3598 = vmatpush1.msra.mxu0 0.0
        %3599 = vmatprep.subr.mxu0 0.0
        %3600 = vmatpush1.msra.mxu0 0.0
        %3601 = vmatprep.subr.mxu0 0.0
        %3602 = vmatpush1.msra.mxu0 0.0
        %3603 = vmatprep.subr.mxu0 0.0
        %3604 = vmatpush1.msra.mxu0 0.0
        %3605 = vmatprep.subr.mxu0 0.0
        %3606 = vmatpush1.msra.mxu0 0.0
        %3607 = vmatprep.subr.mxu0 0.0
        %3608 = vmatpush1.msra.mxu0 0.0
        %3609 = vmatprep.subr.mxu0 0.0
        %3610 = vmatpush1.msra.mxu0 0.0
        %3611 = vmatprep.subr.mxu0 0.0
        %3612 = vmatpush1.msra.mxu0 0.0
        %3613 = vmatprep.subr.mxu0 0.0
        %3614 = vmatpush1.msra.mxu0 0.0
        %3615 = vmatprep.subr.mxu0 0.0
        %3616 = vmatpush1.msra.mxu0 0.0
        %3617 = vmatprep.subr.mxu0 0.0
        %3618 = vmatpush1.msra.mxu0 0.0
        %3619 = vmatprep.subr.mxu0 0.0
        %3620 = vmatpush1.msra.mxu0 0.0
        %3621 = vmatprep.subr.mxu0 0.0
        %3622 = vmatpush1.msra.mxu0 0.0
        %3623 = vmatprep.subr.mxu0 0.0
        %3624 = vmatpush1.msra.mxu0 0.0
        %3625 = vmatprep.subr.mxu0 0.0
        %3626 = vmatpush1.msra.mxu0 0.0
        %3627 = vmatprep.subr.mxu0 0.0
        %3628 = vmatpush1.msra.mxu0 0.0
        %3629 = vmatprep.mubr.f32.mxu0 0.0
        %3630 = vmatmul.mubr.f32.gmra.mrb[0].mxu0 %v3563
        %v3631 = vpop.f32.mrb[0].mxu0
        %v3632 = vadd.f32 0.0, %v3631
        %v3633 = vpop.f32.mrb[0].mxu0
        %3634 = vdwg.mxu0
        %v3635 = vadd.f32 %v3484, %v3632
        %v3636 = vadd.f32 %v556, %v3635
        %v3637 = vld [vmem:[%s7] sm:$0x1]
        %v3639 = vlaneseq
        %v3640 = vshrl.u32 %v3639, 7
        %v3641 = vsub.s32 0, %v3640
        %v3642 = vrot.slane %v3637, %v3641
        %v3644 = vadd.f32 %v3636, %v3642
        %v3645 = vld [vmem:[%s8] sm:$0x1]
        %v3646 = vld [vmem:[%s9] sm:$0x1]
        %v3647 = vsel %vm677, %v3644, 0.0
        %3648 = vadd.xlane.f32.xlu0 %v3647
        %v3649 = vpop.xlane.xlu0 %3648
        %v3650 = vrcp.pop 32.0
        %v3651 = vmul.f32 %v3649, %v3650
        %v3652 = vsub.f32 %v3644, %v3651
        %v3653 = vmul.f32 %v3652, %v3652
        %v3654 = vsel %vm677, %v3653, 0.0
        %3655 = vadd.xlane.f32.xlu0 %v3654
        %v3656 = vpop.xlane.xlu0 %3655
        %v3657 = vmul.f32 %v3656, %v3650
        %v3658 = vadd.f32 %v3657, 1e-05
        %v3659 = vrsqrt.pop %v3658
        %v3660 = vmul.f32 %v3652, %v3659
        %v3662 = vlaneseq
        %v3663 = vshrl.u32 %v3662, 7
        %v3664 = vsub.s32 0, %v3663
        %v3665 = vrot.slane %v3645, %v3664
        %v3667 = vmul.f32 %v3660, %v3665
        %v3669 = vlaneseq
        %v3670 = vshrl.u32 %v3669, 7
        %v3671 = vsub.s32 0, %v3670
        %v3672 = vrot.slane %v3646, %v3671
        %v3674 = vadd.f32 %v3667, %v3672
        %v3675 = vld [vmem:[%s10] sm:$0xff]
        %v3676 = vld [vmem:[%s10 + $0x8] sm:$0xff]
        %v3677 = vld [vmem:[%s10 + $0x10] sm:$0xff]
        %v3678 = vld [vmem:[%s10 + $0x18] sm:$0xff]
        %v3679 = vld [vmem:[%s11] sm:$0x1]
        %v3681 = vlaneseq
        %v3682 = vshrl.u32 %v3681, 7
        %v3683 = vsub.s32 0, %v3682
        %v3684 = vrot.slane %v3679, %v3683
        %v3687 = vsel %vm677, %v3674, 0
        %3689 = vmatprep.subr.mxu0 0.0
        %3690 = vmatpush1.msra.mxu0 %v3675
        %3691 = vmatprep.subr.mxu0 0.0
        %3692 = vmatpush1.msra.mxu0 %v3676
        %3693 = vmatprep.subr.mxu0 0.0
        %3694 = vmatpush1.msra.mxu0 %v3677
        %3695 = vmatprep.subr.mxu0 0.0
        %3696 = vmatpush1.msra.mxu0 %v3678
        %3697 = vmatprep.subr.mxu0 0.0
        %3698 = vmatpush1.msra.mxu0 0.0
        %3699 = vmatprep.subr.mxu0 0.0
        %3700 = vmatpush1.msra.mxu0 0.0
        %3701 = vmatprep.subr.mxu0 0.0
        %3702 = vmatpush1.msra.mxu0 0.0
        %3703 = vmatprep.subr.mxu0 0.0
        %3704 = vmatpush1.msra.mxu0 0.0
        %3705 = vmatprep.subr.mxu0 0.0
        %3706 = vmatpush1.msra.mxu0 0.0
        %3707 = vmatprep.subr.mxu0 0.0
        %3708 = vmatpush1.msra.mxu0 0.0
        %3709 = vmatprep.subr.mxu0 0.0
        %3710 = vmatpush1.msra.mxu0 0.0
        %3711 = vmatprep.subr.mxu0 0.0
        %3712 = vmatpush1.msra.mxu0 0.0
        %3713 = vmatprep.subr.mxu0 0.0
        %3714 = vmatpush1.msra.mxu0 0.0
        %3715 = vmatprep.subr.mxu0 0.0
        %3716 = vmatpush1.msra.mxu0 0.0
        %3717 = vmatprep.subr.mxu0 0.0
        %3718 = vmatpush1.msra.mxu0 0.0
        %3719 = vmatprep.subr.mxu0 0.0
        %3720 = vmatpush1.msra.mxu0 0.0
        %3721 = vmatprep.subr.mxu0 0.0
        %3722 = vmatpush1.msra.mxu0 0.0
        %3723 = vmatprep.subr.mxu0 0.0
        %3724 = vmatpush1.msra.mxu0 0.0
        %3725 = vmatprep.subr.mxu0 0.0
        %3726 = vmatpush1.msra.mxu0 0.0
        %3727 = vmatprep.subr.mxu0 0.0
        %3728 = vmatpush1.msra.mxu0 0.0
        %3729 = vmatprep.subr.mxu0 0.0
        %3730 = vmatpush1.msra.mxu0 0.0
        %3731 = vmatprep.subr.mxu0 0.0
        %3732 = vmatpush1.msra.mxu0 0.0
        %3733 = vmatprep.subr.mxu0 0.0
        %3734 = vmatpush1.msra.mxu0 0.0
        %3735 = vmatprep.subr.mxu0 0.0
        %3736 = vmatpush1.msra.mxu0 0.0
        %3737 = vmatprep.subr.mxu0 0.0
        %3738 = vmatpush1.msra.mxu0 0.0
        %3739 = vmatprep.subr.mxu0 0.0
        %3740 = vmatpush1.msra.mxu0 0.0
        %3741 = vmatprep.subr.mxu0 0.0
        %3742 = vmatpush1.msra.mxu0 0.0
        %3743 = vmatprep.subr.mxu0 0.0
        %3744 = vmatpush1.msra.mxu0 0.0
        %3745 = vmatprep.subr.mxu0 0.0
        %3746 = vmatpush1.msra.mxu0 0.0
        %3747 = vmatprep.subr.mxu0 0.0
        %3748 = vmatpush1.msra.mxu0 0.0
        %3749 = vmatprep.subr.mxu0 0.0
        %3750 = vmatpush1.msra.mxu0 0.0
        %3751 = vmatprep.subr.mxu0 0.0
        %3752 = vmatpush1.msra.mxu0 0.0
        %3753 = vmatprep.mubr.f32.mxu0 0.0
        %3754 = vmatmul.mubr.f32.gmra.mrb[0].mxu0 %v3687
        %v3755 = vpop.f32.mrb[0].mxu0
        %v3756 = vadd.f32 %v3684, %v3755
        %v3757 = vpop.f32.mrb[0].mxu0
        %3758 = vdwg.mxu0
        %v3759 = vmax.f32 %v3756, 0.0
        %v3760 = vld [vmem:[%s12] sm:$0xff]
        %v3761 = vld [vmem:[%s12 + $0x8] sm:$0xff]
        %v3762 = vld [vmem:[%s12 + $0x10] sm:$0xff]
        %v3763 = vld [vmem:[%s12 + $0x18] sm:$0xff]
        %v3764 = vld [vmem:[%s12 + $0x20] sm:$0xff]
        %v3765 = vld [vmem:[%s12 + $0x28] sm:$0xff]
        %v3766 = vld [vmem:[%s12 + $0x30] sm:$0xff]
        %v3767 = vld [vmem:[%s12 + $0x38] sm:$0xff]
        %v3768 = vld [vmem:[%s13] sm:$0x1]
        %v3770 = vlaneseq
        %v3771 = vshrl.u32 %v3770, 7
        %v3772 = vsub.s32 0, %v3771
        %v3773 = vrot.slane %v3768, %v3772
        %vm3775 = vcmask 523264
        %v3777 = vsel %vm3775, %v3759, 0
        %3779 = vmatprep.subr.mxu0 0.0
        %3780 = vmatpush1.msra.mxu0 %v3760
        %3781 = vmatprep.subr.mxu0 0.0
        %3782 = vmatpush1.msra.mxu0 %v3761
        %3783 = vmatprep.subr.mxu0 0.0
        %3784 = vmatpush1.msra.mxu0 %v3762
        %3785 = vmatprep.subr.mxu0 0.0
        %3786 = vmatpush1.msra.mxu0 %v3763
        %3787 = vmatprep.subr.mxu0 0.0
        %3788 = vmatpush1.msra.mxu0 %v3764
        %3789 = vmatprep.subr.mxu0 0.0
        %3790 = vmatpush1.msra.mxu0 %v3765
        %3791 = vmatprep.subr.mxu0 0.0
        %3792 = vmatpush1.msra.mxu0 %v3766
        %3793 = vmatprep.subr.mxu0 0.0
        %3794 = vmatpush1.msra.mxu0 %v3767
        %3795 = vmatprep.subr.mxu0 0.0
        %3796 = vmatpush1.msra.mxu0 0.0
        %3797 = vmatprep.subr.mxu0 0.0
        %3798 = vmatpush1.msra.mxu0 0.0
        %3799 = vmatprep.subr.mxu0 0.0
        %3800 = vmatpush1.msra.mxu0 0.0
        %3801 = vmatprep.subr.mxu0 0.0
        %3802 = vmatpush1.msra.mxu0 0.0
        %3803 = vmatprep.subr.mxu0 0.0
        %3804 = vmatpush1.msra.mxu0 0.0
        %3805 = vmatprep.subr.mxu0 0.0
        %3806 = vmatpush1.msra.mxu0 0.0
        %3807 = vmatprep.subr.mxu0 0.0
        %3808 = vmatpush1.msra.mxu0 0.0
        %3809 = vmatprep.subr.mxu0 0.0
        %3810 = vmatpush1.msra.mxu0 0.0
        %3811 = vmatprep.subr.mxu0 0.0
        %3812 = vmatpush1.msra.mxu0 0.0
        %3813 = vmatprep.subr.mxu0 0.0
        %3814 = vmatpush1.msra.mxu0 0.0
        %3815 = vmatprep.subr.mxu0 0.0
        %3816 = vmatpush1.msra.mxu0 0.0
        %3817 = vmatprep.subr.mxu0 0.0
        %3818 = vmatpush1.msra.mxu0 0.0
        %3819 = vmatprep.subr.mxu0 0.0
        %3820 = vmatpush1.msra.mxu0 0.0
        %3821 = vmatprep.subr.mxu0 0.0
        %3822 = vmatpush1.msra.mxu0 0.0
        %3823 = vmatprep.subr.mxu0 0.0
        %3824 = vmatpush1.msra.mxu0 0.0
        %3825 = vmatprep.subr.mxu0 0.0
        %3826 = vmatpush1.msra.mxu0 0.0
        %3827 = vmatprep.subr.mxu0 0.0
        %3828 = vmatpush1.msra.mxu0 0.0
        %3829 = vmatprep.subr.mxu0 0.0
        %3830 = vmatpush1.msra.mxu0 0.0
        %3831 = vmatprep.subr.mxu0 0.0
        %3832 = vmatpush1.msra.mxu0 0.0
        %3833 = vmatprep.subr.mxu0 0.0
        %3834 = vmatpush1.msra.mxu0 0.0
        %3835 = vmatprep.subr.mxu0 0.0
        %3836 = vmatpush1.msra.mxu0 0.0
        %3837 = vmatprep.subr.mxu0 0.0
        %3838 = vmatpush1.msra.mxu0 0.0
        %3839 = vmatprep.subr.mxu0 0.0
        %3840 = vmatpush1.msra.mxu0 0.0
        %3841 = vmatprep.subr.mxu0 0.0
        %3842 = vmatpush1.msra.mxu0 0.0
        %3843 = vmatprep.mubr.f32.mxu0 0.0
        %3844 = vmatmul.mubr.f32.gmra.mrb[0].mxu0 %v3777
        %v3845 = vpop.f32.mrb[0].mxu0
        %v3846 = vadd.f32 %v3773, %v3845
        %v3847 = vpop.f32.mrb[0].mxu0
        %3848 = vdwg.mxu0
        %v3849 = vadd.f32 %v3674, %v3846
        %v3850 = vld [vmem:[%s14] sm:$0x1]
        %v3851 = vld [vmem:[%s15] sm:$0x1]
        %v3852 = vsel %vm677, %v3849, 0.0
        %3853 = vadd.xlane.f32.xlu0 %v3852
        %v3854 = vpop.xlane.xlu0 %3853
        %v3855 = vmul.f32 %v3854, %v3650
        %v3856 = vsub.f32 %v3849, %v3855
        %v3857 = vmul.f32 %v3856, %v3856
        %v3858 = vsel %vm677, %v3857, 0.0
        %3859 = vadd.xlane.f32.xlu0 %v3858
        %v3860 = vpop.xlane.xlu0 %3859
        %v3861 = vmul.f32 %v3860, %v3650
        %v3862 = vadd.f32 %v3861, 1e-05
        %v3863 = vrsqrt.pop %v3862
        %v3864 = vmul.f32 %v3856, %v3863
        %v3866 = vlaneseq
        %v3867 = vshrl.u32 %v3866, 7
        %v3868 = vsub.s32 0, %v3867
        %v3869 = vrot.slane %v3850, %v3868
        %v3871 = vmul.f32 %v3864, %v3869
        %v3873 = vlaneseq
        %v3874 = vshrl.u32 %v3873, 7
        %v3875 = vsub.s32 0, %v3874
        %v3876 = vrot.slane %v3851, %v3875
        %v3878 = vadd.f32 %v3871, %v3876
        %3879 = vst.msk [vmem:[%s543] sm:$0xff] %vm677, %v3878
        %s3880 = sand.u32 %s384, 1
        %s3881 = scalar_lea.sflag [#allocation3], %s3880
        %s3882 = sand.u32 %s384, 1
        %s3883 = smul.addr %s3882, 8
        %s3884 = scalar_lea.vmem [#allocation2], %s3883
        %s3885 = sand.u32 %s410, 1
        %s3886 = scalar_lea.sflag [#allocation5], %s3885
        %s3887 = sand.u32 %s410, 1
        %s3888 = smul.addr %s3887, 32
        %s3889 = scalar_lea.vmem [#allocation4], %s3888
        // Predicated region
        $region85: #{tpu_custom_call.1} parent=83 // pred_check
          %p3890 = pneg %p394
        $region86: #{tpu_custom_call.1} parent=83 // pred_check_branch
          %3892 = sbr.rel (%p3890) target = $region88
        $region87: #{tpu_custom_call.1} parent=83 // pred_region
          %s3894 = ssub.s32 128, 128
          %3895 = vsyncadd %s3881, %s3894
          %s3896 = smul.addr %s35, 128
          %s3897 = scalar_lea.hbm %s16, %s3896
          %s3899 = sshll.u32 %s3884, 4
          %s3900 = int_to_ptr.vmem [resolvable:$true] %s3899
          %3902 = dma.vmem_to_hbm [thread:$0]  %s3900, 128, %s3897, %s3881
        $region88: #{tpu_custom_call.1} parent=83 // pred_fallthru
          _
        // Predicated region
        $region89: #{tpu_custom_call.1} parent=83 // pred_check
          %p3903 = pneg %p420
        $region90: #{tpu_custom_call.1} parent=83 // pred_check_branch
          %3905 = sbr.rel (%p3903) target = $region92
        $region91: #{tpu_custom_call.1} parent=83 // pred_region
          %s3906 = smul.u32 4, %s35
          %s3908 = ssub.s32 512, 512
          %3909 = vsyncadd %s3886, %s3908
          %s3910 = smul.addr %s3906, 128
          %s3911 = scalar_lea.hbm %s17, %s3910
          %s3912 = sshll.u32 %s3889, 4
          %s3913 = int_to_ptr.vmem [resolvable:$true] %s3912
          %3918 = dma.vmem_to_hbm [thread:$0]  %s3913, 512, %s3911, %s3886, 128, 128, 8
        $region92: #{tpu_custom_call.1} parent=83 // pred_fallthru
          _
      $region84: #{tpu_custom_call.1} parent=5 // pred_fallthru
        _
      %p3919 = scmp.le.s32.totalorder 2, %s30
      // Predicated region
      $region93: #{tpu_custom_call.1} parent=5 // pred_check
        %p3920 = pneg %p3919
      $region94: #{tpu_custom_call.1} parent=5 // pred_check_branch
        %3922 = sbr.rel (%p3920) target = $region96
      $region95: #{tpu_custom_call.1} parent=5 // pred_region
        %s3923 = ssub.s32 %s30, 2
        // Predicated region
        $region97: #{tpu_custom_call.1} parent=95 // pred_check
          %p3924 = pneg %p400
        $region98: #{tpu_custom_call.1} parent=95 // pred_check_branch
          %3926 = sbr.rel (%p3924) target = $region100
        $region99: #{tpu_custom_call.1} parent=95 // pred_region
          %s3927 = sand.u32 %s385, 1
          %s3928 = scalar_lea.sflag [#allocation3], %s3927
          %s3929 = sand.u32 %s385, 1
          %s3930 = smul.addr %s3929, 8
          %s3931 = scalar_lea.vmem [#allocation2], %s3930
          %3932 = dma.done %s3928, 128
        $region100: #{tpu_custom_call.1} parent=95 // pred_fallthru
          _
        // Predicated region
        $region101: #{tpu_custom_call.1} parent=95 // pred_check
          %p3933 = pneg %p426
        $region102: #{tpu_custom_call.1} parent=95 // pred_check_branch
          %3935 = sbr.rel (%p3933) target = $region104
        $region103: #{tpu_custom_call.1} parent=95 // pred_region
          %s3936 = sand.u32 %s411, 1
          %s3937 = scalar_lea.sflag [#allocation5], %s3936
          %s3938 = sand.u32 %s411, 1
          %s3939 = smul.addr %s3938, 32
          %s3940 = scalar_lea.vmem [#allocation4], %s3939
          %3941 = dma.done %s3937, 512
        $region104: #{tpu_custom_call.1} parent=95 // pred_fallthru
          _
      $region96: #{tpu_custom_call.1} parent=5 // pred_fallthru
        _
    $region6: #{tpu_custom_call.1} parent=1 // loop_footer
      %s34 = sadd.s32 1, %s30
    $region7: #{tpu_custom_call.1} parent=1 // loop_footer_branch
      %29 = sbr.rel target = $region3
    $region8: #{tpu_custom_call.1} parent=1 // loop_exit
      _
    %3942 = vsyncpa [#allocation3], 1
    %s3943 = scalar_lea.sflag [#allocation3], 1
    %3944 = vsyncpa %s3943, 1
    %3945 = vsyncpa [#allocation5], 1
    %s3946 = scalar_lea.sflag [#allocation5], 1
    %3947 = vsyncpa %s3946, 1

</llo_original>
